<compile_context>
chip_gen: v7x
topology: tpu7x:2x2x1
jax: 0.10.0
libtpu: 0.0.40
codegen_flags: <defaults>
</compile_context>

<pallas_src>
import jax
import jax.numpy as jnp
import numpy as np
from jax import lax
from jax.experimental import pallas as pl
from jax.experimental.pallas import tpu as pltpu

_HIGHEST = jax.lax.Precision.HIGHEST


def attn_kernel(lstm_ref, enc_ref, mask_ref, w_ref, b_ref, out_ref):
    lstm = lstm_ref[...]                     # (B, T, H)
    enc = enc_ref[...]                       # (B, S, H)
    B, T, H = lstm.shape
    S = enc.shape[1]

    # Static slices of the packed weight / bias buffers (layout fixed at init).
    wa_wt = w_ref[0 * H:1 * H, :]            # (H, H)  Wa weight, pre-transposed
    wc_ct = w_ref[1 * H:2 * H, :]            # (H, H)  Wc[:, :H].T  (x context)
    wc_lt = w_ref[2 * H:3 * H, :]            # (H, H)  Wc[:, H:].T  (x lstm)
    b = b_ref[...]                           # (2, H)
    wa_b = b[0:1, :]                         # (1, H)
    wc_b = b[1:2, :]                         # (1, H)

    # Wa(encoder_output): one tall (B*S, H) @ (H, H) matmul.
    k = jnp.dot(enc.reshape(B * S, H), wa_wt,
                preferred_element_type=jnp.float32, precision=_HIGHEST) + wa_b
    k = k.reshape(B, S, H)

    # scores[b, t, s] = <lstm[b, t], Wa(enc)[b, s]>  -- batched NT contraction,
    # no in-kernel transpose.
    scores = lax.dot_general(
        lstm, k, dimension_numbers=(((2,), (2,)), ((0,), (0,))),
        preferred_element_type=jnp.float32, precision=_HIGHEST)   # (B, T, S)

    # masked_fill(mask.unsqueeze(1), -10000): exact torch semantics.
    masked = jnp.broadcast_to(mask_ref[...][:, None, :] != 0, scores.shape)
    scores = jnp.where(masked, jnp.float32(-10000.0), scores)

    # softmax over S (torch dim=2); exact division (kernel is not EUP-bound).
    e = jnp.exp(scores - jnp.max(scores, axis=-1, keepdims=True))
    p = e / jnp.sum(e, axis=-1, keepdims=True)

    # context = attn @ encoder_output  -- batched NN contraction.
    c = lax.dot_general(
        p, enc, dimension_numbers=(((2,), (1,)), ((0,), (0,))),
        preferred_element_type=jnp.float32, precision=_HIGHEST)   # (B, T, H)

    # tanh(Wc(cat(c, lstm))) = tanh(c @ Wc_c^T + lstm @ Wc_l^T + b),
    # fed as two (B*T, H) @ (H, H) matmuls on the packed, pre-transposed blocks.
    h = (jnp.dot(c.reshape(B * T, H), wc_ct,
                 preferred_element_type=jnp.float32, precision=_HIGHEST)
         + jnp.dot(lstm.reshape(B * T, H), wc_lt,
                   preferred_element_type=jnp.float32, precision=_HIGHEST)
         + wc_b)
    out_ref[...] = jnp.tanh(h)               # (B*T, H); reshaped in the wrapper


def prepare_attn_params(wa_w, wa_b, wc_w, wc_b):
    """One-time weight-layout plumbing (run at parameter init, not per call)."""
    H = wa_w.shape[0]
    assert wa_w.shape == (H, H) and wa_b.shape == (H,)
    assert wc_w.shape == (H, 2 * H) and wc_b.shape == (H,)
    w_packed = jnp.concatenate(
        [wa_w.T, wc_w[:, :H].T, wc_w[:, H:].T], axis=0)      # (3H, H)
    b_packed = jnp.stack([wa_b, wc_b], axis=0)               # (2, H)
    return w_packed, b_packed


@jax.jit
def _attn_forward_impl(lstm_output, encoder_output, mask, w_packed, b_packed):
    B, T, H = lstm_output.shape
    S = encoder_output.shape[1]
    mask2d = mask[0].astype(jnp.int32)       # (B, S); trivial op, fused under jit

    flops = (2 * B * S * H * H               # Wa projection
             + 2 * B * T * S * H             # scores
             + 2 * B * T * S * H             # context
             + 4 * B * T * H * H)            # Wc (split concat matmul)
    transcendentals = B * T * S + B * T * H  # exp + tanh
    bytes_accessed = 4 * (2 * B * T * H + B * S * H + B * S + 3 * H * H + 2 * H)

    vmem = pl.BlockSpec(memory_space=pltpu.MemorySpace.VMEM)
    out_flat = pl.pallas_call(
        attn_kernel,
        out_shape=jax.ShapeDtypeStruct((B * T, H), jnp.float32),
        in_specs=[vmem] * 5,
        out_specs=vmem,
        cost_estimate=pl.CostEstimate(flops=flops,
                                      transcendentals=transcendentals,
                                      bytes_accessed=bytes_accessed),
    )(lstm_output, encoder_output, mask2d, w_packed, b_packed)
    return out_flat.reshape(B, T, H)


def attn_forward(lstm_output, encoder_output, t, mask, w_packed, b_packed):
    """Mirror of attn.forward; `t` is unused by the torch module."""
    del t
    return _attn_forward_impl(lstm_output, encoder_output, mask,
                              w_packed, b_packed)


def attn_reference(lstm_output, encoder_output, mask, wa_w, wa_b, wc_w, wc_b):
    """Pure-JAX reference replicating the torch module."""
    mask2d = mask[0]
    k = jnp.einsum('bsh,oh->bso', encoder_output, wa_w,
                   precision=_HIGHEST) + wa_b                   # Wa(enc)
    scores = jnp.einsum('bth,bsh->bts', lstm_output, k,
                        precision=_HIGHEST)                     # bmm
    scores = jnp.where(mask2d[:, None, :], -10000.0, scores)    # masked_fill
    p = jax.nn.softmax(scores, axis=2)
    c = jnp.einsum('bts,bsh->bth', p, encoder_output, precision=_HIGHEST)
    h = jnp.concatenate([c, lstm_output], axis=2)
    return jnp.tanh(jnp.einsum('btk,ok->bto', h, wc_w, precision=_HIGHEST)
                    + wc_b)


if __name__ == "__main__":
    B, T, S, H = 2, 8, 8, 32
    key = jax.random.PRNGKey(0)
    k1, k2, k3, k4, k5, k6 = jax.random.split(key, 6)

    lstm_output = jax.random.normal(k1, (B, T, H), dtype=jnp.float32)
    encoder_output = jax.random.normal(k2, (B, S, H), dtype=jnp.float32)

    # Linear(H, H) and Linear(2H, H) parameters (deterministic synthetic init).
    wa_w = jax.random.normal(k3, (H, H), dtype=jnp.float32) * 0.1
    wa_b = jax.random.normal(k4, (H,), dtype=jnp.float32) * 0.1
    wc_w = jax.random.normal(k5, (H, 2 * H), dtype=jnp.float32) * 0.1
    wc_b = jax.random.normal(k6, (H,), dtype=jnp.float32) * 0.1

    # One-time packing of the projection weights / biases (init-time cost).
    w_packed, b_packed = prepare_attn_params(wa_w, wa_b, wc_w, wc_b)

    # mask comes in with a leading dim (forward does mask = mask[0]);
    # True marks padded encoder positions.
    lengths = jnp.array([6, 4], dtype=jnp.int32)
    mask = (jnp.arange(S)[None, :] >= lengths[:, None])[None, :, :]   # (1, B, S)

    out = attn_forward(lstm_output, encoder_output, 0, mask, w_packed, b_packed)
    out = jax.block_until_ready(out)

    ref = attn_reference(lstm_output, encoder_output, mask,
                         wa_w, wa_b, wc_w, wc_b)
    # Exact softmax division + HIGHEST-precision matmuls on both sides:
    # tolerance tightened from the previous 2e-2 to 1e-4.
    np.testing.assert_allclose(np.asarray(out), np.asarray(ref),
                               rtol=1e-4, atol=1e-4)
    print("KERNEL_OK")
</pallas_src>

<mosaic_0001>
module attributes {stable_mosaic.version = 11 : i64} {
  func.func @attn_kernel(%arg0: memref<2x8x32xf32, #tpu.memory_space<vmem>>, %arg1: memref<2x8x32xf32, #tpu.memory_space<vmem>>, %arg2: memref<2x8xi32, #tpu.memory_space<vmem>>, %arg3: memref<96x32xf32, #tpu.memory_space<vmem>>, %arg4: memref<2x32xf32, #tpu.memory_space<vmem>>, %arg5: memref<16x32xf32, #tpu.memory_space<vmem>>) attributes {dimension_semantics = [], scalar_prefetch = 0 : i64, scratch_operands = 0 : i64, tpu.core_type = #tpu.core_type<tc>} {
    %c0 = arith.constant 0 : index
    %c0_0 = arith.constant 0 : index
    %c0_1 = arith.constant 0 : index
    %0 = vector.load %arg0[%c0, %c0_0, %c0_1] : memref<2x8x32xf32, #tpu.memory_space<vmem>>, vector<2x8x32xf32>
    %c0_2 = arith.constant 0 : index
    %c0_3 = arith.constant 0 : index
    %c0_4 = arith.constant 0 : index
    %1 = vector.load %arg1[%c0_2, %c0_3, %c0_4] : memref<2x8x32xf32, #tpu.memory_space<vmem>>, vector<2x8x32xf32>
    %c0_5 = arith.constant 0 : index
    %c0_6 = arith.constant 0 : index
    %2 = vector.load %arg3[%c0_5, %c0_6] : memref<96x32xf32, #tpu.memory_space<vmem>>, vector<32x32xf32>
    %c32 = arith.constant 32 : index
    %c0_7 = arith.constant 0 : index
    %3 = vector.load %arg3[%c32, %c0_7] : memref<96x32xf32, #tpu.memory_space<vmem>>, vector<32x32xf32>
    %c64 = arith.constant 64 : index
    %c0_8 = arith.constant 0 : index
    %4 = vector.load %arg3[%c64, %c0_8] : memref<96x32xf32, #tpu.memory_space<vmem>>, vector<32x32xf32>
    %c0_9 = arith.constant 0 : index
    %c0_10 = arith.constant 0 : index
    %5 = vector.load %arg4[%c0_9, %c0_10] : memref<2x32xf32, #tpu.memory_space<vmem>>, vector<2x32xf32>
    %6 = vector.extract_strided_slice %5 {offsets = [0, 0], sizes = [1, 32], strides = [1, 1]} : vector<2x32xf32> to vector<1x32xf32>
    %7 = vector.extract_strided_slice %5 {offsets = [1, 0], sizes = [1, 32], strides = [1, 1]} : vector<2x32xf32> to vector<1x32xf32>
    %8 = vector.shape_cast %1 : vector<2x8x32xf32> to vector<16x32xf32>
    %cst = arith.constant dense<0.000000e+00> : vector<16x32xf32>
    %9 = tpu.matmul %8, %2, %cst {dimension_numbers = #tpu.dot_dimension_numbers<[1], [0], [0], [1], [0, 0, 1, 1], [], []>, precision = #tpu.contract_precision<fp32>} : vector<16x32xf32>, vector<32x32xf32>, vector<16x32xf32> -> vector<16x32xf32>
    %10 = vector.broadcast %6 : vector<1x32xf32> to vector<16x32xf32>
    %11 = arith.addf %9, %10 : vector<16x32xf32>
    %12 = vector.shape_cast %11 : vector<16x32xf32> to vector<2x8x32xf32>
    %cst_11 = arith.constant dense<0.000000e+00> : vector<2x8x8xf32>
    %13 = tpu.matmul %0, %12, %cst_11 {dimension_numbers = #tpu.dot_dimension_numbers<[2], [2], [1], [1], [0, 0, 0, 1, 1, 1], [0], [0]>, precision = #tpu.contract_precision<fp32>} : vector<2x8x32xf32>, vector<2x8x32xf32>, vector<2x8x8xf32> -> vector<2x8x8xf32>
    %c0_12 = arith.constant 0 : index
    %c0_13 = arith.constant 0 : index
    %14 = vector.load %arg2[%c0_12, %c0_13] : memref<2x8xi32, #tpu.memory_space<vmem>>, vector<2x8xi32>
    %15 = vector.shape_cast %14 : vector<2x8xi32> to vector<2x1x8xi32>
    %c0_i32 = arith.constant 0 : i32
    %16 = vector.broadcast %c0_i32 : i32 to vector<2x1x8xi32>
    %17 = arith.cmpi ne, %15, %16 : vector<2x1x8xi32>
    %18 = vector.shape_cast %17 : vector<2x1x8xi1> to vector<2x1x8xi1>
    %19 = vector.broadcast %18 : vector<2x1x8xi1> to vector<2x8x8xi1>
    %cst_14 = arith.constant -1.000000e+04 : f32
    %20 = vector.broadcast %cst_14 : f32 to vector<2x8x8xf32>
    %21 = arith.select %19, %20, %13 : vector<2x8x8xi1>, vector<2x8x8xf32>
    %cst_15 = arith.constant dense<0xFF800000> : vector<2x8xf32>
    %22 = vector.multi_reduction <maximumf>, %21, %cst_15 [2] : vector<2x8x8xf32> to vector<2x8xf32>
    %23 = vector.shape_cast %22 : vector<2x8xf32> to vector<2x8x1xf32>
    %24 = vector.broadcast %23 : vector<2x8x1xf32> to vector<2x8x8xf32>
    %25 = arith.subf %21, %24 : vector<2x8x8xf32>
    %26 = math.exp %25 : vector<2x8x8xf32>
    %cst_16 = arith.constant dense<0.000000e+00> : vector<2x8xf32>
    %27 = vector.multi_reduction <add>, %26, %cst_16 [2] : vector<2x8x8xf32> to vector<2x8xf32>
    %28 = vector.shape_cast %27 : vector<2x8xf32> to vector<2x8x1xf32>
    %29 = vector.broadcast %28 : vector<2x8x1xf32> to vector<2x8x8xf32>
    %30 = arith.divf %26, %29 : vector<2x8x8xf32>
    %cst_17 = arith.constant dense<0.000000e+00> : vector<2x8x32xf32>
    %31 = tpu.matmul %30, %1, %cst_17 {dimension_numbers = #tpu.dot_dimension_numbers<[2], [1], [1], [2], [0, 0, 0, 1, 1, 2], [0], [0]>, precision = #tpu.contract_precision<fp32>} : vector<2x8x8xf32>, vector<2x8x32xf32>, vector<2x8x32xf32> -> vector<2x8x32xf32>
    %32 = vector.shape_cast %31 : vector<2x8x32xf32> to vector<16x32xf32>
    %cst_18 = arith.constant dense<0.000000e+00> : vector<16x32xf32>
    %33 = tpu.matmul %32, %3, %cst_18 {dimension_numbers = #tpu.dot_dimension_numbers<[1], [0], [0], [1], [0, 0, 1, 1], [], []>, precision = #tpu.contract_precision<fp32>} : vector<16x32xf32>, vector<32x32xf32>, vector<16x32xf32> -> vector<16x32xf32>
    %34 = vector.shape_cast %0 : vector<2x8x32xf32> to vector<16x32xf32>
    %cst_19 = arith.constant dense<0.000000e+00> : vector<16x32xf32>
    %35 = tpu.matmul %34, %4, %cst_19 {dimension_numbers = #tpu.dot_dimension_numbers<[1], [0], [0], [1], [0, 0, 1, 1], [], []>, precision = #tpu.contract_precision<fp32>} : vector<16x32xf32>, vector<32x32xf32>, vector<16x32xf32> -> vector<16x32xf32>
    %36 = arith.addf %33, %35 : vector<16x32xf32>
    %37 = vector.broadcast %7 : vector<1x32xf32> to vector<16x32xf32>
    %38 = arith.addf %36, %37 : vector<16x32xf32>
    %39 = math.tanh %38 : vector<16x32xf32>
    %c0_20 = arith.constant 0 : index
    %c0_21 = arith.constant 0 : index
    %40 = vector.load %arg5[%c0_20, %c0_21] : memref<16x32xf32, #tpu.memory_space<vmem>>, vector<16x32xf32>
    tpu.vector_store %arg5[%c0_20, %c0_21], %39 {strides = array<i32>} : memref<16x32xf32, #tpu.memory_space<vmem>>, vector<16x32xf32>,
    return
  }
}

</mosaic_0001>

<llo_original>
// kernel: _attn_forward_impl.1
$region0: #{_attn_forward_impl.1}
  #allocation0 [shape = 'u32[]', space=smem, size = 0x4, offset = 0x4, fixed_abs, tag = 'smem constant byte address 0x4 - core index']
  #allocation1 [shape = 'u32[144,128]{1,0:T(1,128)}', space=vmem, size = 0x12000, scoped, tag = 'internal scratch']
  %s0 = inlined_call_operand.vmem [shape: f32[2,8,32], index: 0, kind: input, shape index: {}]
  %s1 = inlined_call_operand.vmem [shape: f32[2,8,32], index: 1, kind: input, shape index: {}]
  %s2 = inlined_call_operand.vmem [shape: s32[2,8], index: 2, kind: input, shape index: {}]
  %s3 = inlined_call_operand.vmem [shape: f32[96,32], index: 3, kind: input, shape index: {}]
  %s4 = inlined_call_operand.vmem [shape: f32[2,32], index: 4, kind: input, shape index: {}]
  %s5 = inlined_call_operand.hbm [shape: f32[16,32], index: 5, kind: output, shape index: {}]
  %s6 = sld [smem:[#allocation0]]
  $region30: #{_attn_forward_impl.1} parent=0
    _
  %s8 = ssub.s32 1, %s6
  %s9 = scalar_select 0, %s8, %s6
  $region1: #{_attn_forward_impl.1} parent=0
    #allocation2 [shape = 'u8[8192]{0}', space=vmem, size = 0x2000, scoped, tag = 'output window, operand 0, single buffered']
    #allocation3 [shape = 's32[1]{0}', space=sflag, size = 0x4, scoped, tag = 'scoped memory for _attn_forward_impl.1']
    %10 = vsyncpa [#allocation3], 0
    // Predicated region
    $region2: #{_attn_forward_impl.1} parent=1 // pred_check
      _
    $region3: #{_attn_forward_impl.1} parent=1 // pred_check_branch
      %12 = sbr.rel (0) target = $region5
    $region4: #{_attn_forward_impl.1} parent=1 // pred_region
      _
    $region5: #{_attn_forward_impl.1} parent=1 // pred_fallthru
      _
    // Predicated region
    $region6: #{_attn_forward_impl.1} parent=1 // pred_check
      _
    $region7: #{_attn_forward_impl.1} parent=1 // pred_check_branch
      %14 = sbr.rel (0) target = $region9
    $region8: #{_attn_forward_impl.1} parent=1 // pred_region
      _
    $region9: #{_attn_forward_impl.1} parent=1 // pred_fallthru
      _
    // Predicated region
    $region10: #{_attn_forward_impl.1} parent=1 // pred_check
      _
    $region11: #{_attn_forward_impl.1} parent=1 // pred_check_branch
      %16 = sbr.rel (0) target = $region13
    $region12: #{_attn_forward_impl.1} parent=1 // pred_region
      _
    $region13: #{_attn_forward_impl.1} parent=1 // pred_fallthru
      _
    // Predicated region
    $region14: #{_attn_forward_impl.1} parent=1 // pred_check
      _
    $region15: #{_attn_forward_impl.1} parent=1 // pred_check_branch
      %18 = sbr.rel (0) target = $region17
    $region16: #{_attn_forward_impl.1} parent=1 // pred_region
      _
    $region17: #{_attn_forward_impl.1} parent=1 // pred_fallthru
      _
    // Predicated region
    $region18: #{_attn_forward_impl.1} parent=1 // pred_check
      _
    $region19: #{_attn_forward_impl.1} parent=1 // pred_check_branch
      %20 = sbr.rel (0) target = $region21
    $region20: #{_attn_forward_impl.1} parent=1 // pred_region
      _
    $region21: #{_attn_forward_impl.1} parent=1 // pred_fallthru
      _
    %v21 = vld [vmem:[%s0] sm:$0xff]
    %v22 = vld [vmem:[%s0 + $0x8] sm:$0xff]
    %v23 = vld [vmem:[%s1] sm:$0xff]
    %v24 = vld [vmem:[%s1 + $0x8] sm:$0xff]
    %v25 = vld [vmem:[%s3] sm:$0xff]
    %v26 = vld [vmem:[%s3 + $0x8] sm:$0xff]
    %v27 = vld [vmem:[%s3 + $0x10] sm:$0xff]
    %v28 = vld [vmem:[%s3 + $0x18] sm:$0xff]
    %v29 = vld [vmem:[%s3 + $0x20] sm:$0xff]
    %v30 = vld [vmem:[%s3 + $0x28] sm:$0xff]
    %v31 = vld [vmem:[%s3 + $0x30] sm:$0xff]
    %v32 = vld [vmem:[%s3 + $0x38] sm:$0xff]
    %v33 = vld [vmem:[%s3 + $0x40] sm:$0xff]
    %v34 = vld [vmem:[%s3 + $0x48] sm:$0xff]
    %v35 = vld [vmem:[%s3 + $0x50] sm:$0xff]
    %v36 = vld [vmem:[%s3 + $0x58] sm:$0xff]
    %v37 = vld [vmem:[%s4] sm:$0x3]
    %v38 = vlaneseq
    %v39 = vshrl.u32 %v38, 7
    %v40 = vsub.s32 0, %v39
    %v41 = vrot.slane %v37, %v40
    %vm42 = vcmask 261120
    %v44 = vsel %vm42, %v23, 0
    %v47 = vsel %vm42, %v24, 0
    %49 = vmatprep.subr.mxu0 0.0
    %v50 = vand.u32 %v25, 4294901760
    %51 = vmatpush1.msra.mxu0 %v50
    %52 = vmatprep.subr.mxu0 0.0
    %v53 = vand.u32 %v26, 4294901760
    %54 = vmatpush1.msra.mxu0 %v53
    %55 = vmatprep.subr.mxu0 0.0
    %v56 = vand.u32 %v27, 4294901760
    %57 = vmatpush1.msra.mxu0 %v56
    %58 = vmatprep.subr.mxu0 0.0
    %v59 = vand.u32 %v28, 4294901760
    %60 = vmatpush1.msra.mxu0 %v59
    %61 = vmatprep.subr.mxu0 0.0
    %62 = vmatpush1.msra.mxu0 0.0
    %63 = vmatprep.subr.mxu0 0.0
    %64 = vmatpush1.msra.mxu0 0.0
    %65 = vmatprep.subr.mxu0 0.0
    %66 = vmatpush1.msra.mxu0 0.0
    %67 = vmatprep.subr.mxu0 0.0
    %68 = vmatpush1.msra.mxu0 0.0
    %69 = vmatprep.subr.mxu0 0.0
    %70 = vmatpush1.msra.mxu0 0.0
    %71 = vmatprep.subr.mxu0 0.0
    %72 = vmatpush1.msra.mxu0 0.0
    %73 = vmatprep.subr.mxu0 0.0
    %74 = vmatpush1.msra.mxu0 0.0
    %75 = vmatprep.subr.mxu0 0.0
    %76 = vmatpush1.msra.mxu0 0.0
    %77 = vmatprep.subr.mxu0 0.0
    %78 = vmatpush1.msra.mxu0 0.0
    %79 = vmatprep.subr.mxu0 0.0
    %80 = vmatpush1.msra.mxu0 0.0
    %81 = vmatprep.subr.mxu0 0.0
    %82 = vmatpush1.msra.mxu0 0.0
    %83 = vmatprep.subr.mxu0 0.0
    %84 = vmatpush1.msra.mxu0 0.0
    %85 = vmatprep.subr.mxu0 0.0
    %86 = vmatpush1.msra.mxu0 0.0
    %87 = vmatprep.subr.mxu0 0.0
    %88 = vmatpush1.msra.mxu0 0.0
    %89 = vmatprep.subr.mxu0 0.0
    %90 = vmatpush1.msra.mxu0 0.0
    %91 = vmatprep.subr.mxu0 0.0
    %92 = vmatpush1.msra.mxu0 0.0
    %93 = vmatprep.subr.mxu0 0.0
    %94 = vmatpush1.msra.mxu0 0.0
    %95 = vmatprep.subr.mxu0 0.0
    %96 = vmatpush1.msra.mxu0 0.0
    %97 = vmatprep.subr.mxu0 0.0
    %98 = vmatpush1.msra.mxu0 0.0
    %99 = vmatprep.subr.mxu0 0.0
    %100 = vmatpush1.msra.mxu0 0.0
    %101 = vmatprep.subr.mxu0 0.0
    %102 = vmatpush1.msra.mxu0 0.0
    %103 = vmatprep.subr.mxu0 0.0
    %104 = vmatpush1.msra.mxu0 0.0
    %105 = vmatprep.subr.mxu0 0.0
    %106 = vmatpush1.msra.mxu0 0.0
    %107 = vmatprep.subr.mxu0 0.0
    %108 = vmatpush1.msra.mxu0 0.0
    %109 = vmatprep.subr.mxu0 0.0
    %110 = vmatpush1.msra.mxu0 0.0
    %111 = vmatprep.subr.mxu0 0.0
    %112 = vmatpush1.msra.mxu0 0.0
    %113 = vmatprep.subr.mxu0 0.0
    %114 = vmatpush1.msra.mxu0 0.0
    %115 = vmatprep.subr.mxu0 0.0
    %116 = vmatpush1.msra.mxu0 0.0
    %117 = vmatprep.mubr.f32.mxu0 0.0
    %v118 = vand.u32 %v44, 4294901760
    %v119 = vsub.f32 %v44, %v118
    %v120 = vand.u32 %v119, 4294901760
    %v121 = vsub.f32 %v119, %v120
    %v122 = vand.u32 %v121, 4294901760
    %123 = vmatmul.mubr.f32.gmra.mrb[0].mxu0 %v122
    %v124 = vpop.f32.mrb[0].mxu0
    %v125 = vadd.f32 %v41, %v124
    %v126 = vpop.f32.mrb[0].mxu0
    %127 = vmatprep.mubr.f32.mxu0 0.0
    %v128 = vand.u32 %v47, 4294901760
    %v129 = vsub.f32 %v47, %v128
    %v130 = vand.u32 %v129, 4294901760
    %v131 = vsub.f32 %v129, %v130
    %v132 = vand.u32 %v131, 4294901760
    %133 = vmatmul.mubr.f32.gmra.mrb[0].mxu0 %v132
    %v134 = vpop.f32.mrb[0].mxu0
    %v135 = vadd.f32 %v41, %v134
    %v136 = vpop.f32.mrb[0].mxu0
    %137 = vdwg.mxu0
    %138 = vmatprep.subr.mxu0 0.0
    %v139 = vand.u32 %v25, 4294901760
    %v140 = vsub.f32 %v25, %v139
    %v141 = vand.u32 %v140, 4294901760
    %v142 = vsub.f32 %v140, %v141
    %v143 = vand.u32 %v142, 4294901760
    %144 = vmatpush1.msra.mxu0 %v143
    %145 = vmatprep.subr.mxu0 0.0
    %v146 = vand.u32 %v26, 4294901760
    %v147 = vsub.f32 %v26, %v146
    %v148 = vand.u32 %v147, 4294901760
    %v149 = vsub.f32 %v147, %v148
    %v150 = vand.u32 %v149, 4294901760
    %151 = vmatpush1.msra.mxu0 %v150
    %152 = vmatprep.subr.mxu0 0.0
    %v153 = vand.u32 %v27, 4294901760
    %v154 = vsub.f32 %v27, %v153
    %v155 = vand.u32 %v154, 4294901760
    %v156 = vsub.f32 %v154, %v155
    %v157 = vand.u32 %v156, 4294901760
    %158 = vmatpush1.msra.mxu0 %v157
    %159 = vmatprep.subr.mxu0 0.0
    %v160 = vand.u32 %v28, 4294901760
    %v161 = vsub.f32 %v28, %v160
    %v162 = vand.u32 %v161, 4294901760
    %v163 = vsub.f32 %v161, %v162
    %v164 = vand.u32 %v163, 4294901760
    %165 = vmatpush1.msra.mxu0 %v164
    %166 = vmatprep.subr.mxu0 0.0
    %167 = vmatpush1.msra.mxu0 0.0
    %168 = vmatprep.subr.mxu0 0.0
    %169 = vmatpush1.msra.mxu0 0.0
    %170 = vmatprep.subr.mxu0 0.0
    %171 = vmatpush1.msra.mxu0 0.0
    %172 = vmatprep.subr.mxu0 0.0
    %173 = vmatpush1.msra.mxu0 0.0
    %174 = vmatprep.subr.mxu0 0.0
    %175 = vmatpush1.msra.mxu0 0.0
    %176 = vmatprep.subr.mxu0 0.0
    %177 = vmatpush1.msra.mxu0 0.0
    %178 = vmatprep.subr.mxu0 0.0
    %179 = vmatpush1.msra.mxu0 0.0
    %180 = vmatprep.subr.mxu0 0.0
    %181 = vmatpush1.msra.mxu0 0.0
    %182 = vmatprep.subr.mxu0 0.0
    %183 = vmatpush1.msra.mxu0 0.0
    %184 = vmatprep.subr.mxu0 0.0
    %185 = vmatpush1.msra.mxu0 0.0
    %186 = vmatprep.subr.mxu0 0.0
    %187 = vmatpush1.msra.mxu0 0.0
    %188 = vmatprep.subr.mxu0 0.0
    %189 = vmatpush1.msra.mxu0 0.0
    %190 = vmatprep.subr.mxu0 0.0
    %191 = vmatpush1.msra.mxu0 0.0
    %192 = vmatprep.subr.mxu0 0.0
    %193 = vmatpush1.msra.mxu0 0.0
    %194 = vmatprep.subr.mxu0 0.0
    %195 = vmatpush1.msra.mxu0 0.0
    %196 = vmatprep.subr.mxu0 0.0
    %197 = vmatpush1.msra.mxu0 0.0
    %198 = vmatprep.subr.mxu0 0.0
    %199 = vmatpush1.msra.mxu0 0.0
    %200 = vmatprep.subr.mxu0 0.0
    %201 = vmatpush1.msra.mxu0 0.0
    %202 = vmatprep.subr.mxu0 0.0
    %203 = vmatpush1.msra.mxu0 0.0
    %204 = vmatprep.subr.mxu0 0.0
    %205 = vmatpush1.msra.mxu0 0.0
    %206 = vmatprep.subr.mxu0 0.0
    %207 = vmatpush1.msra.mxu0 0.0
    %208 = vmatprep.subr.mxu0 0.0
    %209 = vmatpush1.msra.mxu0 0.0
    %210 = vmatprep.subr.mxu0 0.0
    %211 = vmatpush1.msra.mxu0 0.0
    %212 = vmatprep.subr.mxu0 0.0
    %213 = vmatpush1.msra.mxu0 0.0
    %214 = vmatprep.subr.mxu0 0.0
    %215 = vmatpush1.msra.mxu0 0.0
    %216 = vmatprep.subr.mxu0 0.0
    %217 = vmatpush1.msra.mxu0 0.0
    %218 = vmatprep.subr.mxu0 0.0
    %219 = vmatpush1.msra.mxu0 0.0
    %220 = vmatprep.subr.mxu0 0.0
    %221 = vmatpush1.msra.mxu0 0.0
    %222 = vmatprep.mubr.f32.mxu0 0.0
    %v223 = vand.u32 %v44, 4294901760
    %224 = vmatmul.mubr.f32.gmra.mrb[0].mxu0 %v223
    %v225 = vpop.f32.mrb[0].mxu0
    %v226 = vadd.f32 %v125, %v225
    %v227 = vpop.f32.mrb[0].mxu0
    %228 = vmatprep.mubr.f32.mxu0 0.0
    %v229 = vand.u32 %v47, 4294901760
    %230 = vmatmul.mubr.f32.gmra.mrb[0].mxu0 %v229
    %v231 = vpop.f32.mrb[0].mxu0
    %v232 = vadd.f32 %v135, %v231
    %v233 = vpop.f32.mrb[0].mxu0
    %234 = vdwg.mxu0
    %235 = vmatprep.subr.mxu0 0.0
    %v236 = vand.u32 %v25, 4294901760
    %v237 = vsub.f32 %v25, %v236
    %238 = vmatpush1.msra.mxu0 %v237
    %239 = vmatprep.subr.mxu0 0.0
    %v240 = vand.u32 %v26, 4294901760
    %v241 = vsub.f32 %v26, %v240
    %242 = vmatpush1.msra.mxu0 %v241
    %243 = vmatprep.subr.mxu0 0.0
    %v244 = vand.u32 %v27, 4294901760
    %v245 = vsub.f32 %v27, %v244
    %246 = vmatpush1.msra.mxu0 %v245
    %247 = vmatprep.subr.mxu0 0.0
    %v248 = vand.u32 %v28, 4294901760
    %v249 = vsub.f32 %v28, %v248
    %250 = vmatpush1.msra.mxu0 %v249
    %251 = vmatprep.subr.mxu0 0.0
    %252 = vmatpush1.msra.mxu0 0.0
    %253 = vmatprep.subr.mxu0 0.0
    %254 = vmatpush1.msra.mxu0 0.0
    %255 = vmatprep.subr.mxu0 0.0
    %256 = vmatpush1.msra.mxu0 0.0
    %257 = vmatprep.subr.mxu0 0.0
    %258 = vmatpush1.msra.mxu0 0.0
    %259 = vmatprep.subr.mxu0 0.0
    %260 = vmatpush1.msra.mxu0 0.0
    %261 = vmatprep.subr.mxu0 0.0
    %262 = vmatpush1.msra.mxu0 0.0
    %263 = vmatprep.subr.mxu0 0.0
    %264 = vmatpush1.msra.mxu0 0.0
    %265 = vmatprep.subr.mxu0 0.0
    %266 = vmatpush1.msra.mxu0 0.0
    %267 = vmatprep.subr.mxu0 0.0
    %268 = vmatpush1.msra.mxu0 0.0
    %269 = vmatprep.subr.mxu0 0.0
    %270 = vmatpush1.msra.mxu0 0.0
    %271 = vmatprep.subr.mxu0 0.0
    %272 = vmatpush1.msra.mxu0 0.0
    %273 = vmatprep.subr.mxu0 0.0
    %274 = vmatpush1.msra.mxu0 0.0
    %275 = vmatprep.subr.mxu0 0.0
    %276 = vmatpush1.msra.mxu0 0.0
    %277 = vmatprep.subr.mxu0 0.0
    %278 = vmatpush1.msra.mxu0 0.0
    %279 = vmatprep.subr.mxu0 0.0
    %280 = vmatpush1.msra.mxu0 0.0
    %281 = vmatprep.subr.mxu0 0.0
    %282 = vmatpush1.msra.mxu0 0.0
    %283 = vmatprep.subr.mxu0 0.0
    %284 = vmatpush1.msra.mxu0 0.0
    %285 = vmatprep.subr.mxu0 0.0
    %286 = vmatpush1.msra.mxu0 0.0
    %287 = vmatprep.subr.mxu0 0.0
    %288 = vmatpush1.msra.mxu0 0.0
    %289 = vmatprep.subr.mxu0 0.0
    %290 = vmatpush1.msra.mxu0 0.0
    %291 = vmatprep.subr.mxu0 0.0
    %292 = vmatpush1.msra.mxu0 0.0
    %293 = vmatprep.subr.mxu0 0.0
    %294 = vmatpush1.msra.mxu0 0.0
    %295 = vmatprep.subr.mxu0 0.0
    %296 = vmatpush1.msra.mxu0 0.0
    %297 = vmatprep.subr.mxu0 0.0
    %298 = vmatpush1.msra.mxu0 0.0
    %299 = vmatprep.subr.mxu0 0.0
    %300 = vmatpush1.msra.mxu0 0.0
    %301 = vmatprep.subr.mxu0 0.0
    %302 = vmatpush1.msra.mxu0 0.0
    %303 = vmatprep.subr.mxu0 0.0
    %304 = vmatpush1.msra.mxu0 0.0
    %305 = vmatprep.subr.mxu0 0.0
    %306 = vmatpush1.msra.mxu0 0.0
    %307 = vmatprep.mubr.f32.mxu0 0.0
    %v308 = vand.u32 %v44, 4294901760
    %v309 = vsub.f32 %v44, %v308
    %310 = vmatmul.mubr.f32.gmra.mrb[0].mxu0 %v309
    %v311 = vpop.f32.mrb[0].mxu0
    %v312 = vadd.f32 %v226, %v311
    %v313 = vpop.f32.mrb[0].mxu0
    %314 = vmatprep.mubr.f32.mxu0 0.0
    %v315 = vand.u32 %v47, 4294901760
    %v316 = vsub.f32 %v47, %v315
    %317 = vmatmul.mubr.f32.gmra.mrb[0].mxu0 %v316
    %v318 = vpop.f32.mrb[0].mxu0
    %v319 = vadd.f32 %v232, %v318
    %v320 = vpop.f32.mrb[0].mxu0
    %321 = vdwg.mxu0
    %322 = vmatprep.subr.mxu0 0.0
    %v323 = vand.u32 %v25, 4294901760
    %324 = vmatpush1.msra.mxu0 %v323
    %325 = vmatprep.subr.mxu0 0.0
    %v326 = vand.u32 %v26, 4294901760
    %327 = vmatpush1.msra.mxu0 %v326
    %328 = vmatprep.subr.mxu0 0.0
    %v329 = vand.u32 %v27, 4294901760
    %330 = vmatpush1.msra.mxu0 %v329
    %331 = vmatprep.subr.mxu0 0.0
    %v332 = vand.u32 %v28, 4294901760
    %333 = vmatpush1.msra.mxu0 %v332
    %334 = vmatprep.subr.mxu0 0.0
    %335 = vmatpush1.msra.mxu0 0.0
    %336 = vmatprep.subr.mxu0 0.0
    %337 = vmatpush1.msra.mxu0 0.0
    %338 = vmatprep.subr.mxu0 0.0
    %339 = vmatpush1.msra.mxu0 0.0
    %340 = vmatprep.subr.mxu0 0.0
    %341 = vmatpush1.msra.mxu0 0.0
    %342 = vmatprep.subr.mxu0 0.0
    %343 = vmatpush1.msra.mxu0 0.0
    %344 = vmatprep.subr.mxu0 0.0
    %345 = vmatpush1.msra.mxu0 0.0
    %346 = vmatprep.subr.mxu0 0.0
    %347 = vmatpush1.msra.mxu0 0.0
    %348 = vmatprep.subr.mxu0 0.0
    %349 = vmatpush1.msra.mxu0 0.0
    %350 = vmatprep.subr.mxu0 0.0
    %351 = vmatpush1.msra.mxu0 0.0
    %352 = vmatprep.subr.mxu0 0.0
    %353 = vmatpush1.msra.mxu0 0.0
    %354 = vmatprep.subr.mxu0 0.0
    %355 = vmatpush1.msra.mxu0 0.0
    %356 = vmatprep.subr.mxu0 0.0
    %357 = vmatpush1.msra.mxu0 0.0
    %358 = vmatprep.subr.mxu0 0.0
    %359 = vmatpush1.msra.mxu0 0.0
    %360 = vmatprep.subr.mxu0 0.0
    %361 = vmatpush1.msra.mxu0 0.0
    %362 = vmatprep.subr.mxu0 0.0
    %363 = vmatpush1.msra.mxu0 0.0
    %364 = vmatprep.subr.mxu0 0.0
    %365 = vmatpush1.msra.mxu0 0.0
    %366 = vmatprep.subr.mxu0 0.0
    %367 = vmatpush1.msra.mxu0 0.0
    %368 = vmatprep.subr.mxu0 0.0
    %369 = vmatpush1.msra.mxu0 0.0
    %370 = vmatprep.subr.mxu0 0.0
    %371 = vmatpush1.msra.mxu0 0.0
    %372 = vmatprep.subr.mxu0 0.0
    %373 = vmatpush1.msra.mxu0 0.0
    %374 = vmatprep.subr.mxu0 0.0
    %375 = vmatpush1.msra.mxu0 0.0
    %376 = vmatprep.subr.mxu0 0.0
    %377 = vmatpush1.msra.mxu0 0.0
    %378 = vmatprep.subr.mxu0 0.0
    %379 = vmatpush1.msra.mxu0 0.0
    %380 = vmatprep.subr.mxu0 0.0
    %381 = vmatpush1.msra.mxu0 0.0
    %382 = vmatprep.subr.mxu0 0.0
    %383 = vmatpush1.msra.mxu0 0.0
    %384 = vmatprep.subr.mxu0 0.0
    %385 = vmatpush1.msra.mxu0 0.0
    %386 = vmatprep.subr.mxu0 0.0
    %387 = vmatpush1.msra.mxu0 0.0
    %388 = vmatprep.subr.mxu0 0.0
    %389 = vmatpush1.msra.mxu0 0.0
    %390 = vmatprep.mubr.f32.mxu0 0.0
    %v391 = vand.u32 %v44, 4294901760
    %v392 = vsub.f32 %v44, %v391
    %v393 = vand.u32 %v392, 4294901760
    %394 = vmatmul.mubr.f32.gmra.mrb[0].mxu0 %v393
    %v395 = vpop.f32.mrb[0].mxu0
    %v396 = vadd.f32 %v312, %v395
    %v397 = vpop.f32.mrb[0].mxu0
    %398 = vmatprep.mubr.f32.mxu0 0.0
    %v399 = vand.u32 %v47, 4294901760
    %v400 = vsub.f32 %v47, %v399
    %v401 = vand.u32 %v400, 4294901760
    %402 = vmatmul.mubr.f32.gmra.mrb[0].mxu0 %v401
    %v403 = vpop.f32.mrb[0].mxu0
    %v404 = vadd.f32 %v319, %v403
    %v405 = vpop.f32.mrb[0].mxu0
    %406 = vdwg.mxu0
    %407 = vmatprep.subr.mxu0 0.0
    %v408 = vand.u32 %v25, 4294901760
    %v409 = vsub.f32 %v25, %v408
    %v410 = vand.u32 %v409, 4294901760
    %411 = vmatpush1.msra.mxu0 %v410
    %412 = vmatprep.subr.mxu0 0.0
    %v413 = vand.u32 %v26, 4294901760
    %v414 = vsub.f32 %v26, %v413
    %v415 = vand.u32 %v414, 4294901760
    %416 = vmatpush1.msra.mxu0 %v415
    %417 = vmatprep.subr.mxu0 0.0
    %v418 = vand.u32 %v27, 4294901760
    %v419 = vsub.f32 %v27, %v418
    %v420 = vand.u32 %v419, 4294901760
    %421 = vmatpush1.msra.mxu0 %v420
    %422 = vmatprep.subr.mxu0 0.0
    %v423 = vand.u32 %v28, 4294901760
    %v424 = vsub.f32 %v28, %v423
    %v425 = vand.u32 %v424, 4294901760
    %426 = vmatpush1.msra.mxu0 %v425
    %427 = vmatprep.subr.mxu0 0.0
    %428 = vmatpush1.msra.mxu0 0.0
    %429 = vmatprep.subr.mxu0 0.0
    %430 = vmatpush1.msra.mxu0 0.0
    %431 = vmatprep.subr.mxu0 0.0
    %432 = vmatpush1.msra.mxu0 0.0
    %433 = vmatprep.subr.mxu0 0.0
    %434 = vmatpush1.msra.mxu0 0.0
    %435 = vmatprep.subr.mxu0 0.0
    %436 = vmatpush1.msra.mxu0 0.0
    %437 = vmatprep.subr.mxu0 0.0
    %438 = vmatpush1.msra.mxu0 0.0
    %439 = vmatprep.subr.mxu0 0.0
    %440 = vmatpush1.msra.mxu0 0.0
    %441 = vmatprep.subr.mxu0 0.0
    %442 = vmatpush1.msra.mxu0 0.0
    %443 = vmatprep.subr.mxu0 0.0
    %444 = vmatpush1.msra.mxu0 0.0
    %445 = vmatprep.subr.mxu0 0.0
    %446 = vmatpush1.msra.mxu0 0.0
    %447 = vmatprep.subr.mxu0 0.0
    %448 = vmatpush1.msra.mxu0 0.0
    %449 = vmatprep.subr.mxu0 0.0
    %450 = vmatpush1.msra.mxu0 0.0
    %451 = vmatprep.subr.mxu0 0.0
    %452 = vmatpush1.msra.mxu0 0.0
    %453 = vmatprep.subr.mxu0 0.0
    %454 = vmatpush1.msra.mxu0 0.0
    %455 = vmatprep.subr.mxu0 0.0
    %456 = vmatpush1.msra.mxu0 0.0
    %457 = vmatprep.subr.mxu0 0.0
    %458 = vmatpush1.msra.mxu0 0.0
    %459 = vmatprep.subr.mxu0 0.0
    %460 = vmatpush1.msra.mxu0 0.0
    %461 = vmatprep.subr.mxu0 0.0
    %462 = vmatpush1.msra.mxu0 0.0
    %463 = vmatprep.subr.mxu0 0.0
    %464 = vmatpush1.msra.mxu0 0.0
    %465 = vmatprep.subr.mxu0 0.0
    %466 = vmatpush1.msra.mxu0 0.0
    %467 = vmatprep.subr.mxu0 0.0
    %468 = vmatpush1.msra.mxu0 0.0
    %469 = vmatprep.subr.mxu0 0.0
    %470 = vmatpush1.msra.mxu0 0.0
    %471 = vmatprep.subr.mxu0 0.0
    %472 = vmatpush1.msra.mxu0 0.0
    %473 = vmatprep.subr.mxu0 0.0
    %474 = vmatpush1.msra.mxu0 0.0
    %475 = vmatprep.subr.mxu0 0.0
    %476 = vmatpush1.msra.mxu0 0.0
    %477 = vmatprep.subr.mxu0 0.0
    %478 = vmatpush1.msra.mxu0 0.0
    %479 = vmatprep.subr.mxu0 0.0
    %480 = vmatpush1.msra.mxu0 0.0
    %481 = vmatprep.subr.mxu0 0.0
    %482 = vmatpush1.msra.mxu0 0.0
    %483 = vmatprep.mubr.f32.mxu0 0.0
    %v484 = vand.u32 %v44, 4294901760
    %485 = vmatmul.mubr.f32.gmra.mrb[0].mxu0 %v484
    %v486 = vpop.f32.mrb[0].mxu0
    %v487 = vadd.f32 %v396, %v486
    %v488 = vpop.f32.mrb[0].mxu0
    %489 = vmatprep.mubr.f32.mxu0 0.0
    %v490 = vand.u32 %v47, 4294901760
    %491 = vmatmul.mubr.f32.gmra.mrb[0].mxu0 %v490
    %v492 = vpop.f32.mrb[0].mxu0
    %v493 = vadd.f32 %v404, %v492
    %v494 = vpop.f32.mrb[0].mxu0
    %495 = vdwg.mxu0
    %496 = vmatprep.subr.mxu0 0.0
    %v497 = vand.u32 %v25, 4294901760
    %498 = vmatpush1.msra.mxu0 %v497
    %499 = vmatprep.subr.mxu0 0.0
    %v500 = vand.u32 %v26, 4294901760
    %501 = vmatpush1.msra.mxu0 %v500
    %502 = vmatprep.subr.mxu0 0.0
    %v503 = vand.u32 %v27, 4294901760
    %504 = vmatpush1.msra.mxu0 %v503
    %505 = vmatprep.subr.mxu0 0.0
    %v506 = vand.u32 %v28, 4294901760
    %507 = vmatpush1.msra.mxu0 %v506
    %508 = vmatprep.subr.mxu0 0.0
    %509 = vmatpush1.msra.mxu0 0.0
    %510 = vmatprep.subr.mxu0 0.0
    %511 = vmatpush1.msra.mxu0 0.0
    %512 = vmatprep.subr.mxu0 0.0
    %513 = vmatpush1.msra.mxu0 0.0
    %514 = vmatprep.subr.mxu0 0.0
    %515 = vmatpush1.msra.mxu0 0.0
    %516 = vmatprep.subr.mxu0 0.0
    %517 = vmatpush1.msra.mxu0 0.0
    %518 = vmatprep.subr.mxu0 0.0
    %519 = vmatpush1.msra.mxu0 0.0
    %520 = vmatprep.subr.mxu0 0.0
    %521 = vmatpush1.msra.mxu0 0.0
    %522 = vmatprep.subr.mxu0 0.0
    %523 = vmatpush1.msra.mxu0 0.0
    %524 = vmatprep.subr.mxu0 0.0
    %525 = vmatpush1.msra.mxu0 0.0
    %526 = vmatprep.subr.mxu0 0.0
    %527 = vmatpush1.msra.mxu0 0.0
    %528 = vmatprep.subr.mxu0 0.0
    %529 = vmatpush1.msra.mxu0 0.0
    %530 = vmatprep.subr.mxu0 0.0
    %531 = vmatpush1.msra.mxu0 0.0
    %532 = vmatprep.subr.mxu0 0.0
    %533 = vmatpush1.msra.mxu0 0.0
    %534 = vmatprep.subr.mxu0 0.0
    %535 = vmatpush1.msra.mxu0 0.0
    %536 = vmatprep.subr.mxu0 0.0
    %537 = vmatpush1.msra.mxu0 0.0
    %538 = vmatprep.subr.mxu0 0.0
    %539 = vmatpush1.msra.mxu0 0.0
    %540 = vmatprep.subr.mxu0 0.0
    %541 = vmatpush1.msra.mxu0 0.0
    %542 = vmatprep.subr.mxu0 0.0
    %543 = vmatpush1.msra.mxu0 0.0
    %544 = vmatprep.subr.mxu0 0.0
    %545 = vmatpush1.msra.mxu0 0.0
    %546 = vmatprep.subr.mxu0 0.0
    %547 = vmatpush1.msra.mxu0 0.0
    %548 = vmatprep.subr.mxu0 0.0
    %549 = vmatpush1.msra.mxu0 0.0
    %550 = vmatprep.subr.mxu0 0.0
    %551 = vmatpush1.msra.mxu0 0.0
    %552 = vmatprep.subr.mxu0 0.0
    %553 = vmatpush1.msra.mxu0 0.0
    %554 = vmatprep.subr.mxu0 0.0
    %555 = vmatpush1.msra.mxu0 0.0
    %556 = vmatprep.subr.mxu0 0.0
    %557 = vmatpush1.msra.mxu0 0.0
    %558 = vmatprep.subr.mxu0 0.0
    %559 = vmatpush1.msra.mxu0 0.0
    %560 = vmatprep.subr.mxu0 0.0
    %561 = vmatpush1.msra.mxu0 0.0
    %562 = vmatprep.subr.mxu0 0.0
    %563 = vmatpush1.msra.mxu0 0.0
    %564 = vmatprep.mubr.f32.mxu0 0.0
    %v565 = vand.u32 %v44, 4294901760
    %566 = vmatmul.mubr.f32.gmra.mrb[0].mxu0 %v565
    %v567 = vpop.f32.mrb[0].mxu0
    %v568 = vadd.f32 %v487, %v567
    %v569 = vpop.f32.mrb[0].mxu0
    %570 = vmatprep.mubr.f32.mxu0 0.0
    %v571 = vand.u32 %v47, 4294901760
    %572 = vmatmul.mubr.f32.gmra.mrb[0].mxu0 %v571
    %v573 = vpop.f32.mrb[0].mxu0
    %v574 = vadd.f32 %v493, %v573
    %v575 = vpop.f32.mrb[0].mxu0
    %576 = vdwg.mxu0
    %v578 = vsel %vm42, %v21, 0
    %v581 = vsel %vm42, %v568, 0
    %583 = vmatprep.subr.mxu0 0.0
    %v584 = vand.u32 %v581, 4294901760
    %585 = vmatpush1.xpose.msra.mxu0 %v584
    %586 = vmatprep.subr.mxu0 0.0
    %587 = vmatpush1.xpose.msra.mxu0 0.0
    %588 = vmatprep.subr.mxu0 0.0
    %589 = vmatpush1.xpose.msra.mxu0 0.0
    %590 = vmatprep.subr.mxu0 0.0
    %591 = vmatpush1.xpose.msra.mxu0 0.0
    %592 = vmatprep.subr.mxu0 0.0
    %593 = vmatpush1.xpose.msra.mxu0 0.0
    %594 = vmatprep.subr.mxu0 0.0
    %595 = vmatpush1.xpose.msra.mxu0 0.0
    %596 = vmatprep.subr.mxu0 0.0
    %597 = vmatpush1.xpose.msra.mxu0 0.0
    %598 = vmatprep.subr.mxu0 0.0
    %599 = vmatpush1.xpose.msra.mxu0 0.0
    %600 = vmatprep.subr.mxu0 0.0
    %601 = vmatpush1.xpose.msra.mxu0 0.0
    %602 = vmatprep.subr.mxu0 0.0
    %603 = vmatpush1.xpose.msra.mxu0 0.0
    %604 = vmatprep.subr.mxu0 0.0
    %605 = vmatpush1.xpose.msra.mxu0 0.0
    %606 = vmatprep.subr.mxu0 0.0
    %607 = vmatpush1.xpose.msra.mxu0 0.0
    %608 = vmatprep.subr.mxu0 0.0
    %609 = vmatpush1.xpose.msra.mxu0 0.0
    %610 = vmatprep.subr.mxu0 0.0
    %611 = vmatpush1.xpose.msra.mxu0 0.0
    %612 = vmatprep.subr.mxu0 0.0
    %613 = vmatpush1.xpose.msra.mxu0 0.0
    %614 = vmatprep.subr.mxu0 0.0
    %615 = vmatpush1.xpose.msra.mxu0 0.0
    %616 = vmatprep.subr.mxu0 0.0
    %617 = vmatpush1.xpose.msra.mxu0 0.0
    %618 = vmatprep.subr.mxu0 0.0
    %619 = vmatpush1.xpose.msra.mxu0 0.0
    %620 = vmatprep.subr.mxu0 0.0
    %621 = vmatpush1.xpose.msra.mxu0 0.0
    %622 = vmatprep.subr.mxu0 0.0
    %623 = vmatpush1.xpose.msra.mxu0 0.0
    %624 = vmatprep.subr.mxu0 0.0
    %625 = vmatpush1.xpose.msra.mxu0 0.0
    %626 = vmatprep.subr.mxu0 0.0
    %627 = vmatpush1.xpose.msra.mxu0 0.0
    %628 = vmatprep.subr.mxu0 0.0
    %629 = vmatpush1.xpose.msra.mxu0 0.0
    %630 = vmatprep.subr.mxu0 0.0
    %631 = vmatpush1.xpose.msra.mxu0 0.0
    %632 = vmatprep.subr.mxu0 0.0
    %633 = vmatpush1.xpose.msra.mxu0 0.0
    %634 = vmatprep.subr.mxu0 0.0
    %635 = vmatpush1.xpose.msra.mxu0 0.0
    %636 = vmatprep.subr.mxu0 0.0
    %637 = vmatpush1.xpose.msra.mxu0 0.0
    %638 = vmatprep.subr.mxu0 0.0
    %639 = vmatpush1.xpose.msra.mxu0 0.0
    %640 = vmatprep.subr.mxu0 0.0
    %641 = vmatpush1.xpose.msra.mxu0 0.0
    %642 = vmatprep.subr.mxu0 0.0
    %643 = vmatpush1.xpose.msra.mxu0 0.0
    %644 = vmatprep.subr.mxu0 0.0
    %645 = vmatpush1.xpose.msra.mxu0 0.0
    %646 = vmatprep.subr.mxu0 0.0
    %647 = vmatpush1.xpose.msra.mxu0 0.0
    %648 = vmatprep.mubr.f32.mxu0 0.0
    %v649 = vand.u32 %v578, 4294901760
    %v650 = vsub.f32 %v578, %v649
    %v651 = vand.u32 %v650, 4294901760
    %v652 = vsub.f32 %v650, %v651
    %v653 = vand.u32 %v652, 4294901760
    %654 = vmatmul.mubr.f32.gmra.mrb[0].mxu0 %v653
    %v655 = vpop.f32.mrb[0].mxu0
    %v656 = vadd.f32 0.0, %v655
    %v657 = vpop.f32.mrb[0].mxu0
    %658 = vdwg.mxu0
    %659 = vmatprep.subr.mxu0 0.0
    %v660 = vand.u32 %v581, 4294901760
    %v661 = vsub.f32 %v581, %v660
    %v662 = vand.u32 %v661, 4294901760
    %v663 = vsub.f32 %v661, %v662
    %v664 = vand.u32 %v663, 4294901760
    %665 = vmatpush1.xpose.msra.mxu0 %v664
    %666 = vmatprep.subr.mxu0 0.0
    %667 = vmatpush1.xpose.msra.mxu0 0.0
    %668 = vmatprep.subr.mxu0 0.0
    %669 = vmatpush1.xpose.msra.mxu0 0.0
    %670 = vmatprep.subr.mxu0 0.0
    %671 = vmatpush1.xpose.msra.mxu0 0.0
    %672 = vmatprep.subr.mxu0 0.0
    %673 = vmatpush1.xpose.msra.mxu0 0.0
    %674 = vmatprep.subr.mxu0 0.0
    %675 = vmatpush1.xpose.msra.mxu0 0.0
    %676 = vmatprep.subr.mxu0 0.0
    %677 = vmatpush1.xpose.msra.mxu0 0.0
    %678 = vmatprep.subr.mxu0 0.0
    %679 = vmatpush1.xpose.msra.mxu0 0.0
    %680 = vmatprep.subr.mxu0 0.0
    %681 = vmatpush1.xpose.msra.mxu0 0.0
    %682 = vmatprep.subr.mxu0 0.0
    %683 = vmatpush1.xpose.msra.mxu0 0.0
    %684 = vmatprep.subr.mxu0 0.0
    %685 = vmatpush1.xpose.msra.mxu0 0.0
    %686 = vmatprep.subr.mxu0 0.0
    %687 = vmatpush1.xpose.msra.mxu0 0.0
    %688 = vmatprep.subr.mxu0 0.0
    %689 = vmatpush1.xpose.msra.mxu0 0.0
    %690 = vmatprep.subr.mxu0 0.0
    %691 = vmatpush1.xpose.msra.mxu0 0.0
    %692 = vmatprep.subr.mxu0 0.0
    %693 = vmatpush1.xpose.msra.mxu0 0.0
    %694 = vmatprep.subr.mxu0 0.0
    %695 = vmatpush1.xpose.msra.mxu0 0.0
    %696 = vmatprep.subr.mxu0 0.0
    %697 = vmatpush1.xpose.msra.mxu0 0.0
    %698 = vmatprep.subr.mxu0 0.0
    %699 = vmatpush1.xpose.msra.mxu0 0.0
    %700 = vmatprep.subr.mxu0 0.0
    %701 = vmatpush1.xpose.msra.mxu0 0.0
    %702 = vmatprep.subr.mxu0 0.0
    %703 = vmatpush1.xpose.msra.mxu0 0.0
    %704 = vmatprep.subr.mxu0 0.0
    %705 = vmatpush1.xpose.msra.mxu0 0.0
    %706 = vmatprep.subr.mxu0 0.0
    %707 = vmatpush1.xpose.msra.mxu0 0.0
    %708 = vmatprep.subr.mxu0 0.0
    %709 = vmatpush1.xpose.msra.mxu0 0.0
    %710 = vmatprep.subr.mxu0 0.0
    %711 = vmatpush1.xpose.msra.mxu0 0.0
    %712 = vmatprep.subr.mxu0 0.0
    %713 = vmatpush1.xpose.msra.mxu0 0.0
    %714 = vmatprep.subr.mxu0 0.0
    %715 = vmatpush1.xpose.msra.mxu0 0.0
    %716 = vmatprep.subr.mxu0 0.0
    %717 = vmatpush1.xpose.msra.mxu0 0.0
    %718 = vmatprep.subr.mxu0 0.0
    %719 = vmatpush1.xpose.msra.mxu0 0.0
    %720 = vmatprep.subr.mxu0 0.0
    %721 = vmatpush1.xpose.msra.mxu0 0.0
    %722 = vmatprep.subr.mxu0 0.0
    %723 = vmatpush1.xpose.msra.mxu0 0.0
    %724 = vmatprep.subr.mxu0 0.0
    %725 = vmatpush1.xpose.msra.mxu0 0.0
    %726 = vmatprep.subr.mxu0 0.0
    %727 = vmatpush1.xpose.msra.mxu0 0.0
    %728 = vmatprep.mubr.f32.mxu0 0.0
    %v729 = vand.u32 %v578, 4294901760
    %730 = vmatmul.mubr.f32.gmra.mrb[0].mxu0 %v729
    %v731 = vpop.f32.mrb[0].mxu0
    %v732 = vadd.f32 %v656, %v731
    %v733 = vpop.f32.mrb[0].mxu0
    %734 = vdwg.mxu0
    %735 = vmatprep.subr.mxu0 0.0
    %v736 = vand.u32 %v581, 4294901760
    %v737 = vsub.f32 %v581, %v736
    %738 = vmatpush1.xpose.msra.mxu0 %v737
    %739 = vmatprep.subr.mxu0 0.0
    %740 = vmatpush1.xpose.msra.mxu0 0.0
    %741 = vmatprep.subr.mxu0 0.0
    %742 = vmatpush1.xpose.msra.mxu0 0.0
    %743 = vmatprep.subr.mxu0 0.0
    %744 = vmatpush1.xpose.msra.mxu0 0.0
    %745 = vmatprep.subr.mxu0 0.0
    %746 = vmatpush1.xpose.msra.mxu0 0.0
    %747 = vmatprep.subr.mxu0 0.0
    %748 = vmatpush1.xpose.msra.mxu0 0.0
    %749 = vmatprep.subr.mxu0 0.0
    %750 = vmatpush1.xpose.msra.mxu0 0.0
    %751 = vmatprep.subr.mxu0 0.0
    %752 = vmatpush1.xpose.msra.mxu0 0.0
    %753 = vmatprep.subr.mxu0 0.0
    %754 = vmatpush1.xpose.msra.mxu0 0.0
    %755 = vmatprep.subr.mxu0 0.0
    %756 = vmatpush1.xpose.msra.mxu0 0.0
    %757 = vmatprep.subr.mxu0 0.0
    %758 = vmatpush1.xpose.msra.mxu0 0.0
    %759 = vmatprep.subr.mxu0 0.0
    %760 = vmatpush1.xpose.msra.mxu0 0.0
    %761 = vmatprep.subr.mxu0 0.0
    %762 = vmatpush1.xpose.msra.mxu0 0.0
    %763 = vmatprep.subr.mxu0 0.0
    %764 = vmatpush1.xpose.msra.mxu0 0.0
    %765 = vmatprep.subr.mxu0 0.0
    %766 = vmatpush1.xpose.msra.mxu0 0.0
    %767 = vmatprep.subr.mxu0 0.0
    %768 = vmatpush1.xpose.msra.mxu0 0.0
    %769 = vmatprep.subr.mxu0 0.0
    %770 = vmatpush1.xpose.msra.mxu0 0.0
    %771 = vmatprep.subr.mxu0 0.0
    %772 = vmatpush1.xpose.msra.mxu0 0.0
    %773 = vmatprep.subr.mxu0 0.0
    %774 = vmatpush1.xpose.msra.mxu0 0.0
    %775 = vmatprep.subr.mxu0 0.0
    %776 = vmatpush1.xpose.msra.mxu0 0.0
    %777 = vmatprep.subr.mxu0 0.0
    %778 = vmatpush1.xpose.msra.mxu0 0.0
    %779 = vmatprep.subr.mxu0 0.0
    %780 = vmatpush1.xpose.msra.mxu0 0.0
    %781 = vmatprep.subr.mxu0 0.0
    %782 = vmatpush1.xpose.msra.mxu0 0.0
    %783 = vmatprep.subr.mxu0 0.0
    %784 = vmatpush1.xpose.msra.mxu0 0.0
    %785 = vmatprep.subr.mxu0 0.0
    %786 = vmatpush1.xpose.msra.mxu0 0.0
    %787 = vmatprep.subr.mxu0 0.0
    %788 = vmatpush1.xpose.msra.mxu0 0.0
    %789 = vmatprep.subr.mxu0 0.0
    %790 = vmatpush1.xpose.msra.mxu0 0.0
    %791 = vmatprep.subr.mxu0 0.0
    %792 = vmatpush1.xpose.msra.mxu0 0.0
    %793 = vmatprep.subr.mxu0 0.0
    %794 = vmatpush1.xpose.msra.mxu0 0.0
    %795 = vmatprep.subr.mxu0 0.0
    %796 = vmatpush1.xpose.msra.mxu0 0.0
    %797 = vmatprep.subr.mxu0 0.0
    %798 = vmatpush1.xpose.msra.mxu0 0.0
    %799 = vmatprep.subr.mxu0 0.0
    %800 = vmatpush1.xpose.msra.mxu0 0.0
    %801 = vmatprep.mubr.f32.mxu0 0.0
    %v802 = vand.u32 %v578, 4294901760
    %v803 = vsub.f32 %v578, %v802
    %804 = vmatmul.mubr.f32.gmra.mrb[0].mxu0 %v803
    %v805 = vpop.f32.mrb[0].mxu0
    %v806 = vadd.f32 %v732, %v805
    %v807 = vpop.f32.mrb[0].mxu0
    %808 = vdwg.mxu0
    %809 = vmatprep.subr.mxu0 0.0
    %v810 = vand.u32 %v581, 4294901760
    %811 = vmatpush1.xpose.msra.mxu0 %v810
    %812 = vmatprep.subr.mxu0 0.0
    %813 = vmatpush1.xpose.msra.mxu0 0.0
    %814 = vmatprep.subr.mxu0 0.0
    %815 = vmatpush1.xpose.msra.mxu0 0.0
    %816 = vmatprep.subr.mxu0 0.0
    %817 = vmatpush1.xpose.msra.mxu0 0.0
    %818 = vmatprep.subr.mxu0 0.0
    %819 = vmatpush1.xpose.msra.mxu0 0.0
    %820 = vmatprep.subr.mxu0 0.0
    %821 = vmatpush1.xpose.msra.mxu0 0.0
    %822 = vmatprep.subr.mxu0 0.0
    %823 = vmatpush1.xpose.msra.mxu0 0.0
    %824 = vmatprep.subr.mxu0 0.0
    %825 = vmatpush1.xpose.msra.mxu0 0.0
    %826 = vmatprep.subr.mxu0 0.0
    %827 = vmatpush1.xpose.msra.mxu0 0.0
    %828 = vmatprep.subr.mxu0 0.0
    %829 = vmatpush1.xpose.msra.mxu0 0.0
    %830 = vmatprep.subr.mxu0 0.0
    %831 = vmatpush1.xpose.msra.mxu0 0.0
    %832 = vmatprep.subr.mxu0 0.0
    %833 = vmatpush1.xpose.msra.mxu0 0.0
    %834 = vmatprep.subr.mxu0 0.0
    %835 = vmatpush1.xpose.msra.mxu0 0.0
    %836 = vmatprep.subr.mxu0 0.0
    %837 = vmatpush1.xpose.msra.mxu0 0.0
    %838 = vmatprep.subr.mxu0 0.0
    %839 = vmatpush1.xpose.msra.mxu0 0.0
    %840 = vmatprep.subr.mxu0 0.0
    %841 = vmatpush1.xpose.msra.mxu0 0.0
    %842 = vmatprep.subr.mxu0 0.0
    %843 = vmatpush1.xpose.msra.mxu0 0.0
    %844 = vmatprep.subr.mxu0 0.0
    %845 = vmatpush1.xpose.msra.mxu0 0.0
    %846 = vmatprep.subr.mxu0 0.0
    %847 = vmatpush1.xpose.msra.mxu0 0.0
    %848 = vmatprep.subr.mxu0 0.0
    %849 = vmatpush1.xpose.msra.mxu0 0.0
    %850 = vmatprep.subr.mxu0 0.0
    %851 = vmatpush1.xpose.msra.mxu0 0.0
    %852 = vmatprep.subr.mxu0 0.0
    %853 = vmatpush1.xpose.msra.mxu0 0.0
    %854 = vmatprep.subr.mxu0 0.0
    %855 = vmatpush1.xpose.msra.mxu0 0.0
    %856 = vmatprep.subr.mxu0 0.0
    %857 = vmatpush1.xpose.msra.mxu0 0.0
    %858 = vmatprep.subr.mxu0 0.0
    %859 = vmatpush1.xpose.msra.mxu0 0.0
    %860 = vmatprep.subr.mxu0 0.0
    %861 = vmatpush1.xpose.msra.mxu0 0.0
    %862 = vmatprep.subr.mxu0 0.0
    %863 = vmatpush1.xpose.msra.mxu0 0.0
    %864 = vmatprep.subr.mxu0 0.0
    %865 = vmatpush1.xpose.msra.mxu0 0.0
    %866 = vmatprep.subr.mxu0 0.0
    %867 = vmatpush1.xpose.msra.mxu0 0.0
    %868 = vmatprep.subr.mxu0 0.0
    %869 = vmatpush1.xpose.msra.mxu0 0.0
    %870 = vmatprep.subr.mxu0 0.0
    %871 = vmatpush1.xpose.msra.mxu0 0.0
    %872 = vmatprep.subr.mxu0 0.0
    %873 = vmatpush1.xpose.msra.mxu0 0.0
    %874 = vmatprep.mubr.f32.mxu0 0.0
    %v875 = vand.u32 %v578, 4294901760
    %v876 = vsub.f32 %v578, %v875
    %v877 = vand.u32 %v876, 4294901760
    %878 = vmatmul.mubr.f32.gmra.mrb[0].mxu0 %v877
    %v879 = vpop.f32.mrb[0].mxu0
    %v880 = vadd.f32 %v806, %v879
    %v881 = vpop.f32.mrb[0].mxu0
    %882 = vdwg.mxu0
    %883 = vmatprep.subr.mxu0 0.0
    %v884 = vand.u32 %v581, 4294901760
    %v885 = vsub.f32 %v581, %v884
    %v886 = vand.u32 %v885, 4294901760
    %887 = vmatpush1.xpose.msra.mxu0 %v886
    %888 = vmatprep.subr.mxu0 0.0
    %889 = vmatpush1.xpose.msra.mxu0 0.0
    %890 = vmatprep.subr.mxu0 0.0
    %891 = vmatpush1.xpose.msra.mxu0 0.0
    %892 = vmatprep.subr.mxu0 0.0
    %893 = vmatpush1.xpose.msra.mxu0 0.0
    %894 = vmatprep.subr.mxu0 0.0
    %895 = vmatpush1.xpose.msra.mxu0 0.0
    %896 = vmatprep.subr.mxu0 0.0
    %897 = vmatpush1.xpose.msra.mxu0 0.0
    %898 = vmatprep.subr.mxu0 0.0
    %899 = vmatpush1.xpose.msra.mxu0 0.0
    %900 = vmatprep.subr.mxu0 0.0
    %901 = vmatpush1.xpose.msra.mxu0 0.0
    %902 = vmatprep.subr.mxu0 0.0
    %903 = vmatpush1.xpose.msra.mxu0 0.0
    %904 = vmatprep.subr.mxu0 0.0
    %905 = vmatpush1.xpose.msra.mxu0 0.0
    %906 = vmatprep.subr.mxu0 0.0
    %907 = vmatpush1.xpose.msra.mxu0 0.0
    %908 = vmatprep.subr.mxu0 0.0
    %909 = vmatpush1.xpose.msra.mxu0 0.0
    %910 = vmatprep.subr.mxu0 0.0
    %911 = vmatpush1.xpose.msra.mxu0 0.0
    %912 = vmatprep.subr.mxu0 0.0
    %913 = vmatpush1.xpose.msra.mxu0 0.0
    %914 = vmatprep.subr.mxu0 0.0
    %915 = vmatpush1.xpose.msra.mxu0 0.0
    %916 = vmatprep.subr.mxu0 0.0
    %917 = vmatpush1.xpose.msra.mxu0 0.0
    %918 = vmatprep.subr.mxu0 0.0
    %919 = vmatpush1.xpose.msra.mxu0 0.0
    %920 = vmatprep.subr.mxu0 0.0
    %921 = vmatpush1.xpose.msra.mxu0 0.0
    %922 = vmatprep.subr.mxu0 0.0
    %923 = vmatpush1.xpose.msra.mxu0 0.0
    %924 = vmatprep.subr.mxu0 0.0
    %925 = vmatpush1.xpose.msra.mxu0 0.0
    %926 = vmatprep.subr.mxu0 0.0
    %927 = vmatpush1.xpose.msra.mxu0 0.0
    %928 = vmatprep.subr.mxu0 0.0
    %929 = vmatpush1.xpose.msra.mxu0 0.0
    %930 = vmatprep.subr.mxu0 0.0
    %931 = vmatpush1.xpose.msra.mxu0 0.0
    %932 = vmatprep.subr.mxu0 0.0
    %933 = vmatpush1.xpose.msra.mxu0 0.0
    %934 = vmatprep.subr.mxu0 0.0
    %935 = vmatpush1.xpose.msra.mxu0 0.0
    %936 = vmatprep.subr.mxu0 0.0
    %937 = vmatpush1.xpose.msra.mxu0 0.0
    %938 = vmatprep.subr.mxu0 0.0
    %939 = vmatpush1.xpose.msra.mxu0 0.0
    %940 = vmatprep.subr.mxu0 0.0
    %941 = vmatpush1.xpose.msra.mxu0 0.0
    %942 = vmatprep.subr.mxu0 0.0
    %943 = vmatpush1.xpose.msra.mxu0 0.0
    %944 = vmatprep.subr.mxu0 0.0
    %945 = vmatpush1.xpose.msra.mxu0 0.0
    %946 = vmatprep.subr.mxu0 0.0
    %947 = vmatpush1.xpose.msra.mxu0 0.0
    %948 = vmatprep.subr.mxu0 0.0
    %949 = vmatpush1.xpose.msra.mxu0 0.0
    %950 = vmatprep.mubr.f32.mxu0 0.0
    %v951 = vand.u32 %v578, 4294901760
    %952 = vmatmul.mubr.f32.gmra.mrb[0].mxu0 %v951
    %v953 = vpop.f32.mrb[0].mxu0
    %v954 = vadd.f32 %v880, %v953
    %v955 = vpop.f32.mrb[0].mxu0
    %956 = vdwg.mxu0
    %957 = vmatprep.subr.mxu0 0.0
    %v958 = vand.u32 %v581, 4294901760
    %959 = vmatpush1.xpose.msra.mxu0 %v958
    %960 = vmatprep.subr.mxu0 0.0
    %961 = vmatpush1.xpose.msra.mxu0 0.0
    %962 = vmatprep.subr.mxu0 0.0
    %963 = vmatpush1.xpose.msra.mxu0 0.0
    %964 = vmatprep.subr.mxu0 0.0
    %965 = vmatpush1.xpose.msra.mxu0 0.0
    %966 = vmatprep.subr.mxu0 0.0
    %967 = vmatpush1.xpose.msra.mxu0 0.0
    %968 = vmatprep.subr.mxu0 0.0
    %969 = vmatpush1.xpose.msra.mxu0 0.0
    %970 = vmatprep.subr.mxu0 0.0
    %971 = vmatpush1.xpose.msra.mxu0 0.0
    %972 = vmatprep.subr.mxu0 0.0
    %973 = vmatpush1.xpose.msra.mxu0 0.0
    %974 = vmatprep.subr.mxu0 0.0
    %975 = vmatpush1.xpose.msra.mxu0 0.0
    %976 = vmatprep.subr.mxu0 0.0
    %977 = vmatpush1.xpose.msra.mxu0 0.0
    %978 = vmatprep.subr.mxu0 0.0
    %979 = vmatpush1.xpose.msra.mxu0 0.0
    %980 = vmatprep.subr.mxu0 0.0
    %981 = vmatpush1.xpose.msra.mxu0 0.0
    %982 = vmatprep.subr.mxu0 0.0
    %983 = vmatpush1.xpose.msra.mxu0 0.0
    %984 = vmatprep.subr.mxu0 0.0
    %985 = vmatpush1.xpose.msra.mxu0 0.0
    %986 = vmatprep.subr.mxu0 0.0
    %987 = vmatpush1.xpose.msra.mxu0 0.0
    %988 = vmatprep.subr.mxu0 0.0
    %989 = vmatpush1.xpose.msra.mxu0 0.0
    %990 = vmatprep.subr.mxu0 0.0
    %991 = vmatpush1.xpose.msra.mxu0 0.0
    %992 = vmatprep.subr.mxu0 0.0
    %993 = vmatpush1.xpose.msra.mxu0 0.0
    %994 = vmatprep.subr.mxu0 0.0
    %995 = vmatpush1.xpose.msra.mxu0 0.0
    %996 = vmatprep.subr.mxu0 0.0
    %997 = vmatpush1.xpose.msra.mxu0 0.0
    %998 = vmatprep.subr.mxu0 0.0
    %999 = vmatpush1.xpose.msra.mxu0 0.0
    %1000 = vmatprep.subr.mxu0 0.0
    %1001 = vmatpush1.xpose.msra.mxu0 0.0
    %1002 = vmatprep.subr.mxu0 0.0
    %1003 = vmatpush1.xpose.msra.mxu0 0.0
    %1004 = vmatprep.subr.mxu0 0.0
    %1005 = vmatpush1.xpose.msra.mxu0 0.0
    %1006 = vmatprep.subr.mxu0 0.0
    %1007 = vmatpush1.xpose.msra.mxu0 0.0
    %1008 = vmatprep.subr.mxu0 0.0
    %1009 = vmatpush1.xpose.msra.mxu0 0.0
    %1010 = vmatprep.subr.mxu0 0.0
    %1011 = vmatpush1.xpose.msra.mxu0 0.0
    %1012 = vmatprep.subr.mxu0 0.0
    %1013 = vmatpush1.xpose.msra.mxu0 0.0
    %1014 = vmatprep.subr.mxu0 0.0
    %1015 = vmatpush1.xpose.msra.mxu0 0.0
    %1016 = vmatprep.subr.mxu0 0.0
    %1017 = vmatpush1.xpose.msra.mxu0 0.0
    %1018 = vmatprep.subr.mxu0 0.0
    %1019 = vmatpush1.xpose.msra.mxu0 0.0
    %1020 = vmatprep.subr.mxu0 0.0
    %1021 = vmatpush1.xpose.msra.mxu0 0.0
    %1022 = vmatprep.mubr.f32.mxu0 0.0
    %v1023 = vand.u32 %v578, 4294901760
    %1024 = vmatmul.mubr.f32.gmra.mrb[0].mxu0 %v1023
    %v1025 = vpop.f32.mrb[0].mxu0
    %v1026 = vadd.f32 %v954, %v1025
    %v1027 = vpop.f32.mrb[0].mxu0
    %1028 = vdwg.mxu0
    %v1030 = vsel %vm42, %v22, 0
    %v1033 = vsel %vm42, %v574, 0
    %1035 = vmatprep.subr.mxu0 0.0
    %v1036 = vand.u32 %v1033, 4294901760
    %1037 = vmatpush1.xpose.msra.mxu0 %v1036
    %1038 = vmatprep.subr.mxu0 0.0
    %1039 = vmatpush1.xpose.msra.mxu0 0.0
    %1040 = vmatprep.subr.mxu0 0.0
    %1041 = vmatpush1.xpose.msra.mxu0 0.0
    %1042 = vmatprep.subr.mxu0 0.0
    %1043 = vmatpush1.xpose.msra.mxu0 0.0
    %1044 = vmatprep.subr.mxu0 0.0
    %1045 = vmatpush1.xpose.msra.mxu0 0.0
    %1046 = vmatprep.subr.mxu0 0.0
    %1047 = vmatpush1.xpose.msra.mxu0 0.0
    %1048 = vmatprep.subr.mxu0 0.0
    %1049 = vmatpush1.xpose.msra.mxu0 0.0
    %1050 = vmatprep.subr.mxu0 0.0
    %1051 = vmatpush1.xpose.msra.mxu0 0.0
    %1052 = vmatprep.subr.mxu0 0.0
    %1053 = vmatpush1.xpose.msra.mxu0 0.0
    %1054 = vmatprep.subr.mxu0 0.0
    %1055 = vmatpush1.xpose.msra.mxu0 0.0
    %1056 = vmatprep.subr.mxu0 0.0
    %1057 = vmatpush1.xpose.msra.mxu0 0.0
    %1058 = vmatprep.subr.mxu0 0.0
    %1059 = vmatpush1.xpose.msra.mxu0 0.0
    %1060 = vmatprep.subr.mxu0 0.0
    %1061 = vmatpush1.xpose.msra.mxu0 0.0
    %1062 = vmatprep.subr.mxu0 0.0
    %1063 = vmatpush1.xpose.msra.mxu0 0.0
    %1064 = vmatprep.subr.mxu0 0.0
    %1065 = vmatpush1.xpose.msra.mxu0 0.0
    %1066 = vmatprep.subr.mxu0 0.0
    %1067 = vmatpush1.xpose.msra.mxu0 0.0
    %1068 = vmatprep.subr.mxu0 0.0
    %1069 = vmatpush1.xpose.msra.mxu0 0.0
    %1070 = vmatprep.subr.mxu0 0.0
    %1071 = vmatpush1.xpose.msra.mxu0 0.0
    %1072 = vmatprep.subr.mxu0 0.0
    %1073 = vmatpush1.xpose.msra.mxu0 0.0
    %1074 = vmatprep.subr.mxu0 0.0
    %1075 = vmatpush1.xpose.msra.mxu0 0.0
    %1076 = vmatprep.subr.mxu0 0.0
    %1077 = vmatpush1.xpose.msra.mxu0 0.0
    %1078 = vmatprep.subr.mxu0 0.0
    %1079 = vmatpush1.xpose.msra.mxu0 0.0
    %1080 = vmatprep.subr.mxu0 0.0
    %1081 = vmatpush1.xpose.msra.mxu0 0.0
    %1082 = vmatprep.subr.mxu0 0.0
    %1083 = vmatpush1.xpose.msra.mxu0 0.0
    %1084 = vmatprep.subr.mxu0 0.0
    %1085 = vmatpush1.xpose.msra.mxu0 0.0
    %1086 = vmatprep.subr.mxu0 0.0
    %1087 = vmatpush1.xpose.msra.mxu0 0.0
    %1088 = vmatprep.subr.mxu0 0.0
    %1089 = vmatpush1.xpose.msra.mxu0 0.0
    %1090 = vmatprep.subr.mxu0 0.0
    %1091 = vmatpush1.xpose.msra.mxu0 0.0
    %1092 = vmatprep.subr.mxu0 0.0
    %1093 = vmatpush1.xpose.msra.mxu0 0.0
    %1094 = vmatprep.subr.mxu0 0.0
    %1095 = vmatpush1.xpose.msra.mxu0 0.0
    %1096 = vmatprep.subr.mxu0 0.0
    %1097 = vmatpush1.xpose.msra.mxu0 0.0
    %1098 = vmatprep.subr.mxu0 0.0
    %1099 = vmatpush1.xpose.msra.mxu0 0.0
    %1100 = vmatprep.mubr.f32.mxu0 0.0
    %v1101 = vand.u32 %v1030, 4294901760
    %v1102 = vsub.f32 %v1030, %v1101
    %v1103 = vand.u32 %v1102, 4294901760
    %v1104 = vsub.f32 %v1102, %v1103
    %v1105 = vand.u32 %v1104, 4294901760
    %1106 = vmatmul.mubr.f32.gmra.mrb[0].mxu0 %v1105
    %v1107 = vpop.f32.mrb[0].mxu0
    %v1108 = vadd.f32 0.0, %v1107
    %v1109 = vpop.f32.mrb[0].mxu0
    %1110 = vdwg.mxu0
    %1111 = vmatprep.subr.mxu0 0.0
    %v1112 = vand.u32 %v1033, 4294901760
    %v1113 = vsub.f32 %v1033, %v1112
    %v1114 = vand.u32 %v1113, 4294901760
    %v1115 = vsub.f32 %v1113, %v1114
    %v1116 = vand.u32 %v1115, 4294901760
    %1117 = vmatpush1.xpose.msra.mxu0 %v1116
    %1118 = vmatprep.subr.mxu0 0.0
    %1119 = vmatpush1.xpose.msra.mxu0 0.0
    %1120 = vmatprep.subr.mxu0 0.0
    %1121 = vmatpush1.xpose.msra.mxu0 0.0
    %1122 = vmatprep.subr.mxu0 0.0
    %1123 = vmatpush1.xpose.msra.mxu0 0.0
    %1124 = vmatprep.subr.mxu0 0.0
    %1125 = vmatpush1.xpose.msra.mxu0 0.0
    %1126 = vmatprep.subr.mxu0 0.0
    %1127 = vmatpush1.xpose.msra.mxu0 0.0
    %1128 = vmatprep.subr.mxu0 0.0
    %1129 = vmatpush1.xpose.msra.mxu0 0.0
    %1130 = vmatprep.subr.mxu0 0.0
    %1131 = vmatpush1.xpose.msra.mxu0 0.0
    %1132 = vmatprep.subr.mxu0 0.0
    %1133 = vmatpush1.xpose.msra.mxu0 0.0
    %1134 = vmatprep.subr.mxu0 0.0
    %1135 = vmatpush1.xpose.msra.mxu0 0.0
    %1136 = vmatprep.subr.mxu0 0.0
    %1137 = vmatpush1.xpose.msra.mxu0 0.0
    %1138 = vmatprep.subr.mxu0 0.0
    %1139 = vmatpush1.xpose.msra.mxu0 0.0
    %1140 = vmatprep.subr.mxu0 0.0
    %1141 = vmatpush1.xpose.msra.mxu0 0.0
    %1142 = vmatprep.subr.mxu0 0.0
    %1143 = vmatpush1.xpose.msra.mxu0 0.0
    %1144 = vmatprep.subr.mxu0 0.0
    %1145 = vmatpush1.xpose.msra.mxu0 0.0
    %1146 = vmatprep.subr.mxu0 0.0
    %1147 = vmatpush1.xpose.msra.mxu0 0.0
    %1148 = vmatprep.subr.mxu0 0.0
    %1149 = vmatpush1.xpose.msra.mxu0 0.0
    %1150 = vmatprep.subr.mxu0 0.0
    %1151 = vmatpush1.xpose.msra.mxu0 0.0
    %1152 = vmatprep.subr.mxu0 0.0
    %1153 = vmatpush1.xpose.msra.mxu0 0.0
    %1154 = vmatprep.subr.mxu0 0.0
    %1155 = vmatpush1.xpose.msra.mxu0 0.0
    %1156 = vmatprep.subr.mxu0 0.0
    %1157 = vmatpush1.xpose.msra.mxu0 0.0
    %1158 = vmatprep.subr.mxu0 0.0
    %1159 = vmatpush1.xpose.msra.mxu0 0.0
    %1160 = vmatprep.subr.mxu0 0.0
    %1161 = vmatpush1.xpose.msra.mxu0 0.0
    %1162 = vmatprep.subr.mxu0 0.0
    %1163 = vmatpush1.xpose.msra.mxu0 0.0
    %1164 = vmatprep.subr.mxu0 0.0
    %1165 = vmatpush1.xpose.msra.mxu0 0.0
    %1166 = vmatprep.subr.mxu0 0.0
    %1167 = vmatpush1.xpose.msra.mxu0 0.0
    %1168 = vmatprep.subr.mxu0 0.0
    %1169 = vmatpush1.xpose.msra.mxu0 0.0
    %1170 = vmatprep.subr.mxu0 0.0
    %1171 = vmatpush1.xpose.msra.mxu0 0.0
    %1172 = vmatprep.subr.mxu0 0.0
    %1173 = vmatpush1.xpose.msra.mxu0 0.0
    %1174 = vmatprep.subr.mxu0 0.0
    %1175 = vmatpush1.xpose.msra.mxu0 0.0
    %1176 = vmatprep.subr.mxu0 0.0
    %1177 = vmatpush1.xpose.msra.mxu0 0.0
    %1178 = vmatprep.subr.mxu0 0.0
    %1179 = vmatpush1.xpose.msra.mxu0 0.0
    %1180 = vmatprep.mubr.f32.mxu0 0.0
    %v1181 = vand.u32 %v1030, 4294901760
    %1182 = vmatmul.mubr.f32.gmra.mrb[0].mxu0 %v1181
    %v1183 = vpop.f32.mrb[0].mxu0
    %v1184 = vadd.f32 %v1108, %v1183
    %v1185 = vpop.f32.mrb[0].mxu0
    %1186 = vdwg.mxu0
    %1187 = vmatprep.subr.mxu0 0.0
    %v1188 = vand.u32 %v1033, 4294901760
    %v1189 = vsub.f32 %v1033, %v1188
    %1190 = vmatpush1.xpose.msra.mxu0 %v1189
    %1191 = vmatprep.subr.mxu0 0.0
    %1192 = vmatpush1.xpose.msra.mxu0 0.0
    %1193 = vmatprep.subr.mxu0 0.0
    %1194 = vmatpush1.xpose.msra.mxu0 0.0
    %1195 = vmatprep.subr.mxu0 0.0
    %1196 = vmatpush1.xpose.msra.mxu0 0.0
    %1197 = vmatprep.subr.mxu0 0.0
    %1198 = vmatpush1.xpose.msra.mxu0 0.0
    %1199 = vmatprep.subr.mxu0 0.0
    %1200 = vmatpush1.xpose.msra.mxu0 0.0
    %1201 = vmatprep.subr.mxu0 0.0
    %1202 = vmatpush1.xpose.msra.mxu0 0.0
    %1203 = vmatprep.subr.mxu0 0.0
    %1204 = vmatpush1.xpose.msra.mxu0 0.0
    %1205 = vmatprep.subr.mxu0 0.0
    %1206 = vmatpush1.xpose.msra.mxu0 0.0
    %1207 = vmatprep.subr.mxu0 0.0
    %1208 = vmatpush1.xpose.msra.mxu0 0.0
    %1209 = vmatprep.subr.mxu0 0.0
    %1210 = vmatpush1.xpose.msra.mxu0 0.0
    %1211 = vmatprep.subr.mxu0 0.0
    %1212 = vmatpush1.xpose.msra.mxu0 0.0
    %1213 = vmatprep.subr.mxu0 0.0
    %1214 = vmatpush1.xpose.msra.mxu0 0.0
    %1215 = vmatprep.subr.mxu0 0.0
    %1216 = vmatpush1.xpose.msra.mxu0 0.0
    %1217 = vmatprep.subr.mxu0 0.0
    %1218 = vmatpush1.xpose.msra.mxu0 0.0
    %1219 = vmatprep.subr.mxu0 0.0
    %1220 = vmatpush1.xpose.msra.mxu0 0.0
    %1221 = vmatprep.subr.mxu0 0.0
    %1222 = vmatpush1.xpose.msra.mxu0 0.0
    %1223 = vmatprep.subr.mxu0 0.0
    %1224 = vmatpush1.xpose.msra.mxu0 0.0
    %1225 = vmatprep.subr.mxu0 0.0
    %1226 = vmatpush1.xpose.msra.mxu0 0.0
    %1227 = vmatprep.subr.mxu0 0.0
    %1228 = vmatpush1.xpose.msra.mxu0 0.0
    %1229 = vmatprep.subr.mxu0 0.0
    %1230 = vmatpush1.xpose.msra.mxu0 0.0
    %1231 = vmatprep.subr.mxu0 0.0
    %1232 = vmatpush1.xpose.msra.mxu0 0.0
    %1233 = vmatprep.subr.mxu0 0.0
    %1234 = vmatpush1.xpose.msra.mxu0 0.0
    %1235 = vmatprep.subr.mxu0 0.0
    %1236 = vmatpush1.xpose.msra.mxu0 0.0
    %1237 = vmatprep.subr.mxu0 0.0
    %1238 = vmatpush1.xpose.msra.mxu0 0.0
    %1239 = vmatprep.subr.mxu0 0.0
    %1240 = vmatpush1.xpose.msra.mxu0 0.0
    %1241 = vmatprep.subr.mxu0 0.0
    %1242 = vmatpush1.xpose.msra.mxu0 0.0
    %1243 = vmatprep.subr.mxu0 0.0
    %1244 = vmatpush1.xpose.msra.mxu0 0.0
    %1245 = vmatprep.subr.mxu0 0.0
    %1246 = vmatpush1.xpose.msra.mxu0 0.0
    %1247 = vmatprep.subr.mxu0 0.0
    %1248 = vmatpush1.xpose.msra.mxu0 0.0
    %1249 = vmatprep.subr.mxu0 0.0
    %1250 = vmatpush1.xpose.msra.mxu0 0.0
    %1251 = vmatprep.subr.mxu0 0.0
    %1252 = vmatpush1.xpose.msra.mxu0 0.0
    %1253 = vmatprep.mubr.f32.mxu0 0.0
    %v1254 = vand.u32 %v1030, 4294901760
    %v1255 = vsub.f32 %v1030, %v1254
    %1256 = vmatmul.mubr.f32.gmra.mrb[0].mxu0 %v1255
    %v1257 = vpop.f32.mrb[0].mxu0
    %v1258 = vadd.f32 %v1184, %v1257
    %v1259 = vpop.f32.mrb[0].mxu0
    %1260 = vdwg.mxu0
    %1261 = vmatprep.subr.mxu0 0.0
    %v1262 = vand.u32 %v1033, 4294901760
    %1263 = vmatpush1.xpose.msra.mxu0 %v1262
    %1264 = vmatprep.subr.mxu0 0.0
    %1265 = vmatpush1.xpose.msra.mxu0 0.0
    %1266 = vmatprep.subr.mxu0 0.0
    %1267 = vmatpush1.xpose.msra.mxu0 0.0
    %1268 = vmatprep.subr.mxu0 0.0
    %1269 = vmatpush1.xpose.msra.mxu0 0.0
    %1270 = vmatprep.subr.mxu0 0.0
    %1271 = vmatpush1.xpose.msra.mxu0 0.0
    %1272 = vmatprep.subr.mxu0 0.0
    %1273 = vmatpush1.xpose.msra.mxu0 0.0
    %1274 = vmatprep.subr.mxu0 0.0
    %1275 = vmatpush1.xpose.msra.mxu0 0.0
    %1276 = vmatprep.subr.mxu0 0.0
    %1277 = vmatpush1.xpose.msra.mxu0 0.0
    %1278 = vmatprep.subr.mxu0 0.0
    %1279 = vmatpush1.xpose.msra.mxu0 0.0
    %1280 = vmatprep.subr.mxu0 0.0
    %1281 = vmatpush1.xpose.msra.mxu0 0.0
    %1282 = vmatprep.subr.mxu0 0.0
    %1283 = vmatpush1.xpose.msra.mxu0 0.0
    %1284 = vmatprep.subr.mxu0 0.0
    %1285 = vmatpush1.xpose.msra.mxu0 0.0
    %1286 = vmatprep.subr.mxu0 0.0
    %1287 = vmatpush1.xpose.msra.mxu0 0.0
    %1288 = vmatprep.subr.mxu0 0.0
    %1289 = vmatpush1.xpose.msra.mxu0 0.0
    %1290 = vmatprep.subr.mxu0 0.0
    %1291 = vmatpush1.xpose.msra.mxu0 0.0
    %1292 = vmatprep.subr.mxu0 0.0
    %1293 = vmatpush1.xpose.msra.mxu0 0.0
    %1294 = vmatprep.subr.mxu0 0.0
    %1295 = vmatpush1.xpose.msra.mxu0 0.0
    %1296 = vmatprep.subr.mxu0 0.0
    %1297 = vmatpush1.xpose.msra.mxu0 0.0
    %1298 = vmatprep.subr.mxu0 0.0
    %1299 = vmatpush1.xpose.msra.mxu0 0.0
    %1300 = vmatprep.subr.mxu0 0.0
    %1301 = vmatpush1.xpose.msra.mxu0 0.0
    %1302 = vmatprep.subr.mxu0 0.0
    %1303 = vmatpush1.xpose.msra.mxu0 0.0
    %1304 = vmatprep.subr.mxu0 0.0
    %1305 = vmatpush1.xpose.msra.mxu0 0.0
    %1306 = vmatprep.subr.mxu0 0.0
    %1307 = vmatpush1.xpose.msra.mxu0 0.0
    %1308 = vmatprep.subr.mxu0 0.0
    %1309 = vmatpush1.xpose.msra.mxu0 0.0
    %1310 = vmatprep.subr.mxu0 0.0
    %1311 = vmatpush1.xpose.msra.mxu0 0.0
    %1312 = vmatprep.subr.mxu0 0.0
    %1313 = vmatpush1.xpose.msra.mxu0 0.0
    %1314 = vmatprep.subr.mxu0 0.0
    %1315 = vmatpush1.xpose.msra.mxu0 0.0
    %1316 = vmatprep.subr.mxu0 0.0
    %1317 = vmatpush1.xpose.msra.mxu0 0.0
    %1318 = vmatprep.subr.mxu0 0.0
    %1319 = vmatpush1.xpose.msra.mxu0 0.0
    %1320 = vmatprep.subr.mxu0 0.0
    %1321 = vmatpush1.xpose.msra.mxu0 0.0
    %1322 = vmatprep.subr.mxu0 0.0
    %1323 = vmatpush1.xpose.msra.mxu0 0.0
    %1324 = vmatprep.subr.mxu0 0.0
    %1325 = vmatpush1.xpose.msra.mxu0 0.0
    %1326 = vmatprep.mubr.f32.mxu0 0.0
    %v1327 = vand.u32 %v1030, 4294901760
    %v1328 = vsub.f32 %v1030, %v1327
    %v1329 = vand.u32 %v1328, 4294901760
    %1330 = vmatmul.mubr.f32.gmra.mrb[0].mxu0 %v1329
    %v1331 = vpop.f32.mrb[0].mxu0
    %v1332 = vadd.f32 %v1258, %v1331
    %v1333 = vpop.f32.mrb[0].mxu0
    %1334 = vdwg.mxu0
    %1335 = vmatprep.subr.mxu0 0.0
    %v1336 = vand.u32 %v1033, 4294901760
    %v1337 = vsub.f32 %v1033, %v1336
    %v1338 = vand.u32 %v1337, 4294901760
    %1339 = vmatpush1.xpose.msra.mxu0 %v1338
    %1340 = vmatprep.subr.mxu0 0.0
    %1341 = vmatpush1.xpose.msra.mxu0 0.0
    %1342 = vmatprep.subr.mxu0 0.0
    %1343 = vmatpush1.xpose.msra.mxu0 0.0
    %1344 = vmatprep.subr.mxu0 0.0
    %1345 = vmatpush1.xpose.msra.mxu0 0.0
    %1346 = vmatprep.subr.mxu0 0.0
    %1347 = vmatpush1.xpose.msra.mxu0 0.0
    %1348 = vmatprep.subr.mxu0 0.0
    %1349 = vmatpush1.xpose.msra.mxu0 0.0
    %1350 = vmatprep.subr.mxu0 0.0
    %1351 = vmatpush1.xpose.msra.mxu0 0.0
    %1352 = vmatprep.subr.mxu0 0.0
    %1353 = vmatpush1.xpose.msra.mxu0 0.0
    %1354 = vmatprep.subr.mxu0 0.0
    %1355 = vmatpush1.xpose.msra.mxu0 0.0
    %1356 = vmatprep.subr.mxu0 0.0
    %1357 = vmatpush1.xpose.msra.mxu0 0.0
    %1358 = vmatprep.subr.mxu0 0.0
    %1359 = vmatpush1.xpose.msra.mxu0 0.0
    %1360 = vmatprep.subr.mxu0 0.0
    %1361 = vmatpush1.xpose.msra.mxu0 0.0
    %1362 = vmatprep.subr.mxu0 0.0
    %1363 = vmatpush1.xpose.msra.mxu0 0.0
    %1364 = vmatprep.subr.mxu0 0.0
    %1365 = vmatpush1.xpose.msra.mxu0 0.0
    %1366 = vmatprep.subr.mxu0 0.0
    %1367 = vmatpush1.xpose.msra.mxu0 0.0
    %1368 = vmatprep.subr.mxu0 0.0
    %1369 = vmatpush1.xpose.msra.mxu0 0.0
    %1370 = vmatprep.subr.mxu0 0.0
    %1371 = vmatpush1.xpose.msra.mxu0 0.0
    %1372 = vmatprep.subr.mxu0 0.0
    %1373 = vmatpush1.xpose.msra.mxu0 0.0
    %1374 = vmatprep.subr.mxu0 0.0
    %1375 = vmatpush1.xpose.msra.mxu0 0.0
    %1376 = vmatprep.subr.mxu0 0.0
    %1377 = vmatpush1.xpose.msra.mxu0 0.0
    %1378 = vmatprep.subr.mxu0 0.0
    %1379 = vmatpush1.xpose.msra.mxu0 0.0
    %1380 = vmatprep.subr.mxu0 0.0
    %1381 = vmatpush1.xpose.msra.mxu0 0.0
    %1382 = vmatprep.subr.mxu0 0.0
    %1383 = vmatpush1.xpose.msra.mxu0 0.0
    %1384 = vmatprep.subr.mxu0 0.0
    %1385 = vmatpush1.xpose.msra.mxu0 0.0
    %1386 = vmatprep.subr.mxu0 0.0
    %1387 = vmatpush1.xpose.msra.mxu0 0.0
    %1388 = vmatprep.subr.mxu0 0.0
    %1389 = vmatpush1.xpose.msra.mxu0 0.0
    %1390 = vmatprep.subr.mxu0 0.0
    %1391 = vmatpush1.xpose.msra.mxu0 0.0
    %1392 = vmatprep.subr.mxu0 0.0
    %1393 = vmatpush1.xpose.msra.mxu0 0.0
    %1394 = vmatprep.subr.mxu0 0.0
    %1395 = vmatpush1.xpose.msra.mxu0 0.0
    %1396 = vmatprep.subr.mxu0 0.0
    %1397 = vmatpush1.xpose.msra.mxu0 0.0
    %1398 = vmatprep.subr.mxu0 0.0
    %1399 = vmatpush1.xpose.msra.mxu0 0.0
    %1400 = vmatprep.subr.mxu0 0.0
    %1401 = vmatpush1.xpose.msra.mxu0 0.0
    %1402 = vmatprep.mubr.f32.mxu0 0.0
    %v1403 = vand.u32 %v1030, 4294901760
    %1404 = vmatmul.mubr.f32.gmra.mrb[0].mxu0 %v1403
    %v1405 = vpop.f32.mrb[0].mxu0
    %v1406 = vadd.f32 %v1332, %v1405
    %v1407 = vpop.f32.mrb[0].mxu0
    %1408 = vdwg.mxu0
    %1409 = vmatprep.subr.mxu0 0.0
    %v1410 = vand.u32 %v1033, 4294901760
    %1411 = vmatpush1.xpose.msra.mxu0 %v1410
    %1412 = vmatprep.subr.mxu0 0.0
    %1413 = vmatpush1.xpose.msra.mxu0 0.0
    %1414 = vmatprep.subr.mxu0 0.0
    %1415 = vmatpush1.xpose.msra.mxu0 0.0
    %1416 = vmatprep.subr.mxu0 0.0
    %1417 = vmatpush1.xpose.msra.mxu0 0.0
    %1418 = vmatprep.subr.mxu0 0.0
    %1419 = vmatpush1.xpose.msra.mxu0 0.0
    %1420 = vmatprep.subr.mxu0 0.0
    %1421 = vmatpush1.xpose.msra.mxu0 0.0
    %1422 = vmatprep.subr.mxu0 0.0
    %1423 = vmatpush1.xpose.msra.mxu0 0.0
    %1424 = vmatprep.subr.mxu0 0.0
    %1425 = vmatpush1.xpose.msra.mxu0 0.0
    %1426 = vmatprep.subr.mxu0 0.0
    %1427 = vmatpush1.xpose.msra.mxu0 0.0
    %1428 = vmatprep.subr.mxu0 0.0
    %1429 = vmatpush1.xpose.msra.mxu0 0.0
    %1430 = vmatprep.subr.mxu0 0.0
    %1431 = vmatpush1.xpose.msra.mxu0 0.0
    %1432 = vmatprep.subr.mxu0 0.0
    %1433 = vmatpush1.xpose.msra.mxu0 0.0
    %1434 = vmatprep.subr.mxu0 0.0
    %1435 = vmatpush1.xpose.msra.mxu0 0.0
    %1436 = vmatprep.subr.mxu0 0.0
    %1437 = vmatpush1.xpose.msra.mxu0 0.0
    %1438 = vmatprep.subr.mxu0 0.0
    %1439 = vmatpush1.xpose.msra.mxu0 0.0
    %1440 = vmatprep.subr.mxu0 0.0
    %1441 = vmatpush1.xpose.msra.mxu0 0.0
    %1442 = vmatprep.subr.mxu0 0.0
    %1443 = vmatpush1.xpose.msra.mxu0 0.0
    %1444 = vmatprep.subr.mxu0 0.0
    %1445 = vmatpush1.xpose.msra.mxu0 0.0
    %1446 = vmatprep.subr.mxu0 0.0
    %1447 = vmatpush1.xpose.msra.mxu0 0.0
    %1448 = vmatprep.subr.mxu0 0.0
    %1449 = vmatpush1.xpose.msra.mxu0 0.0
    %1450 = vmatprep.subr.mxu0 0.0
    %1451 = vmatpush1.xpose.msra.mxu0 0.0
    %1452 = vmatprep.subr.mxu0 0.0
    %1453 = vmatpush1.xpose.msra.mxu0 0.0
    %1454 = vmatprep.subr.mxu0 0.0
    %1455 = vmatpush1.xpose.msra.mxu0 0.0
    %1456 = vmatprep.subr.mxu0 0.0
    %1457 = vmatpush1.xpose.msra.mxu0 0.0
    %1458 = vmatprep.subr.mxu0 0.0
    %1459 = vmatpush1.xpose.msra.mxu0 0.0
    %1460 = vmatprep.subr.mxu0 0.0
    %1461 = vmatpush1.xpose.msra.mxu0 0.0
    %1462 = vmatprep.subr.mxu0 0.0
    %1463 = vmatpush1.xpose.msra.mxu0 0.0
    %1464 = vmatprep.subr.mxu0 0.0
    %1465 = vmatpush1.xpose.msra.mxu0 0.0
    %1466 = vmatprep.subr.mxu0 0.0
    %1467 = vmatpush1.xpose.msra.mxu0 0.0
    %1468 = vmatprep.subr.mxu0 0.0
    %1469 = vmatpush1.xpose.msra.mxu0 0.0
    %1470 = vmatprep.subr.mxu0 0.0
    %1471 = vmatpush1.xpose.msra.mxu0 0.0
    %1472 = vmatprep.subr.mxu0 0.0
    %1473 = vmatpush1.xpose.msra.mxu0 0.0
    %1474 = vmatprep.mubr.f32.mxu0 0.0
    %v1475 = vand.u32 %v1030, 4294901760
    %1476 = vmatmul.mubr.f32.gmra.mrb[0].mxu0 %v1475
    %v1477 = vpop.f32.mrb[0].mxu0
    %v1478 = vadd.f32 %v1406, %v1477
    %v1479 = vpop.f32.mrb[0].mxu0
    %1480 = vdwg.mxu0
    %v1481 = vld [vmem:[%s2] sm:$0x3]
    %v1483 = vunpack.c.l.s4 1966171168
    %v1484 = vunpack.c.0.s8 %v1483
    %v1485 = vlaneseq
    %v1486 = vshrl.u32 %v1485, 7
    %v1487 = vsub.s32 %v1484, %v1486
    %v1488 = vrot.slane %v1481, %v1487
    %v1489 = vcombine.high %v1488, %v1488
    %v1491 = vunpack.c.l.s4 1966171168
    %v1492 = vunpack.c.0.s8 %v1491
    %v1493 = vlaneseq
    %v1494 = vshrl.u32 %v1493, 7
    %v1495 = vsub.s32 %v1492, %v1494
    %v1496 = vrot.slane %v1488, %v1495
    %v1498 = vunpack.c.l.s4 1966171168
    %v1499 = vunpack.c.0.s8 %v1498
    %v1500 = vlaneseq
    %v1501 = vshrl.u32 %v1500, 7
    %v1502 = vsub.s32 %v1499, %v1501
    %v1503 = vrot.slane %v1489, %v1502
    %vm1504 = vcmp.ne.s32.totalorder %v1496, 0
    %vm1505 = vcmp.ne.s32.totalorder %v1503, 0
    %v1506 = vsel %vm1504, 1, 0
    %v1507 = vsel %vm1505, 1, 0
    %v1508 = vlaneseq
    %v1509 = vshrl.u32 %v1508, 7
    %v1510 = vsub.s32 0, %v1509
    %v1511 = vrot.slane %v1506, %v1510
    %v1512 = vlaneseq
    %v1513 = vshrl.u32 %v1512, 7
    %v1514 = vsub.s32 0, %v1513
    %v1515 = vrot.slane %v1507, %v1514
    %vm1516 = vcmp.eq.s32.totalorder %v1511, 1
    %vm1517 = vcmp.eq.s32.totalorder %v1515, 1
    %v1518 = vsel %vm1516, -10000.0, %v1026
    %v1519 = vsel %vm1517, -10000.0, %v1478
    %vm1520 = vcmask 64512
    %v1521 = vsel %vm1520, %v1518, -inf
    %1522 = vmax.xlane.f32.xlu0 %v1521
    %v1523 = vpop.xlane.xlu0 %1522
    %v1524 = vsel %vm1520, %v1519, -inf
    %1525 = vmax.xlane.f32.xlu0 %v1524
    %v1526 = vpop.xlane.xlu0 %1525
    %v1527 = vsub.f32 %v1518, %v1523
    %v1528 = vsub.f32 %v1519, %v1526
    %v1529 = vmul.f32 %v1527, 1.442695
    %v1530 = vpow.pop %v1529
    %v1531 = vmul.f32 %v1528, 1.442695
    %v1532 = vpow.pop %v1531
    %v1533 = vsel %vm1520, %v1530, 0.0
    %1534 = vadd.xlane.f32.xlu0 %v1533
    %v1535 = vpop.xlane.xlu0 %1534
    %v1536 = vsel %vm1520, %v1532, 0.0
    %1537 = vadd.xlane.f32.xlu0 %v1536
    %v1538 = vpop.xlane.xlu0 %1537
    %v1539 = vrcp.pop %v1535
    %v1540 = vmul.f32 %v1530, %v1539
    %v1541 = vrcp.pop %v1538
    %v1542 = vmul.f32 %v1532, %v1541
    %v1544 = vsel %vm1520, %v1540, 0
    %1546 = vmatprep.subr.mxu0 0.0
    %v1547 = vand.u32 %v23, 4294901760
    %1548 = vmatpush1.msra.mxu0 %v1547
    %1549 = vmatprep.subr.mxu0 0.0
    %1550 = vmatpush1.msra.mxu0 0.0
    %1551 = vmatprep.subr.mxu0 0.0
    %1552 = vmatpush1.msra.mxu0 0.0
    %1553 = vmatprep.subr.mxu0 0.0
    %1554 = vmatpush1.msra.mxu0 0.0
    %1555 = vmatprep.subr.mxu0 0.0
    %1556 = vmatpush1.msra.mxu0 0.0
    %1557 = vmatprep.subr.mxu0 0.0
    %1558 = vmatpush1.msra.mxu0 0.0
    %1559 = vmatprep.subr.mxu0 0.0
    %1560 = vmatpush1.msra.mxu0 0.0
    %1561 = vmatprep.subr.mxu0 0.0
    %1562 = vmatpush1.msra.mxu0 0.0
    %1563 = vmatprep.subr.mxu0 0.0
    %1564 = vmatpush1.msra.mxu0 0.0
    %1565 = vmatprep.subr.mxu0 0.0
    %1566 = vmatpush1.msra.mxu0 0.0
    %1567 = vmatprep.subr.mxu0 0.0
    %1568 = vmatpush1.msra.mxu0 0.0
    %1569 = vmatprep.subr.mxu0 0.0
    %1570 = vmatpush1.msra.mxu0 0.0
    %1571 = vmatprep.subr.mxu0 0.0
    %1572 = vmatpush1.msra.mxu0 0.0
    %1573 = vmatprep.subr.mxu0 0.0
    %1574 = vmatpush1.msra.mxu0 0.0
    %1575 = vmatprep.subr.mxu0 0.0
    %1576 = vmatpush1.msra.mxu0 0.0
    %1577 = vmatprep.subr.mxu0 0.0
    %1578 = vmatpush1.msra.mxu0 0.0
    %1579 = vmatprep.subr.mxu0 0.0
    %1580 = vmatpush1.msra.mxu0 0.0
    %1581 = vmatprep.subr.mxu0 0.0
    %1582 = vmatpush1.msra.mxu0 0.0
    %1583 = vmatprep.subr.mxu0 0.0
    %1584 = vmatpush1.msra.mxu0 0.0
    %1585 = vmatprep.subr.mxu0 0.0
    %1586 = vmatpush1.msra.mxu0 0.0
    %1587 = vmatprep.subr.mxu0 0.0
    %1588 = vmatpush1.msra.mxu0 0.0
    %1589 = vmatprep.subr.mxu0 0.0
    %1590 = vmatpush1.msra.mxu0 0.0
    %1591 = vmatprep.subr.mxu0 0.0
    %1592 = vmatpush1.msra.mxu0 0.0
    %1593 = vmatprep.subr.mxu0 0.0
    %1594 = vmatpush1.msra.mxu0 0.0
    %1595 = vmatprep.subr.mxu0 0.0
    %1596 = vmatpush1.msra.mxu0 0.0
    %1597 = vmatprep.subr.mxu0 0.0
    %1598 = vmatpush1.msra.mxu0 0.0
    %1599 = vmatprep.subr.mxu0 0.0
    %1600 = vmatpush1.msra.mxu0 0.0
    %1601 = vmatprep.subr.mxu0 0.0
    %1602 = vmatpush1.msra.mxu0 0.0
    %1603 = vmatprep.subr.mxu0 0.0
    %1604 = vmatpush1.msra.mxu0 0.0
    %1605 = vmatprep.subr.mxu0 0.0
    %1606 = vmatpush1.msra.mxu0 0.0
    %1607 = vmatprep.subr.mxu0 0.0
    %1608 = vmatpush1.msra.mxu0 0.0
    %1609 = vmatprep.subr.mxu0 0.0
    %1610 = vmatpush1.msra.mxu0 0.0
    %1611 = vmatprep.mubr.f32.mxu0 0.0
    %v1612 = vand.u32 %v1544, 4294901760
    %v1613 = vsub.f32 %v1544, %v1612
    %v1614 = vand.u32 %v1613, 4294901760
    %v1615 = vsub.f32 %v1613, %v1614
    %v1616 = vand.u32 %v1615, 4294901760
    %1617 = vmatmul.mubr.f32.gmra.mrb[0].mxu0 %v1616
    %v1618 = vpop.f32.mrb[0].mxu0
    %v1619 = vadd.f32 0.0, %v1618
    %v1620 = vpop.f32.mrb[0].mxu0
    %1621 = vdwg.mxu0
    %1622 = vmatprep.subr.mxu0 0.0
    %v1623 = vand.u32 %v23, 4294901760
    %v1624 = vsub.f32 %v23, %v1623
    %v1625 = vand.u32 %v1624, 4294901760
    %v1626 = vsub.f32 %v1624, %v1625
    %v1627 = vand.u32 %v1626, 4294901760
    %1628 = vmatpush1.msra.mxu0 %v1627
    %1629 = vmatprep.subr.mxu0 0.0
    %1630 = vmatpush1.msra.mxu0 0.0
    %1631 = vmatprep.subr.mxu0 0.0
    %1632 = vmatpush1.msra.mxu0 0.0
    %1633 = vmatprep.subr.mxu0 0.0
    %1634 = vmatpush1.msra.mxu0 0.0
    %1635 = vmatprep.subr.mxu0 0.0
    %1636 = vmatpush1.msra.mxu0 0.0
    %1637 = vmatprep.subr.mxu0 0.0
    %1638 = vmatpush1.msra.mxu0 0.0
    %1639 = vmatprep.subr.mxu0 0.0
    %1640 = vmatpush1.msra.mxu0 0.0
    %1641 = vmatprep.subr.mxu0 0.0
    %1642 = vmatpush1.msra.mxu0 0.0
    %1643 = vmatprep.subr.mxu0 0.0
    %1644 = vmatpush1.msra.mxu0 0.0
    %1645 = vmatprep.subr.mxu0 0.0
    %1646 = vmatpush1.msra.mxu0 0.0
    %1647 = vmatprep.subr.mxu0 0.0
    %1648 = vmatpush1.msra.mxu0 0.0
    %1649 = vmatprep.subr.mxu0 0.0
    %1650 = vmatpush1.msra.mxu0 0.0
    %1651 = vmatprep.subr.mxu0 0.0
    %1652 = vmatpush1.msra.mxu0 0.0
    %1653 = vmatprep.subr.mxu0 0.0
    %1654 = vmatpush1.msra.mxu0 0.0
    %1655 = vmatprep.subr.mxu0 0.0
    %1656 = vmatpush1.msra.mxu0 0.0
    %1657 = vmatprep.subr.mxu0 0.0
    %1658 = vmatpush1.msra.mxu0 0.0
    %1659 = vmatprep.subr.mxu0 0.0
    %1660 = vmatpush1.msra.mxu0 0.0
    %1661 = vmatprep.subr.mxu0 0.0
    %1662 = vmatpush1.msra.mxu0 0.0
    %1663 = vmatprep.subr.mxu0 0.0
    %1664 = vmatpush1.msra.mxu0 0.0
    %1665 = vmatprep.subr.mxu0 0.0
    %1666 = vmatpush1.msra.mxu0 0.0
    %1667 = vmatprep.subr.mxu0 0.0
    %1668 = vmatpush1.msra.mxu0 0.0
    %1669 = vmatprep.subr.mxu0 0.0
    %1670 = vmatpush1.msra.mxu0 0.0
    %1671 = vmatprep.subr.mxu0 0.0
    %1672 = vmatpush1.msra.mxu0 0.0
    %1673 = vmatprep.subr.mxu0 0.0
    %1674 = vmatpush1.msra.mxu0 0.0
    %1675 = vmatprep.subr.mxu0 0.0
    %1676 = vmatpush1.msra.mxu0 0.0
    %1677 = vmatprep.subr.mxu0 0.0
    %1678 = vmatpush1.msra.mxu0 0.0
    %1679 = vmatprep.subr.mxu0 0.0
    %1680 = vmatpush1.msra.mxu0 0.0
    %1681 = vmatprep.subr.mxu0 0.0
    %1682 = vmatpush1.msra.mxu0 0.0
    %1683 = vmatprep.subr.mxu0 0.0
    %1684 = vmatpush1.msra.mxu0 0.0
    %1685 = vmatprep.subr.mxu0 0.0
    %1686 = vmatpush1.msra.mxu0 0.0
    %1687 = vmatprep.subr.mxu0 0.0
    %1688 = vmatpush1.msra.mxu0 0.0
    %1689 = vmatprep.subr.mxu0 0.0
    %1690 = vmatpush1.msra.mxu0 0.0
    %1691 = vmatprep.mubr.f32.mxu0 0.0
    %v1692 = vand.u32 %v1544, 4294901760
    %1693 = vmatmul.mubr.f32.gmra.mrb[0].mxu0 %v1692
    %v1694 = vpop.f32.mrb[0].mxu0
    %v1695 = vadd.f32 %v1619, %v1694
    %v1696 = vpop.f32.mrb[0].mxu0
    %1697 = vdwg.mxu0
    %1698 = vmatprep.subr.mxu0 0.0
    %v1699 = vand.u32 %v23, 4294901760
    %v1700 = vsub.f32 %v23, %v1699
    %1701 = vmatpush1.msra.mxu0 %v1700
    %1702 = vmatprep.subr.mxu0 0.0
    %1703 = vmatpush1.msra.mxu0 0.0
    %1704 = vmatprep.subr.mxu0 0.0
    %1705 = vmatpush1.msra.mxu0 0.0
    %1706 = vmatprep.subr.mxu0 0.0
    %1707 = vmatpush1.msra.mxu0 0.0
    %1708 = vmatprep.subr.mxu0 0.0
    %1709 = vmatpush1.msra.mxu0 0.0
    %1710 = vmatprep.subr.mxu0 0.0
    %1711 = vmatpush1.msra.mxu0 0.0
    %1712 = vmatprep.subr.mxu0 0.0
    %1713 = vmatpush1.msra.mxu0 0.0
    %1714 = vmatprep.subr.mxu0 0.0
    %1715 = vmatpush1.msra.mxu0 0.0
    %1716 = vmatprep.subr.mxu0 0.0
    %1717 = vmatpush1.msra.mxu0 0.0
    %1718 = vmatprep.subr.mxu0 0.0
    %1719 = vmatpush1.msra.mxu0 0.0
    %1720 = vmatprep.subr.mxu0 0.0
    %1721 = vmatpush1.msra.mxu0 0.0
    %1722 = vmatprep.subr.mxu0 0.0
    %1723 = vmatpush1.msra.mxu0 0.0
    %1724 = vmatprep.subr.mxu0 0.0
    %1725 = vmatpush1.msra.mxu0 0.0
    %1726 = vmatprep.subr.mxu0 0.0
    %1727 = vmatpush1.msra.mxu0 0.0
    %1728 = vmatprep.subr.mxu0 0.0
    %1729 = vmatpush1.msra.mxu0 0.0
    %1730 = vmatprep.subr.mxu0 0.0
    %1731 = vmatpush1.msra.mxu0 0.0
    %1732 = vmatprep.subr.mxu0 0.0
    %1733 = vmatpush1.msra.mxu0 0.0
    %1734 = vmatprep.subr.mxu0 0.0
    %1735 = vmatpush1.msra.mxu0 0.0
    %1736 = vmatprep.subr.mxu0 0.0
    %1737 = vmatpush1.msra.mxu0 0.0
    %1738 = vmatprep.subr.mxu0 0.0
    %1739 = vmatpush1.msra.mxu0 0.0
    %1740 = vmatprep.subr.mxu0 0.0
    %1741 = vmatpush1.msra.mxu0 0.0
    %1742 = vmatprep.subr.mxu0 0.0
    %1743 = vmatpush1.msra.mxu0 0.0
    %1744 = vmatprep.subr.mxu0 0.0
    %1745 = vmatpush1.msra.mxu0 0.0
    %1746 = vmatprep.subr.mxu0 0.0
    %1747 = vmatpush1.msra.mxu0 0.0
    %1748 = vmatprep.subr.mxu0 0.0
    %1749 = vmatpush1.msra.mxu0 0.0
    %1750 = vmatprep.subr.mxu0 0.0
    %1751 = vmatpush1.msra.mxu0 0.0
    %1752 = vmatprep.subr.mxu0 0.0
    %1753 = vmatpush1.msra.mxu0 0.0
    %1754 = vmatprep.subr.mxu0 0.0
    %1755 = vmatpush1.msra.mxu0 0.0
    %1756 = vmatprep.subr.mxu0 0.0
    %1757 = vmatpush1.msra.mxu0 0.0
    %1758 = vmatprep.subr.mxu0 0.0
    %1759 = vmatpush1.msra.mxu0 0.0
    %1760 = vmatprep.subr.mxu0 0.0
    %1761 = vmatpush1.msra.mxu0 0.0
    %1762 = vmatprep.subr.mxu0 0.0
    %1763 = vmatpush1.msra.mxu0 0.0
    %1764 = vmatprep.mubr.f32.mxu0 0.0
    %v1765 = vand.u32 %v1544, 4294901760
    %v1766 = vsub.f32 %v1544, %v1765
    %1767 = vmatmul.mubr.f32.gmra.mrb[0].mxu0 %v1766
    %v1768 = vpop.f32.mrb[0].mxu0
    %v1769 = vadd.f32 %v1695, %v1768
    %v1770 = vpop.f32.mrb[0].mxu0
    %1771 = vdwg.mxu0
    %1772 = vmatprep.subr.mxu0 0.0
    %v1773 = vand.u32 %v23, 4294901760
    %1774 = vmatpush1.msra.mxu0 %v1773
    %1775 = vmatprep.subr.mxu0 0.0
    %1776 = vmatpush1.msra.mxu0 0.0
    %1777 = vmatprep.subr.mxu0 0.0
    %1778 = vmatpush1.msra.mxu0 0.0
    %1779 = vmatprep.subr.mxu0 0.0
    %1780 = vmatpush1.msra.mxu0 0.0
    %1781 = vmatprep.subr.mxu0 0.0
    %1782 = vmatpush1.msra.mxu0 0.0
    %1783 = vmatprep.subr.mxu0 0.0
    %1784 = vmatpush1.msra.mxu0 0.0
    %1785 = vmatprep.subr.mxu0 0.0
    %1786 = vmatpush1.msra.mxu0 0.0
    %1787 = vmatprep.subr.mxu0 0.0
    %1788 = vmatpush1.msra.mxu0 0.0
    %1789 = vmatprep.subr.mxu0 0.0
    %1790 = vmatpush1.msra.mxu0 0.0
    %1791 = vmatprep.subr.mxu0 0.0
    %1792 = vmatpush1.msra.mxu0 0.0
    %1793 = vmatprep.subr.mxu0 0.0
    %1794 = vmatpush1.msra.mxu0 0.0
    %1795 = vmatprep.subr.mxu0 0.0
    %1796 = vmatpush1.msra.mxu0 0.0
    %1797 = vmatprep.subr.mxu0 0.0
    %1798 = vmatpush1.msra.mxu0 0.0
    %1799 = vmatprep.subr.mxu0 0.0
    %1800 = vmatpush1.msra.mxu0 0.0
    %1801 = vmatprep.subr.mxu0 0.0
    %1802 = vmatpush1.msra.mxu0 0.0
    %1803 = vmatprep.subr.mxu0 0.0
    %1804 = vmatpush1.msra.mxu0 0.0
    %1805 = vmatprep.subr.mxu0 0.0
    %1806 = vmatpush1.msra.mxu0 0.0
    %1807 = vmatprep.subr.mxu0 0.0
    %1808 = vmatpush1.msra.mxu0 0.0
    %1809 = vmatprep.subr.mxu0 0.0
    %1810 = vmatpush1.msra.mxu0 0.0
    %1811 = vmatprep.subr.mxu0 0.0
    %1812 = vmatpush1.msra.mxu0 0.0
    %1813 = vmatprep.subr.mxu0 0.0
    %1814 = vmatpush1.msra.mxu0 0.0
    %1815 = vmatprep.subr.mxu0 0.0
    %1816 = vmatpush1.msra.mxu0 0.0
    %1817 = vmatprep.subr.mxu0 0.0
    %1818 = vmatpush1.msra.mxu0 0.0
    %1819 = vmatprep.subr.mxu0 0.0
    %1820 = vmatpush1.msra.mxu0 0.0
    %1821 = vmatprep.subr.mxu0 0.0
    %1822 = vmatpush1.msra.mxu0 0.0
    %1823 = vmatprep.subr.mxu0 0.0
    %1824 = vmatpush1.msra.mxu0 0.0
    %1825 = vmatprep.subr.mxu0 0.0
    %1826 = vmatpush1.msra.mxu0 0.0
    %1827 = vmatprep.subr.mxu0 0.0
    %1828 = vmatpush1.msra.mxu0 0.0
    %1829 = vmatprep.subr.mxu0 0.0
    %1830 = vmatpush1.msra.mxu0 0.0
    %1831 = vmatprep.subr.mxu0 0.0
    %1832 = vmatpush1.msra.mxu0 0.0
    %1833 = vmatprep.subr.mxu0 0.0
    %1834 = vmatpush1.msra.mxu0 0.0
    %1835 = vmatprep.subr.mxu0 0.0
    %1836 = vmatpush1.msra.mxu0 0.0
    %1837 = vmatprep.mubr.f32.mxu0 0.0
    %v1838 = vand.u32 %v1544, 4294901760
    %v1839 = vsub.f32 %v1544, %v1838
    %v1840 = vand.u32 %v1839, 4294901760
    %1841 = vmatmul.mubr.f32.gmra.mrb[0].mxu0 %v1840
    %v1842 = vpop.f32.mrb[0].mxu0
    %v1843 = vadd.f32 %v1769, %v1842
    %v1844 = vpop.f32.mrb[0].mxu0
    %1845 = vdwg.mxu0
    %1846 = vmatprep.subr.mxu0 0.0
    %v1847 = vand.u32 %v23, 4294901760
    %v1848 = vsub.f32 %v23, %v1847
    %v1849 = vand.u32 %v1848, 4294901760
    %1850 = vmatpush1.msra.mxu0 %v1849
    %1851 = vmatprep.subr.mxu0 0.0
    %1852 = vmatpush1.msra.mxu0 0.0
    %1853 = vmatprep.subr.mxu0 0.0
    %1854 = vmatpush1.msra.mxu0 0.0
    %1855 = vmatprep.subr.mxu0 0.0
    %1856 = vmatpush1.msra.mxu0 0.0
    %1857 = vmatprep.subr.mxu0 0.0
    %1858 = vmatpush1.msra.mxu0 0.0
    %1859 = vmatprep.subr.mxu0 0.0
    %1860 = vmatpush1.msra.mxu0 0.0
    %1861 = vmatprep.subr.mxu0 0.0
    %1862 = vmatpush1.msra.mxu0 0.0
    %1863 = vmatprep.subr.mxu0 0.0
    %1864 = vmatpush1.msra.mxu0 0.0
    %1865 = vmatprep.subr.mxu0 0.0
    %1866 = vmatpush1.msra.mxu0 0.0
    %1867 = vmatprep.subr.mxu0 0.0
    %1868 = vmatpush1.msra.mxu0 0.0
    %1869 = vmatprep.subr.mxu0 0.0
    %1870 = vmatpush1.msra.mxu0 0.0
    %1871 = vmatprep.subr.mxu0 0.0
    %1872 = vmatpush1.msra.mxu0 0.0
    %1873 = vmatprep.subr.mxu0 0.0
    %1874 = vmatpush1.msra.mxu0 0.0
    %1875 = vmatprep.subr.mxu0 0.0
    %1876 = vmatpush1.msra.mxu0 0.0
    %1877 = vmatprep.subr.mxu0 0.0
    %1878 = vmatpush1.msra.mxu0 0.0
    %1879 = vmatprep.subr.mxu0 0.0
    %1880 = vmatpush1.msra.mxu0 0.0
    %1881 = vmatprep.subr.mxu0 0.0
    %1882 = vmatpush1.msra.mxu0 0.0
    %1883 = vmatprep.subr.mxu0 0.0
    %1884 = vmatpush1.msra.mxu0 0.0
    %1885 = vmatprep.subr.mxu0 0.0
    %1886 = vmatpush1.msra.mxu0 0.0
    %1887 = vmatprep.subr.mxu0 0.0
    %1888 = vmatpush1.msra.mxu0 0.0
    %1889 = vmatprep.subr.mxu0 0.0
    %1890 = vmatpush1.msra.mxu0 0.0
    %1891 = vmatprep.subr.mxu0 0.0
    %1892 = vmatpush1.msra.mxu0 0.0
    %1893 = vmatprep.subr.mxu0 0.0
    %1894 = vmatpush1.msra.mxu0 0.0
    %1895 = vmatprep.subr.mxu0 0.0
    %1896 = vmatpush1.msra.mxu0 0.0
    %1897 = vmatprep.subr.mxu0 0.0
    %1898 = vmatpush1.msra.mxu0 0.0
    %1899 = vmatprep.subr.mxu0 0.0
    %1900 = vmatpush1.msra.mxu0 0.0
    %1901 = vmatprep.subr.mxu0 0.0
    %1902 = vmatpush1.msra.mxu0 0.0
    %1903 = vmatprep.subr.mxu0 0.0
    %1904 = vmatpush1.msra.mxu0 0.0
    %1905 = vmatprep.subr.mxu0 0.0
    %1906 = vmatpush1.msra.mxu0 0.0
    %1907 = vmatprep.subr.mxu0 0.0
    %1908 = vmatpush1.msra.mxu0 0.0
    %1909 = vmatprep.subr.mxu0 0.0
    %1910 = vmatpush1.msra.mxu0 0.0
    %1911 = vmatprep.subr.mxu0 0.0
    %1912 = vmatpush1.msra.mxu0 0.0
    %1913 = vmatprep.mubr.f32.mxu0 0.0
    %v1914 = vand.u32 %v1544, 4294901760
    %1915 = vmatmul.mubr.f32.gmra.mrb[0].mxu0 %v1914
    %v1916 = vpop.f32.mrb[0].mxu0
    %v1917 = vadd.f32 %v1843, %v1916
    %v1918 = vpop.f32.mrb[0].mxu0
    %1919 = vdwg.mxu0
    %1920 = vmatprep.subr.mxu0 0.0
    %v1921 = vand.u32 %v23, 4294901760
    %1922 = vmatpush1.msra.mxu0 %v1921
    %1923 = vmatprep.subr.mxu0 0.0
    %1924 = vmatpush1.msra.mxu0 0.0
    %1925 = vmatprep.subr.mxu0 0.0
    %1926 = vmatpush1.msra.mxu0 0.0
    %1927 = vmatprep.subr.mxu0 0.0
    %1928 = vmatpush1.msra.mxu0 0.0
    %1929 = vmatprep.subr.mxu0 0.0
    %1930 = vmatpush1.msra.mxu0 0.0
    %1931 = vmatprep.subr.mxu0 0.0
    %1932 = vmatpush1.msra.mxu0 0.0
    %1933 = vmatprep.subr.mxu0 0.0
    %1934 = vmatpush1.msra.mxu0 0.0
    %1935 = vmatprep.subr.mxu0 0.0
    %1936 = vmatpush1.msra.mxu0 0.0
    %1937 = vmatprep.subr.mxu0 0.0
    %1938 = vmatpush1.msra.mxu0 0.0
    %1939 = vmatprep.subr.mxu0 0.0
    %1940 = vmatpush1.msra.mxu0 0.0
    %1941 = vmatprep.subr.mxu0 0.0
    %1942 = vmatpush1.msra.mxu0 0.0
    %1943 = vmatprep.subr.mxu0 0.0
    %1944 = vmatpush1.msra.mxu0 0.0
    %1945 = vmatprep.subr.mxu0 0.0
    %1946 = vmatpush1.msra.mxu0 0.0
    %1947 = vmatprep.subr.mxu0 0.0
    %1948 = vmatpush1.msra.mxu0 0.0
    %1949 = vmatprep.subr.mxu0 0.0
    %1950 = vmatpush1.msra.mxu0 0.0
    %1951 = vmatprep.subr.mxu0 0.0
    %1952 = vmatpush1.msra.mxu0 0.0
    %1953 = vmatprep.subr.mxu0 0.0
    %1954 = vmatpush1.msra.mxu0 0.0
    %1955 = vmatprep.subr.mxu0 0.0
    %1956 = vmatpush1.msra.mxu0 0.0
    %1957 = vmatprep.subr.mxu0 0.0
    %1958 = vmatpush1.msra.mxu0 0.0
    %1959 = vmatprep.subr.mxu0 0.0
    %1960 = vmatpush1.msra.mxu0 0.0
    %1961 = vmatprep.subr.mxu0 0.0
    %1962 = vmatpush1.msra.mxu0 0.0
    %1963 = vmatprep.subr.mxu0 0.0
    %1964 = vmatpush1.msra.mxu0 0.0
    %1965 = vmatprep.subr.mxu0 0.0
    %1966 = vmatpush1.msra.mxu0 0.0
    %1967 = vmatprep.subr.mxu0 0.0
    %1968 = vmatpush1.msra.mxu0 0.0
    %1969 = vmatprep.subr.mxu0 0.0
    %1970 = vmatpush1.msra.mxu0 0.0
    %1971 = vmatprep.subr.mxu0 0.0
    %1972 = vmatpush1.msra.mxu0 0.0
    %1973 = vmatprep.subr.mxu0 0.0
    %1974 = vmatpush1.msra.mxu0 0.0
    %1975 = vmatprep.subr.mxu0 0.0
    %1976 = vmatpush1.msra.mxu0 0.0
    %1977 = vmatprep.subr.mxu0 0.0
    %1978 = vmatpush1.msra.mxu0 0.0
    %1979 = vmatprep.subr.mxu0 0.0
    %1980 = vmatpush1.msra.mxu0 0.0
    %1981 = vmatprep.subr.mxu0 0.0
    %1982 = vmatpush1.msra.mxu0 0.0
    %1983 = vmatprep.subr.mxu0 0.0
    %1984 = vmatpush1.msra.mxu0 0.0
    %1985 = vmatprep.mubr.f32.mxu0 0.0
    %v1986 = vand.u32 %v1544, 4294901760
    %1987 = vmatmul.mubr.f32.gmra.mrb[0].mxu0 %v1986
    %v1988 = vpop.f32.mrb[0].mxu0
    %v1989 = vadd.f32 %v1917, %v1988
    %v1990 = vpop.f32.mrb[0].mxu0
    %1991 = vdwg.mxu0
    %v1993 = vsel %vm1520, %v1542, 0
    %1995 = vmatprep.subr.mxu0 0.0
    %v1996 = vand.u32 %v24, 4294901760
    %1997 = vmatpush1.msra.mxu0 %v1996
    %1998 = vmatprep.subr.mxu0 0.0
    %1999 = vmatpush1.msra.mxu0 0.0
    %2000 = vmatprep.subr.mxu0 0.0
    %2001 = vmatpush1.msra.mxu0 0.0
    %2002 = vmatprep.subr.mxu0 0.0
    %2003 = vmatpush1.msra.mxu0 0.0
    %2004 = vmatprep.subr.mxu0 0.0
    %2005 = vmatpush1.msra.mxu0 0.0
    %2006 = vmatprep.subr.mxu0 0.0
    %2007 = vmatpush1.msra.mxu0 0.0
    %2008 = vmatprep.subr.mxu0 0.0
    %2009 = vmatpush1.msra.mxu0 0.0
    %2010 = vmatprep.subr.mxu0 0.0
    %2011 = vmatpush1.msra.mxu0 0.0
    %2012 = vmatprep.subr.mxu0 0.0
    %2013 = vmatpush1.msra.mxu0 0.0
    %2014 = vmatprep.subr.mxu0 0.0
    %2015 = vmatpush1.msra.mxu0 0.0
    %2016 = vmatprep.subr.mxu0 0.0
    %2017 = vmatpush1.msra.mxu0 0.0
    %2018 = vmatprep.subr.mxu0 0.0
    %2019 = vmatpush1.msra.mxu0 0.0
    %2020 = vmatprep.subr.mxu0 0.0
    %2021 = vmatpush1.msra.mxu0 0.0
    %2022 = vmatprep.subr.mxu0 0.0
    %2023 = vmatpush1.msra.mxu0 0.0
    %2024 = vmatprep.subr.mxu0 0.0
    %2025 = vmatpush1.msra.mxu0 0.0
    %2026 = vmatprep.subr.mxu0 0.0
    %2027 = vmatpush1.msra.mxu0 0.0
    %2028 = vmatprep.subr.mxu0 0.0
    %2029 = vmatpush1.msra.mxu0 0.0
    %2030 = vmatprep.subr.mxu0 0.0
    %2031 = vmatpush1.msra.mxu0 0.0
    %2032 = vmatprep.subr.mxu0 0.0
    %2033 = vmatpush1.msra.mxu0 0.0
    %2034 = vmatprep.subr.mxu0 0.0
    %2035 = vmatpush1.msra.mxu0 0.0
    %2036 = vmatprep.subr.mxu0 0.0
    %2037 = vmatpush1.msra.mxu0 0.0
    %2038 = vmatprep.subr.mxu0 0.0
    %2039 = vmatpush1.msra.mxu0 0.0
    %2040 = vmatprep.subr.mxu0 0.0
    %2041 = vmatpush1.msra.mxu0 0.0
    %2042 = vmatprep.subr.mxu0 0.0
    %2043 = vmatpush1.msra.mxu0 0.0
    %2044 = vmatprep.subr.mxu0 0.0
    %2045 = vmatpush1.msra.mxu0 0.0
    %2046 = vmatprep.subr.mxu0 0.0
    %2047 = vmatpush1.msra.mxu0 0.0
    %2048 = vmatprep.subr.mxu0 0.0
    %2049 = vmatpush1.msra.mxu0 0.0
    %2050 = vmatprep.subr.mxu0 0.0
    %2051 = vmatpush1.msra.mxu0 0.0
    %2052 = vmatprep.subr.mxu0 0.0
    %2053 = vmatpush1.msra.mxu0 0.0
    %2054 = vmatprep.subr.mxu0 0.0
    %2055 = vmatpush1.msra.mxu0 0.0
    %2056 = vmatprep.subr.mxu0 0.0
    %2057 = vmatpush1.msra.mxu0 0.0
    %2058 = vmatprep.subr.mxu0 0.0
    %2059 = vmatpush1.msra.mxu0 0.0
    %2060 = vmatprep.mubr.f32.mxu0 0.0
    %v2061 = vand.u32 %v1993, 4294901760
    %v2062 = vsub.f32 %v1993, %v2061
    %v2063 = vand.u32 %v2062, 4294901760
    %v2064 = vsub.f32 %v2062, %v2063
    %v2065 = vand.u32 %v2064, 4294901760
    %2066 = vmatmul.mubr.f32.gmra.mrb[0].mxu0 %v2065
    %v2067 = vpop.f32.mrb[0].mxu0
    %v2068 = vadd.f32 0.0, %v2067
    %v2069 = vpop.f32.mrb[0].mxu0
    %2070 = vdwg.mxu0
    %2071 = vmatprep.subr.mxu0 0.0
    %v2072 = vand.u32 %v24, 4294901760
    %v2073 = vsub.f32 %v24, %v2072
    %v2074 = vand.u32 %v2073, 4294901760
    %v2075 = vsub.f32 %v2073, %v2074
    %v2076 = vand.u32 %v2075, 4294901760
    %2077 = vmatpush1.msra.mxu0 %v2076
    %2078 = vmatprep.subr.mxu0 0.0
    %2079 = vmatpush1.msra.mxu0 0.0
    %2080 = vmatprep.subr.mxu0 0.0
    %2081 = vmatpush1.msra.mxu0 0.0
    %2082 = vmatprep.subr.mxu0 0.0
    %2083 = vmatpush1.msra.mxu0 0.0
    %2084 = vmatprep.subr.mxu0 0.0
    %2085 = vmatpush1.msra.mxu0 0.0
    %2086 = vmatprep.subr.mxu0 0.0
    %2087 = vmatpush1.msra.mxu0 0.0
    %2088 = vmatprep.subr.mxu0 0.0
    %2089 = vmatpush1.msra.mxu0 0.0
    %2090 = vmatprep.subr.mxu0 0.0
    %2091 = vmatpush1.msra.mxu0 0.0
    %2092 = vmatprep.subr.mxu0 0.0
    %2093 = vmatpush1.msra.mxu0 0.0
    %2094 = vmatprep.subr.mxu0 0.0
    %2095 = vmatpush1.msra.mxu0 0.0
    %2096 = vmatprep.subr.mxu0 0.0
    %2097 = vmatpush1.msra.mxu0 0.0
    %2098 = vmatprep.subr.mxu0 0.0
    %2099 = vmatpush1.msra.mxu0 0.0
    %2100 = vmatprep.subr.mxu0 0.0
    %2101 = vmatpush1.msra.mxu0 0.0
    %2102 = vmatprep.subr.mxu0 0.0
    %2103 = vmatpush1.msra.mxu0 0.0
    %2104 = vmatprep.subr.mxu0 0.0
    %2105 = vmatpush1.msra.mxu0 0.0
    %2106 = vmatprep.subr.mxu0 0.0
    %2107 = vmatpush1.msra.mxu0 0.0
    %2108 = vmatprep.subr.mxu0 0.0
    %2109 = vmatpush1.msra.mxu0 0.0
    %2110 = vmatprep.subr.mxu0 0.0
    %2111 = vmatpush1.msra.mxu0 0.0
    %2112 = vmatprep.subr.mxu0 0.0
    %2113 = vmatpush1.msra.mxu0 0.0
    %2114 = vmatprep.subr.mxu0 0.0
    %2115 = vmatpush1.msra.mxu0 0.0
    %2116 = vmatprep.subr.mxu0 0.0
    %2117 = vmatpush1.msra.mxu0 0.0
    %2118 = vmatprep.subr.mxu0 0.0
    %2119 = vmatpush1.msra.mxu0 0.0
    %2120 = vmatprep.subr.mxu0 0.0
    %2121 = vmatpush1.msra.mxu0 0.0
    %2122 = vmatprep.subr.mxu0 0.0
    %2123 = vmatpush1.msra.mxu0 0.0
    %2124 = vmatprep.subr.mxu0 0.0
    %2125 = vmatpush1.msra.mxu0 0.0
    %2126 = vmatprep.subr.mxu0 0.0
    %2127 = vmatpush1.msra.mxu0 0.0
    %2128 = vmatprep.subr.mxu0 0.0
    %2129 = vmatpush1.msra.mxu0 0.0
    %2130 = vmatprep.subr.mxu0 0.0
    %2131 = vmatpush1.msra.mxu0 0.0
    %2132 = vmatprep.subr.mxu0 0.0
    %2133 = vmatpush1.msra.mxu0 0.0
    %2134 = vmatprep.subr.mxu0 0.0
    %2135 = vmatpush1.msra.mxu0 0.0
    %2136 = vmatprep.subr.mxu0 0.0
    %2137 = vmatpush1.msra.mxu0 0.0
    %2138 = vmatprep.subr.mxu0 0.0
    %2139 = vmatpush1.msra.mxu0 0.0
    %2140 = vmatprep.mubr.f32.mxu0 0.0
    %v2141 = vand.u32 %v1993, 4294901760
    %2142 = vmatmul.mubr.f32.gmra.mrb[0].mxu0 %v2141
    %v2143 = vpop.f32.mrb[0].mxu0
    %v2144 = vadd.f32 %v2068, %v2143
    %v2145 = vpop.f32.mrb[0].mxu0
    %2146 = vdwg.mxu0
    %2147 = vmatprep.subr.mxu0 0.0
    %v2148 = vand.u32 %v24, 4294901760
    %v2149 = vsub.f32 %v24, %v2148
    %2150 = vmatpush1.msra.mxu0 %v2149
    %2151 = vmatprep.subr.mxu0 0.0
    %2152 = vmatpush1.msra.mxu0 0.0
    %2153 = vmatprep.subr.mxu0 0.0
    %2154 = vmatpush1.msra.mxu0 0.0
    %2155 = vmatprep.subr.mxu0 0.0
    %2156 = vmatpush1.msra.mxu0 0.0
    %2157 = vmatprep.subr.mxu0 0.0
    %2158 = vmatpush1.msra.mxu0 0.0
    %2159 = vmatprep.subr.mxu0 0.0
    %2160 = vmatpush1.msra.mxu0 0.0
    %2161 = vmatprep.subr.mxu0 0.0
    %2162 = vmatpush1.msra.mxu0 0.0
    %2163 = vmatprep.subr.mxu0 0.0
    %2164 = vmatpush1.msra.mxu0 0.0
    %2165 = vmatprep.subr.mxu0 0.0
    %2166 = vmatpush1.msra.mxu0 0.0
    %2167 = vmatprep.subr.mxu0 0.0
    %2168 = vmatpush1.msra.mxu0 0.0
    %2169 = vmatprep.subr.mxu0 0.0
    %2170 = vmatpush1.msra.mxu0 0.0
    %2171 = vmatprep.subr.mxu0 0.0
    %2172 = vmatpush1.msra.mxu0 0.0
    %2173 = vmatprep.subr.mxu0 0.0
    %2174 = vmatpush1.msra.mxu0 0.0
    %2175 = vmatprep.subr.mxu0 0.0
    %2176 = vmatpush1.msra.mxu0 0.0
    %2177 = vmatprep.subr.mxu0 0.0
    %2178 = vmatpush1.msra.mxu0 0.0
    %2179 = vmatprep.subr.mxu0 0.0
    %2180 = vmatpush1.msra.mxu0 0.0
    %2181 = vmatprep.subr.mxu0 0.0
    %2182 = vmatpush1.msra.mxu0 0.0
    %2183 = vmatprep.subr.mxu0 0.0
    %2184 = vmatpush1.msra.mxu0 0.0
    %2185 = vmatprep.subr.mxu0 0.0
    %2186 = vmatpush1.msra.mxu0 0.0
    %2187 = vmatprep.subr.mxu0 0.0
    %2188 = vmatpush1.msra.mxu0 0.0
    %2189 = vmatprep.subr.mxu0 0.0
    %2190 = vmatpush1.msra.mxu0 0.0
    %2191 = vmatprep.subr.mxu0 0.0
    %2192 = vmatpush1.msra.mxu0 0.0
    %2193 = vmatprep.subr.mxu0 0.0
    %2194 = vmatpush1.msra.mxu0 0.0
    %2195 = vmatprep.subr.mxu0 0.0
    %2196 = vmatpush1.msra.mxu0 0.0
    %2197 = vmatprep.subr.mxu0 0.0
    %2198 = vmatpush1.msra.mxu0 0.0
    %2199 = vmatprep.subr.mxu0 0.0
    %2200 = vmatpush1.msra.mxu0 0.0
    %2201 = vmatprep.subr.mxu0 0.0
    %2202 = vmatpush1.msra.mxu0 0.0
    %2203 = vmatprep.subr.mxu0 0.0
    %2204 = vmatpush1.msra.mxu0 0.0
    %2205 = vmatprep.subr.mxu0 0.0
    %2206 = vmatpush1.msra.mxu0 0.0
    %2207 = vmatprep.subr.mxu0 0.0
    %2208 = vmatpush1.msra.mxu0 0.0
    %2209 = vmatprep.subr.mxu0 0.0
    %2210 = vmatpush1.msra.mxu0 0.0
    %2211 = vmatprep.subr.mxu0 0.0
    %2212 = vmatpush1.msra.mxu0 0.0
    %2213 = vmatprep.mubr.f32.mxu0 0.0
    %v2214 = vand.u32 %v1993, 4294901760
    %v2215 = vsub.f32 %v1993, %v2214
    %2216 = vmatmul.mubr.f32.gmra.mrb[0].mxu0 %v2215
    %v2217 = vpop.f32.mrb[0].mxu0
    %v2218 = vadd.f32 %v2144, %v2217
    %v2219 = vpop.f32.mrb[0].mxu0
    %2220 = vdwg.mxu0
    %2221 = vmatprep.subr.mxu0 0.0
    %v2222 = vand.u32 %v24, 4294901760
    %2223 = vmatpush1.msra.mxu0 %v2222
    %2224 = vmatprep.subr.mxu0 0.0
    %2225 = vmatpush1.msra.mxu0 0.0
    %2226 = vmatprep.subr.mxu0 0.0
    %2227 = vmatpush1.msra.mxu0 0.0
    %2228 = vmatprep.subr.mxu0 0.0
    %2229 = vmatpush1.msra.mxu0 0.0
    %2230 = vmatprep.subr.mxu0 0.0
    %2231 = vmatpush1.msra.mxu0 0.0
    %2232 = vmatprep.subr.mxu0 0.0
    %2233 = vmatpush1.msra.mxu0 0.0
    %2234 = vmatprep.subr.mxu0 0.0
    %2235 = vmatpush1.msra.mxu0 0.0
    %2236 = vmatprep.subr.mxu0 0.0
    %2237 = vmatpush1.msra.mxu0 0.0
    %2238 = vmatprep.subr.mxu0 0.0
    %2239 = vmatpush1.msra.mxu0 0.0
    %2240 = vmatprep.subr.mxu0 0.0
    %2241 = vmatpush1.msra.mxu0 0.0
    %2242 = vmatprep.subr.mxu0 0.0
    %2243 = vmatpush1.msra.mxu0 0.0
    %2244 = vmatprep.subr.mxu0 0.0
    %2245 = vmatpush1.msra.mxu0 0.0
    %2246 = vmatprep.subr.mxu0 0.0
    %2247 = vmatpush1.msra.mxu0 0.0
    %2248 = vmatprep.subr.mxu0 0.0
    %2249 = vmatpush1.msra.mxu0 0.0
    %2250 = vmatprep.subr.mxu0 0.0
    %2251 = vmatpush1.msra.mxu0 0.0
    %2252 = vmatprep.subr.mxu0 0.0
    %2253 = vmatpush1.msra.mxu0 0.0
    %2254 = vmatprep.subr.mxu0 0.0
    %2255 = vmatpush1.msra.mxu0 0.0
    %2256 = vmatprep.subr.mxu0 0.0
    %2257 = vmatpush1.msra.mxu0 0.0
    %2258 = vmatprep.subr.mxu0 0.0
    %2259 = vmatpush1.msra.mxu0 0.0
    %2260 = vmatprep.subr.mxu0 0.0
    %2261 = vmatpush1.msra.mxu0 0.0
    %2262 = vmatprep.subr.mxu0 0.0
    %2263 = vmatpush1.msra.mxu0 0.0
    %2264 = vmatprep.subr.mxu0 0.0
    %2265 = vmatpush1.msra.mxu0 0.0
    %2266 = vmatprep.subr.mxu0 0.0
    %2267 = vmatpush1.msra.mxu0 0.0
    %2268 = vmatprep.subr.mxu0 0.0
    %2269 = vmatpush1.msra.mxu0 0.0
    %2270 = vmatprep.subr.mxu0 0.0
    %2271 = vmatpush1.msra.mxu0 0.0
    %2272 = vmatprep.subr.mxu0 0.0
    %2273 = vmatpush1.msra.mxu0 0.0
    %2274 = vmatprep.subr.mxu0 0.0
    %2275 = vmatpush1.msra.mxu0 0.0
    %2276 = vmatprep.subr.mxu0 0.0
    %2277 = vmatpush1.msra.mxu0 0.0
    %2278 = vmatprep.subr.mxu0 0.0
    %2279 = vmatpush1.msra.mxu0 0.0
    %2280 = vmatprep.subr.mxu0 0.0
    %2281 = vmatpush1.msra.mxu0 0.0
    %2282 = vmatprep.subr.mxu0 0.0
    %2283 = vmatpush1.msra.mxu0 0.0
    %2284 = vmatprep.subr.mxu0 0.0
    %2285 = vmatpush1.msra.mxu0 0.0
    %2286 = vmatprep.mubr.f32.mxu0 0.0
    %v2287 = vand.u32 %v1993, 4294901760
    %v2288 = vsub.f32 %v1993, %v2287
    %v2289 = vand.u32 %v2288, 4294901760
    %2290 = vmatmul.mubr.f32.gmra.mrb[0].mxu0 %v2289
    %v2291 = vpop.f32.mrb[0].mxu0
    %v2292 = vadd.f32 %v2218, %v2291
    %v2293 = vpop.f32.mrb[0].mxu0
    %2294 = vdwg.mxu0
    %2295 = vmatprep.subr.mxu0 0.0
    %v2296 = vand.u32 %v24, 4294901760
    %v2297 = vsub.f32 %v24, %v2296
    %v2298 = vand.u32 %v2297, 4294901760
    %2299 = vmatpush1.msra.mxu0 %v2298
    %2300 = vmatprep.subr.mxu0 0.0
    %2301 = vmatpush1.msra.mxu0 0.0
    %2302 = vmatprep.subr.mxu0 0.0
    %2303 = vmatpush1.msra.mxu0 0.0
    %2304 = vmatprep.subr.mxu0 0.0
    %2305 = vmatpush1.msra.mxu0 0.0
    %2306 = vmatprep.subr.mxu0 0.0
    %2307 = vmatpush1.msra.mxu0 0.0
    %2308 = vmatprep.subr.mxu0 0.0
    %2309 = vmatpush1.msra.mxu0 0.0
    %2310 = vmatprep.subr.mxu0 0.0
    %2311 = vmatpush1.msra.mxu0 0.0
    %2312 = vmatprep.subr.mxu0 0.0
    %2313 = vmatpush1.msra.mxu0 0.0
    %2314 = vmatprep.subr.mxu0 0.0
    %2315 = vmatpush1.msra.mxu0 0.0
    %2316 = vmatprep.subr.mxu0 0.0
    %2317 = vmatpush1.msra.mxu0 0.0
    %2318 = vmatprep.subr.mxu0 0.0
    %2319 = vmatpush1.msra.mxu0 0.0
    %2320 = vmatprep.subr.mxu0 0.0
    %2321 = vmatpush1.msra.mxu0 0.0
    %2322 = vmatprep.subr.mxu0 0.0
    %2323 = vmatpush1.msra.mxu0 0.0
    %2324 = vmatprep.subr.mxu0 0.0
    %2325 = vmatpush1.msra.mxu0 0.0
    %2326 = vmatprep.subr.mxu0 0.0
    %2327 = vmatpush1.msra.mxu0 0.0
    %2328 = vmatprep.subr.mxu0 0.0
    %2329 = vmatpush1.msra.mxu0 0.0
    %2330 = vmatprep.subr.mxu0 0.0
    %2331 = vmatpush1.msra.mxu0 0.0
    %2332 = vmatprep.subr.mxu0 0.0
    %2333 = vmatpush1.msra.mxu0 0.0
    %2334 = vmatprep.subr.mxu0 0.0
    %2335 = vmatpush1.msra.mxu0 0.0
    %2336 = vmatprep.subr.mxu0 0.0
    %2337 = vmatpush1.msra.mxu0 0.0
    %2338 = vmatprep.subr.mxu0 0.0
    %2339 = vmatpush1.msra.mxu0 0.0
    %2340 = vmatprep.subr.mxu0 0.0
    %2341 = vmatpush1.msra.mxu0 0.0
    %2342 = vmatprep.subr.mxu0 0.0
    %2343 = vmatpush1.msra.mxu0 0.0
    %2344 = vmatprep.subr.mxu0 0.0
    %2345 = vmatpush1.msra.mxu0 0.0
    %2346 = vmatprep.subr.mxu0 0.0
    %2347 = vmatpush1.msra.mxu0 0.0
    %2348 = vmatprep.subr.mxu0 0.0
    %2349 = vmatpush1.msra.mxu0 0.0
    %2350 = vmatprep.subr.mxu0 0.0
    %2351 = vmatpush1.msra.mxu0 0.0
    %2352 = vmatprep.subr.mxu0 0.0
    %2353 = vmatpush1.msra.mxu0 0.0
    %2354 = vmatprep.subr.mxu0 0.0
    %2355 = vmatpush1.msra.mxu0 0.0
    %2356 = vmatprep.subr.mxu0 0.0
    %2357 = vmatpush1.msra.mxu0 0.0
    %2358 = vmatprep.subr.mxu0 0.0
    %2359 = vmatpush1.msra.mxu0 0.0
    %2360 = vmatprep.subr.mxu0 0.0
    %2361 = vmatpush1.msra.mxu0 0.0
    %2362 = vmatprep.mubr.f32.mxu0 0.0
    %v2363 = vand.u32 %v1993, 4294901760
    %2364 = vmatmul.mubr.f32.gmra.mrb[0].mxu0 %v2363
    %v2365 = vpop.f32.mrb[0].mxu0
    %v2366 = vadd.f32 %v2292, %v2365
    %v2367 = vpop.f32.mrb[0].mxu0
    %2368 = vdwg.mxu0
    %2369 = vmatprep.subr.mxu0 0.0
    %v2370 = vand.u32 %v24, 4294901760
    %2371 = vmatpush1.msra.mxu0 %v2370
    %2372 = vmatprep.subr.mxu0 0.0
    %2373 = vmatpush1.msra.mxu0 0.0
    %2374 = vmatprep.subr.mxu0 0.0
    %2375 = vmatpush1.msra.mxu0 0.0
    %2376 = vmatprep.subr.mxu0 0.0
    %2377 = vmatpush1.msra.mxu0 0.0
    %2378 = vmatprep.subr.mxu0 0.0
    %2379 = vmatpush1.msra.mxu0 0.0
    %2380 = vmatprep.subr.mxu0 0.0
    %2381 = vmatpush1.msra.mxu0 0.0
    %2382 = vmatprep.subr.mxu0 0.0
    %2383 = vmatpush1.msra.mxu0 0.0
    %2384 = vmatprep.subr.mxu0 0.0
    %2385 = vmatpush1.msra.mxu0 0.0
    %2386 = vmatprep.subr.mxu0 0.0
    %2387 = vmatpush1.msra.mxu0 0.0
    %2388 = vmatprep.subr.mxu0 0.0
    %2389 = vmatpush1.msra.mxu0 0.0
    %2390 = vmatprep.subr.mxu0 0.0
    %2391 = vmatpush1.msra.mxu0 0.0
    %2392 = vmatprep.subr.mxu0 0.0
    %2393 = vmatpush1.msra.mxu0 0.0
    %2394 = vmatprep.subr.mxu0 0.0
    %2395 = vmatpush1.msra.mxu0 0.0
    %2396 = vmatprep.subr.mxu0 0.0
    %2397 = vmatpush1.msra.mxu0 0.0
    %2398 = vmatprep.subr.mxu0 0.0
    %2399 = vmatpush1.msra.mxu0 0.0
    %2400 = vmatprep.subr.mxu0 0.0
    %2401 = vmatpush1.msra.mxu0 0.0
    %2402 = vmatprep.subr.mxu0 0.0
    %2403 = vmatpush1.msra.mxu0 0.0
    %2404 = vmatprep.subr.mxu0 0.0
    %2405 = vmatpush1.msra.mxu0 0.0
    %2406 = vmatprep.subr.mxu0 0.0
    %2407 = vmatpush1.msra.mxu0 0.0
    %2408 = vmatprep.subr.mxu0 0.0
    %2409 = vmatpush1.msra.mxu0 0.0
    %2410 = vmatprep.subr.mxu0 0.0
    %2411 = vmatpush1.msra.mxu0 0.0
    %2412 = vmatprep.subr.mxu0 0.0
    %2413 = vmatpush1.msra.mxu0 0.0
    %2414 = vmatprep.subr.mxu0 0.0
    %2415 = vmatpush1.msra.mxu0 0.0
    %2416 = vmatprep.subr.mxu0 0.0
    %2417 = vmatpush1.msra.mxu0 0.0
    %2418 = vmatprep.subr.mxu0 0.0
    %2419 = vmatpush1.msra.mxu0 0.0
    %2420 = vmatprep.subr.mxu0 0.0
    %2421 = vmatpush1.msra.mxu0 0.0
    %2422 = vmatprep.subr.mxu0 0.0
    %2423 = vmatpush1.msra.mxu0 0.0
    %2424 = vmatprep.subr.mxu0 0.0
    %2425 = vmatpush1.msra.mxu0 0.0
    %2426 = vmatprep.subr.mxu0 0.0
    %2427 = vmatpush1.msra.mxu0 0.0
    %2428 = vmatprep.subr.mxu0 0.0
    %2429 = vmatpush1.msra.mxu0 0.0
    %2430 = vmatprep.subr.mxu0 0.0
    %2431 = vmatpush1.msra.mxu0 0.0
    %2432 = vmatprep.subr.mxu0 0.0
    %2433 = vmatpush1.msra.mxu0 0.0
    %2434 = vmatprep.mubr.f32.mxu0 0.0
    %v2435 = vand.u32 %v1993, 4294901760
    %2436 = vmatmul.mubr.f32.gmra.mrb[0].mxu0 %v2435
    %v2437 = vpop.f32.mrb[0].mxu0
    %v2438 = vadd.f32 %v2366, %v2437
    %v2439 = vpop.f32.mrb[0].mxu0
    %2440 = vdwg.mxu0
    %2441 = vmatprep.subr.mxu0 0.0
    %v2442 = vand.u32 %v33, 4294901760
    %2443 = vmatpush1.msra.mxu0 %v2442
    %2444 = vmatprep.subr.mxu0 0.0
    %v2445 = vand.u32 %v34, 4294901760
    %2446 = vmatpush1.msra.mxu0 %v2445
    %2447 = vmatprep.subr.mxu0 0.0
    %v2448 = vand.u32 %v35, 4294901760
    %2449 = vmatpush1.msra.mxu0 %v2448
    %2450 = vmatprep.subr.mxu0 0.0
    %v2451 = vand.u32 %v36, 4294901760
    %2452 = vmatpush1.msra.mxu0 %v2451
    %2453 = vmatprep.subr.mxu0 0.0
    %2454 = vmatpush1.msra.mxu0 0.0
    %2455 = vmatprep.subr.mxu0 0.0
    %2456 = vmatpush1.msra.mxu0 0.0
    %2457 = vmatprep.subr.mxu0 0.0
    %2458 = vmatpush1.msra.mxu0 0.0
    %2459 = vmatprep.subr.mxu0 0.0
    %2460 = vmatpush1.msra.mxu0 0.0
    %2461 = vmatprep.subr.mxu0 0.0
    %2462 = vmatpush1.msra.mxu0 0.0
    %2463 = vmatprep.subr.mxu0 0.0
    %2464 = vmatpush1.msra.mxu0 0.0
    %2465 = vmatprep.subr.mxu0 0.0
    %2466 = vmatpush1.msra.mxu0 0.0
    %2467 = vmatprep.subr.mxu0 0.0
    %2468 = vmatpush1.msra.mxu0 0.0
    %2469 = vmatprep.subr.mxu0 0.0
    %2470 = vmatpush1.msra.mxu0 0.0
    %2471 = vmatprep.subr.mxu0 0.0
    %2472 = vmatpush1.msra.mxu0 0.0
    %2473 = vmatprep.subr.mxu0 0.0
    %2474 = vmatpush1.msra.mxu0 0.0
    %2475 = vmatprep.subr.mxu0 0.0
    %2476 = vmatpush1.msra.mxu0 0.0
    %2477 = vmatprep.subr.mxu0 0.0
    %2478 = vmatpush1.msra.mxu0 0.0
    %2479 = vmatprep.subr.mxu0 0.0
    %2480 = vmatpush1.msra.mxu0 0.0
    %2481 = vmatprep.subr.mxu0 0.0
    %2482 = vmatpush1.msra.mxu0 0.0
    %2483 = vmatprep.subr.mxu0 0.0
    %2484 = vmatpush1.msra.mxu0 0.0
    %2485 = vmatprep.subr.mxu0 0.0
    %2486 = vmatpush1.msra.mxu0 0.0
    %2487 = vmatprep.subr.mxu0 0.0
    %2488 = vmatpush1.msra.mxu0 0.0
    %2489 = vmatprep.subr.mxu0 0.0
    %2490 = vmatpush1.msra.mxu0 0.0
    %2491 = vmatprep.subr.mxu0 0.0
    %2492 = vmatpush1.msra.mxu0 0.0
    %2493 = vmatprep.subr.mxu0 0.0
    %2494 = vmatpush1.msra.mxu0 0.0
    %2495 = vmatprep.subr.mxu0 0.0
    %2496 = vmatpush1.msra.mxu0 0.0
    %2497 = vmatprep.subr.mxu0 0.0
    %2498 = vmatpush1.msra.mxu0 0.0
    %2499 = vmatprep.subr.mxu0 0.0
    %2500 = vmatpush1.msra.mxu0 0.0
    %2501 = vmatprep.subr.mxu0 0.0
    %2502 = vmatpush1.msra.mxu0 0.0
    %2503 = vmatprep.subr.mxu0 0.0
    %2504 = vmatpush1.msra.mxu0 0.0
    %2505 = vmatprep.subr.mxu0 0.0
    %2506 = vmatpush1.msra.mxu0 0.0
    %2507 = vmatprep.subr.mxu0 0.0
    %2508 = vmatpush1.msra.mxu0 0.0
    %2509 = vmatprep.mubr.f32.mxu0 0.0
    %v2510 = vand.u32 %v578, 4294901760
    %v2511 = vsub.f32 %v578, %v2510
    %v2512 = vand.u32 %v2511, 4294901760
    %v2513 = vsub.f32 %v2511, %v2512
    %v2514 = vand.u32 %v2513, 4294901760
    %2515 = vmatmul.mubr.f32.gmra.mrb[0].mxu0 %v2514
    %v2516 = vpop.f32.mrb[0].mxu0
    %v2517 = vadd.f32 0.0, %v2516
    %v2518 = vpop.f32.mrb[0].mxu0
    %2519 = vmatprep.mubr.f32.mxu0 0.0
    %v2520 = vand.u32 %v1030, 4294901760
    %v2521 = vsub.f32 %v1030, %v2520
    %v2522 = vand.u32 %v2521, 4294901760
    %v2523 = vsub.f32 %v2521, %v2522
    %v2524 = vand.u32 %v2523, 4294901760
    %2525 = vmatmul.mubr.f32.gmra.mrb[0].mxu0 %v2524
    %v2526 = vpop.f32.mrb[0].mxu0
    %v2527 = vadd.f32 0.0, %v2526
    %v2528 = vpop.f32.mrb[0].mxu0
    %2529 = vdwg.mxu0
    %2530 = vmatprep.subr.mxu0 0.0
    %v2531 = vand.u32 %v33, 4294901760
    %v2532 = vsub.f32 %v33, %v2531
    %v2533 = vand.u32 %v2532, 4294901760
    %v2534 = vsub.f32 %v2532, %v2533
    %v2535 = vand.u32 %v2534, 4294901760
    %2536 = vmatpush1.msra.mxu0 %v2535
    %2537 = vmatprep.subr.mxu0 0.0
    %v2538 = vand.u32 %v34, 4294901760
    %v2539 = vsub.f32 %v34, %v2538
    %v2540 = vand.u32 %v2539, 4294901760
    %v2541 = vsub.f32 %v2539, %v2540
    %v2542 = vand.u32 %v2541, 4294901760
    %2543 = vmatpush1.msra.mxu0 %v2542
    %2544 = vmatprep.subr.mxu0 0.0
    %v2545 = vand.u32 %v35, 4294901760
    %v2546 = vsub.f32 %v35, %v2545
    %v2547 = vand.u32 %v2546, 4294901760
    %v2548 = vsub.f32 %v2546, %v2547
    %v2549 = vand.u32 %v2548, 4294901760
    %2550 = vmatpush1.msra.mxu0 %v2549
    %2551 = vmatprep.subr.mxu0 0.0
    %v2552 = vand.u32 %v36, 4294901760
    %v2553 = vsub.f32 %v36, %v2552
    %v2554 = vand.u32 %v2553, 4294901760
    %v2555 = vsub.f32 %v2553, %v2554
    %v2556 = vand.u32 %v2555, 4294901760
    %2557 = vmatpush1.msra.mxu0 %v2556
    %2558 = vmatprep.subr.mxu0 0.0
    %2559 = vmatpush1.msra.mxu0 0.0
    %2560 = vmatprep.subr.mxu0 0.0
    %2561 = vmatpush1.msra.mxu0 0.0
    %2562 = vmatprep.subr.mxu0 0.0
    %2563 = vmatpush1.msra.mxu0 0.0
    %2564 = vmatprep.subr.mxu0 0.0
    %2565 = vmatpush1.msra.mxu0 0.0
    %2566 = vmatprep.subr.mxu0 0.0
    %2567 = vmatpush1.msra.mxu0 0.0
    %2568 = vmatprep.subr.mxu0 0.0
    %2569 = vmatpush1.msra.mxu0 0.0
    %2570 = vmatprep.subr.mxu0 0.0
    %2571 = vmatpush1.msra.mxu0 0.0
    %2572 = vmatprep.subr.mxu0 0.0
    %2573 = vmatpush1.msra.mxu0 0.0
    %2574 = vmatprep.subr.mxu0 0.0
    %2575 = vmatpush1.msra.mxu0 0.0
    %2576 = vmatprep.subr.mxu0 0.0
    %2577 = vmatpush1.msra.mxu0 0.0
    %2578 = vmatprep.subr.mxu0 0.0
    %2579 = vmatpush1.msra.mxu0 0.0
    %2580 = vmatprep.subr.mxu0 0.0
    %2581 = vmatpush1.msra.mxu0 0.0
    %2582 = vmatprep.subr.mxu0 0.0
    %2583 = vmatpush1.msra.mxu0 0.0
    %2584 = vmatprep.subr.mxu0 0.0
    %2585 = vmatpush1.msra.mxu0 0.0
    %2586 = vmatprep.subr.mxu0 0.0
    %2587 = vmatpush1.msra.mxu0 0.0
    %2588 = vmatprep.subr.mxu0 0.0
    %2589 = vmatpush1.msra.mxu0 0.0
    %2590 = vmatprep.subr.mxu0 0.0
    %2591 = vmatpush1.msra.mxu0 0.0
    %2592 = vmatprep.subr.mxu0 0.0
    %2593 = vmatpush1.msra.mxu0 0.0
    %2594 = vmatprep.subr.mxu0 0.0
    %2595 = vmatpush1.msra.mxu0 0.0
    %2596 = vmatprep.subr.mxu0 0.0
    %2597 = vmatpush1.msra.mxu0 0.0
    %2598 = vmatprep.subr.mxu0 0.0
    %2599 = vmatpush1.msra.mxu0 0.0
    %2600 = vmatprep.subr.mxu0 0.0
    %2601 = vmatpush1.msra.mxu0 0.0
    %2602 = vmatprep.subr.mxu0 0.0
    %2603 = vmatpush1.msra.mxu0 0.0
    %2604 = vmatprep.subr.mxu0 0.0
    %2605 = vmatpush1.msra.mxu0 0.0
    %2606 = vmatprep.subr.mxu0 0.0
    %2607 = vmatpush1.msra.mxu0 0.0
    %2608 = vmatprep.subr.mxu0 0.0
    %2609 = vmatpush1.msra.mxu0 0.0
    %2610 = vmatprep.subr.mxu0 0.0
    %2611 = vmatpush1.msra.mxu0 0.0
    %2612 = vmatprep.subr.mxu0 0.0
    %2613 = vmatpush1.msra.mxu0 0.0
    %2614 = vmatprep.mubr.f32.mxu0 0.0
    %v2615 = vand.u32 %v578, 4294901760
    %2616 = vmatmul.mubr.f32.gmra.mrb[0].mxu0 %v2615
    %v2617 = vpop.f32.mrb[0].mxu0
    %v2618 = vadd.f32 %v2517, %v2617
    %v2619 = vpop.f32.mrb[0].mxu0
    %2620 = vmatprep.mubr.f32.mxu0 0.0
    %v2621 = vand.u32 %v1030, 4294901760
    %2622 = vmatmul.mubr.f32.gmra.mrb[0].mxu0 %v2621
    %v2623 = vpop.f32.mrb[0].mxu0
    %v2624 = vadd.f32 %v2527, %v2623
    %v2625 = vpop.f32.mrb[0].mxu0
    %2626 = vdwg.mxu0
    %2627 = vmatprep.subr.mxu0 0.0
    %v2628 = vand.u32 %v33, 4294901760
    %v2629 = vsub.f32 %v33, %v2628
    %2630 = vmatpush1.msra.mxu0 %v2629
    %2631 = vmatprep.subr.mxu0 0.0
    %v2632 = vand.u32 %v34, 4294901760
    %v2633 = vsub.f32 %v34, %v2632
    %2634 = vmatpush1.msra.mxu0 %v2633
    %2635 = vmatprep.subr.mxu0 0.0
    %v2636 = vand.u32 %v35, 4294901760
    %v2637 = vsub.f32 %v35, %v2636
    %2638 = vmatpush1.msra.mxu0 %v2637
    %2639 = vmatprep.subr.mxu0 0.0
    %v2640 = vand.u32 %v36, 4294901760
    %v2641 = vsub.f32 %v36, %v2640
    %2642 = vmatpush1.msra.mxu0 %v2641
    %2643 = vmatprep.subr.mxu0 0.0
    %2644 = vmatpush1.msra.mxu0 0.0
    %2645 = vmatprep.subr.mxu0 0.0
    %2646 = vmatpush1.msra.mxu0 0.0
    %2647 = vmatprep.subr.mxu0 0.0
    %2648 = vmatpush1.msra.mxu0 0.0
    %2649 = vmatprep.subr.mxu0 0.0
    %2650 = vmatpush1.msra.mxu0 0.0
    %2651 = vmatprep.subr.mxu0 0.0
    %2652 = vmatpush1.msra.mxu0 0.0
    %2653 = vmatprep.subr.mxu0 0.0
    %2654 = vmatpush1.msra.mxu0 0.0
    %2655 = vmatprep.subr.mxu0 0.0
    %2656 = vmatpush1.msra.mxu0 0.0
    %2657 = vmatprep.subr.mxu0 0.0
    %2658 = vmatpush1.msra.mxu0 0.0
    %2659 = vmatprep.subr.mxu0 0.0
    %2660 = vmatpush1.msra.mxu0 0.0
    %2661 = vmatprep.subr.mxu0 0.0
    %2662 = vmatpush1.msra.mxu0 0.0
    %2663 = vmatprep.subr.mxu0 0.0
    %2664 = vmatpush1.msra.mxu0 0.0
    %2665 = vmatprep.subr.mxu0 0.0
    %2666 = vmatpush1.msra.mxu0 0.0
    %2667 = vmatprep.subr.mxu0 0.0
    %2668 = vmatpush1.msra.mxu0 0.0
    %2669 = vmatprep.subr.mxu0 0.0
    %2670 = vmatpush1.msra.mxu0 0.0
    %2671 = vmatprep.subr.mxu0 0.0
    %2672 = vmatpush1.msra.mxu0 0.0
    %2673 = vmatprep.subr.mxu0 0.0
    %2674 = vmatpush1.msra.mxu0 0.0
    %2675 = vmatprep.subr.mxu0 0.0
    %2676 = vmatpush1.msra.mxu0 0.0
    %2677 = vmatprep.subr.mxu0 0.0
    %2678 = vmatpush1.msra.mxu0 0.0
    %2679 = vmatprep.subr.mxu0 0.0
    %2680 = vmatpush1.msra.mxu0 0.0
    %2681 = vmatprep.subr.mxu0 0.0
    %2682 = vmatpush1.msra.mxu0 0.0
    %2683 = vmatprep.subr.mxu0 0.0
    %2684 = vmatpush1.msra.mxu0 0.0
    %2685 = vmatprep.subr.mxu0 0.0
    %2686 = vmatpush1.msra.mxu0 0.0
    %2687 = vmatprep.subr.mxu0 0.0
    %2688 = vmatpush1.msra.mxu0 0.0
    %2689 = vmatprep.subr.mxu0 0.0
    %2690 = vmatpush1.msra.mxu0 0.0
    %2691 = vmatprep.subr.mxu0 0.0
    %2692 = vmatpush1.msra.mxu0 0.0
    %2693 = vmatprep.subr.mxu0 0.0
    %2694 = vmatpush1.msra.mxu0 0.0
    %2695 = vmatprep.subr.mxu0 0.0
    %2696 = vmatpush1.msra.mxu0 0.0
    %2697 = vmatprep.subr.mxu0 0.0
    %2698 = vmatpush1.msra.mxu0 0.0
    %2699 = vmatprep.mubr.f32.mxu0 0.0
    %v2700 = vand.u32 %v578, 4294901760
    %v2701 = vsub.f32 %v578, %v2700
    %2702 = vmatmul.mubr.f32.gmra.mrb[0].mxu0 %v2701
    %v2703 = vpop.f32.mrb[0].mxu0
    %v2704 = vadd.f32 %v2618, %v2703
    %v2705 = vpop.f32.mrb[0].mxu0
    %2706 = vmatprep.mubr.f32.mxu0 0.0
    %v2707 = vand.u32 %v1030, 4294901760
    %v2708 = vsub.f32 %v1030, %v2707
    %2709 = vmatmul.mubr.f32.gmra.mrb[0].mxu0 %v2708
    %v2710 = vpop.f32.mrb[0].mxu0
    %v2711 = vadd.f32 %v2624, %v2710
    %v2712 = vpop.f32.mrb[0].mxu0
    %2713 = vdwg.mxu0
    %2714 = vmatprep.subr.mxu0 0.0
    %v2715 = vand.u32 %v33, 4294901760
    %2716 = vmatpush1.msra.mxu0 %v2715
    %2717 = vmatprep.subr.mxu0 0.0
    %v2718 = vand.u32 %v34, 4294901760
    %2719 = vmatpush1.msra.mxu0 %v2718
    %2720 = vmatprep.subr.mxu0 0.0
    %v2721 = vand.u32 %v35, 4294901760
    %2722 = vmatpush1.msra.mxu0 %v2721
    %2723 = vmatprep.subr.mxu0 0.0
    %v2724 = vand.u32 %v36, 4294901760
    %2725 = vmatpush1.msra.mxu0 %v2724
    %2726 = vmatprep.subr.mxu0 0.0
    %2727 = vmatpush1.msra.mxu0 0.0
    %2728 = vmatprep.subr.mxu0 0.0
    %2729 = vmatpush1.msra.mxu0 0.0
    %2730 = vmatprep.subr.mxu0 0.0
    %2731 = vmatpush1.msra.mxu0 0.0
    %2732 = vmatprep.subr.mxu0 0.0
    %2733 = vmatpush1.msra.mxu0 0.0
    %2734 = vmatprep.subr.mxu0 0.0
    %2735 = vmatpush1.msra.mxu0 0.0
    %2736 = vmatprep.subr.mxu0 0.0
    %2737 = vmatpush1.msra.mxu0 0.0
    %2738 = vmatprep.subr.mxu0 0.0
    %2739 = vmatpush1.msra.mxu0 0.0
    %2740 = vmatprep.subr.mxu0 0.0
    %2741 = vmatpush1.msra.mxu0 0.0
    %2742 = vmatprep.subr.mxu0 0.0
    %2743 = vmatpush1.msra.mxu0 0.0
    %2744 = vmatprep.subr.mxu0 0.0
    %2745 = vmatpush1.msra.mxu0 0.0
    %2746 = vmatprep.subr.mxu0 0.0
    %2747 = vmatpush1.msra.mxu0 0.0
    %2748 = vmatprep.subr.mxu0 0.0
    %2749 = vmatpush1.msra.mxu0 0.0
    %2750 = vmatprep.subr.mxu0 0.0
    %2751 = vmatpush1.msra.mxu0 0.0
    %2752 = vmatprep.subr.mxu0 0.0
    %2753 = vmatpush1.msra.mxu0 0.0
    %2754 = vmatprep.subr.mxu0 0.0
    %2755 = vmatpush1.msra.mxu0 0.0
    %2756 = vmatprep.subr.mxu0 0.0
    %2757 = vmatpush1.msra.mxu0 0.0
    %2758 = vmatprep.subr.mxu0 0.0
    %2759 = vmatpush1.msra.mxu0 0.0
    %2760 = vmatprep.subr.mxu0 0.0
    %2761 = vmatpush1.msra.mxu0 0.0
    %2762 = vmatprep.subr.mxu0 0.0
    %2763 = vmatpush1.msra.mxu0 0.0
    %2764 = vmatprep.subr.mxu0 0.0
    %2765 = vmatpush1.msra.mxu0 0.0
    %2766 = vmatprep.subr.mxu0 0.0
    %2767 = vmatpush1.msra.mxu0 0.0
    %2768 = vmatprep.subr.mxu0 0.0
    %2769 = vmatpush1.msra.mxu0 0.0
    %2770 = vmatprep.subr.mxu0 0.0
    %2771 = vmatpush1.msra.mxu0 0.0
    %2772 = vmatprep.subr.mxu0 0.0
    %2773 = vmatpush1.msra.mxu0 0.0
    %2774 = vmatprep.subr.mxu0 0.0
    %2775 = vmatpush1.msra.mxu0 0.0
    %2776 = vmatprep.subr.mxu0 0.0
    %2777 = vmatpush1.msra.mxu0 0.0
    %2778 = vmatprep.subr.mxu0 0.0
    %2779 = vmatpush1.msra.mxu0 0.0
    %2780 = vmatprep.subr.mxu0 0.0
    %2781 = vmatpush1.msra.mxu0 0.0
    %2782 = vmatprep.mubr.f32.mxu0 0.0
    %v2783 = vand.u32 %v578, 4294901760
    %v2784 = vsub.f32 %v578, %v2783
    %v2785 = vand.u32 %v2784, 4294901760
    %2786 = vmatmul.mubr.f32.gmra.mrb[0].mxu0 %v2785
    %v2787 = vpop.f32.mrb[0].mxu0
    %v2788 = vadd.f32 %v2704, %v2787
    %v2789 = vpop.f32.mrb[0].mxu0
    %2790 = vmatprep.mubr.f32.mxu0 0.0
    %v2791 = vand.u32 %v1030, 4294901760
    %v2792 = vsub.f32 %v1030, %v2791
    %v2793 = vand.u32 %v2792, 4294901760
    %2794 = vmatmul.mubr.f32.gmra.mrb[0].mxu0 %v2793
    %v2795 = vpop.f32.mrb[0].mxu0
    %v2796 = vadd.f32 %v2711, %v2795
    %v2797 = vpop.f32.mrb[0].mxu0
    %2798 = vdwg.mxu0
    %2799 = vmatprep.subr.mxu0 0.0
    %v2800 = vand.u32 %v33, 4294901760
    %v2801 = vsub.f32 %v33, %v2800
    %v2802 = vand.u32 %v2801, 4294901760
    %2803 = vmatpush1.msra.mxu0 %v2802
    %2804 = vmatprep.subr.mxu0 0.0
    %v2805 = vand.u32 %v34, 4294901760
    %v2806 = vsub.f32 %v34, %v2805
    %v2807 = vand.u32 %v2806, 4294901760
    %2808 = vmatpush1.msra.mxu0 %v2807
    %2809 = vmatprep.subr.mxu0 0.0
    %v2810 = vand.u32 %v35, 4294901760
    %v2811 = vsub.f32 %v35, %v2810
    %v2812 = vand.u32 %v2811, 4294901760
    %2813 = vmatpush1.msra.mxu0 %v2812
    %2814 = vmatprep.subr.mxu0 0.0
    %v2815 = vand.u32 %v36, 4294901760
    %v2816 = vsub.f32 %v36, %v2815
    %v2817 = vand.u32 %v2816, 4294901760
    %2818 = vmatpush1.msra.mxu0 %v2817
    %2819 = vmatprep.subr.mxu0 0.0
    %2820 = vmatpush1.msra.mxu0 0.0
    %2821 = vmatprep.subr.mxu0 0.0
    %2822 = vmatpush1.msra.mxu0 0.0
    %2823 = vmatprep.subr.mxu0 0.0
    %2824 = vmatpush1.msra.mxu0 0.0
    %2825 = vmatprep.subr.mxu0 0.0
    %2826 = vmatpush1.msra.mxu0 0.0
    %2827 = vmatprep.subr.mxu0 0.0
    %2828 = vmatpush1.msra.mxu0 0.0
    %2829 = vmatprep.subr.mxu0 0.0
    %2830 = vmatpush1.msra.mxu0 0.0
    %2831 = vmatprep.subr.mxu0 0.0
    %2832 = vmatpush1.msra.mxu0 0.0
    %2833 = vmatprep.subr.mxu0 0.0
    %2834 = vmatpush1.msra.mxu0 0.0
    %2835 = vmatprep.subr.mxu0 0.0
    %2836 = vmatpush1.msra.mxu0 0.0
    %2837 = vmatprep.subr.mxu0 0.0
    %2838 = vmatpush1.msra.mxu0 0.0
    %2839 = vmatprep.subr.mxu0 0.0
    %2840 = vmatpush1.msra.mxu0 0.0
    %2841 = vmatprep.subr.mxu0 0.0
    %2842 = vmatpush1.msra.mxu0 0.0
    %2843 = vmatprep.subr.mxu0 0.0
    %2844 = vmatpush1.msra.mxu0 0.0
    %2845 = vmatprep.subr.mxu0 0.0
    %2846 = vmatpush1.msra.mxu0 0.0
    %2847 = vmatprep.subr.mxu0 0.0
    %2848 = vmatpush1.msra.mxu0 0.0
    %2849 = vmatprep.subr.mxu0 0.0
    %2850 = vmatpush1.msra.mxu0 0.0
    %2851 = vmatprep.subr.mxu0 0.0
    %2852 = vmatpush1.msra.mxu0 0.0
    %2853 = vmatprep.subr.mxu0 0.0
    %2854 = vmatpush1.msra.mxu0 0.0
    %2855 = vmatprep.subr.mxu0 0.0
    %2856 = vmatpush1.msra.mxu0 0.0
    %2857 = vmatprep.subr.mxu0 0.0
    %2858 = vmatpush1.msra.mxu0 0.0
    %2859 = vmatprep.subr.mxu0 0.0
    %2860 = vmatpush1.msra.mxu0 0.0
    %2861 = vmatprep.subr.mxu0 0.0
    %2862 = vmatpush1.msra.mxu0 0.0
    %2863 = vmatprep.subr.mxu0 0.0
    %2864 = vmatpush1.msra.mxu0 0.0
    %2865 = vmatprep.subr.mxu0 0.0
    %2866 = vmatpush1.msra.mxu0 0.0
    %2867 = vmatprep.subr.mxu0 0.0
    %2868 = vmatpush1.msra.mxu0 0.0
    %2869 = vmatprep.subr.mxu0 0.0
    %2870 = vmatpush1.msra.mxu0 0.0
    %2871 = vmatprep.subr.mxu0 0.0
    %2872 = vmatpush1.msra.mxu0 0.0
    %2873 = vmatprep.subr.mxu0 0.0
    %2874 = vmatpush1.msra.mxu0 0.0
    %2875 = vmatprep.mubr.f32.mxu0 0.0
    %v2876 = vand.u32 %v578, 4294901760
    %2877 = vmatmul.mubr.f32.gmra.mrb[0].mxu0 %v2876
    %v2878 = vpop.f32.mrb[0].mxu0
    %v2879 = vadd.f32 %v2788, %v2878
    %v2880 = vpop.f32.mrb[0].mxu0
    %2881 = vmatprep.mubr.f32.mxu0 0.0
    %v2882 = vand.u32 %v1030, 4294901760
    %2883 = vmatmul.mubr.f32.gmra.mrb[0].mxu0 %v2882
    %v2884 = vpop.f32.mrb[0].mxu0
    %v2885 = vadd.f32 %v2796, %v2884
    %v2886 = vpop.f32.mrb[0].mxu0
    %2887 = vdwg.mxu0
    %2888 = vmatprep.subr.mxu0 0.0
    %v2889 = vand.u32 %v33, 4294901760
    %2890 = vmatpush1.msra.mxu0 %v2889
    %2891 = vmatprep.subr.mxu0 0.0
    %v2892 = vand.u32 %v34, 4294901760
    %2893 = vmatpush1.msra.mxu0 %v2892
    %2894 = vmatprep.subr.mxu0 0.0
    %v2895 = vand.u32 %v35, 4294901760
    %2896 = vmatpush1.msra.mxu0 %v2895
    %2897 = vmatprep.subr.mxu0 0.0
    %v2898 = vand.u32 %v36, 4294901760
    %2899 = vmatpush1.msra.mxu0 %v2898
    %2900 = vmatprep.subr.mxu0 0.0
    %2901 = vmatpush1.msra.mxu0 0.0
    %2902 = vmatprep.subr.mxu0 0.0
    %2903 = vmatpush1.msra.mxu0 0.0
    %2904 = vmatprep.subr.mxu0 0.0
    %2905 = vmatpush1.msra.mxu0 0.0
    %2906 = vmatprep.subr.mxu0 0.0
    %2907 = vmatpush1.msra.mxu0 0.0
    %2908 = vmatprep.subr.mxu0 0.0
    %2909 = vmatpush1.msra.mxu0 0.0
    %2910 = vmatprep.subr.mxu0 0.0
    %2911 = vmatpush1.msra.mxu0 0.0
    %2912 = vmatprep.subr.mxu0 0.0
    %2913 = vmatpush1.msra.mxu0 0.0
    %2914 = vmatprep.subr.mxu0 0.0
    %2915 = vmatpush1.msra.mxu0 0.0
    %2916 = vmatprep.subr.mxu0 0.0
    %2917 = vmatpush1.msra.mxu0 0.0
    %2918 = vmatprep.subr.mxu0 0.0
    %2919 = vmatpush1.msra.mxu0 0.0
    %2920 = vmatprep.subr.mxu0 0.0
    %2921 = vmatpush1.msra.mxu0 0.0
    %2922 = vmatprep.subr.mxu0 0.0
    %2923 = vmatpush1.msra.mxu0 0.0
    %2924 = vmatprep.subr.mxu0 0.0
    %2925 = vmatpush1.msra.mxu0 0.0
    %2926 = vmatprep.subr.mxu0 0.0
    %2927 = vmatpush1.msra.mxu0 0.0
    %2928 = vmatprep.subr.mxu0 0.0
    %2929 = vmatpush1.msra.mxu0 0.0
    %2930 = vmatprep.subr.mxu0 0.0
    %2931 = vmatpush1.msra.mxu0 0.0
    %2932 = vmatprep.subr.mxu0 0.0
    %2933 = vmatpush1.msra.mxu0 0.0
    %2934 = vmatprep.subr.mxu0 0.0
    %2935 = vmatpush1.msra.mxu0 0.0
    %2936 = vmatprep.subr.mxu0 0.0
    %2937 = vmatpush1.msra.mxu0 0.0
    %2938 = vmatprep.subr.mxu0 0.0
    %2939 = vmatpush1.msra.mxu0 0.0
    %2940 = vmatprep.subr.mxu0 0.0
    %2941 = vmatpush1.msra.mxu0 0.0
    %2942 = vmatprep.subr.mxu0 0.0
    %2943 = vmatpush1.msra.mxu0 0.0
    %2944 = vmatprep.subr.mxu0 0.0
    %2945 = vmatpush1.msra.mxu0 0.0
    %2946 = vmatprep.subr.mxu0 0.0
    %2947 = vmatpush1.msra.mxu0 0.0
    %2948 = vmatprep.subr.mxu0 0.0
    %2949 = vmatpush1.msra.mxu0 0.0
    %2950 = vmatprep.subr.mxu0 0.0
    %2951 = vmatpush1.msra.mxu0 0.0
    %2952 = vmatprep.subr.mxu0 0.0
    %2953 = vmatpush1.msra.mxu0 0.0
    %2954 = vmatprep.subr.mxu0 0.0
    %2955 = vmatpush1.msra.mxu0 0.0
    %2956 = vmatprep.mubr.f32.mxu0 0.0
    %v2957 = vand.u32 %v578, 4294901760
    %2958 = vmatmul.mubr.f32.gmra.mrb[0].mxu0 %v2957
    %v2959 = vpop.f32.mrb[0].mxu0
    %v2960 = vadd.f32 %v2879, %v2959
    %v2961 = vpop.f32.mrb[0].mxu0
    %2962 = vmatprep.mubr.f32.mxu0 0.0
    %v2963 = vand.u32 %v1030, 4294901760
    %2964 = vmatmul.mubr.f32.gmra.mrb[0].mxu0 %v2963
    %v2965 = vpop.f32.mrb[0].mxu0
    %v2966 = vadd.f32 %v2885, %v2965
    %v2967 = vpop.f32.mrb[0].mxu0
    %2968 = vdwg.mxu0
    %v2970 = vsel %vm42, %v1989, 0
    %v2973 = vsel %vm42, %v2438, 0
    %2975 = vmatprep.subr.mxu0 0.0
    %v2976 = vand.u32 %v29, 4294901760
    %2977 = vmatpush1.msra.mxu0 %v2976
    %2978 = vmatprep.subr.mxu0 0.0
    %v2979 = vand.u32 %v30, 4294901760
    %2980 = vmatpush1.msra.mxu0 %v2979
    %2981 = vmatprep.subr.mxu0 0.0
    %v2982 = vand.u32 %v31, 4294901760
    %2983 = vmatpush1.msra.mxu0 %v2982
    %2984 = vmatprep.subr.mxu0 0.0
    %v2985 = vand.u32 %v32, 4294901760
    %2986 = vmatpush1.msra.mxu0 %v2985
    %2987 = vmatprep.subr.mxu0 0.0
    %2988 = vmatpush1.msra.mxu0 0.0
    %2989 = vmatprep.subr.mxu0 0.0
    %2990 = vmatpush1.msra.mxu0 0.0
    %2991 = vmatprep.subr.mxu0 0.0
    %2992 = vmatpush1.msra.mxu0 0.0
    %2993 = vmatprep.subr.mxu0 0.0
    %2994 = vmatpush1.msra.mxu0 0.0
    %2995 = vmatprep.subr.mxu0 0.0
    %2996 = vmatpush1.msra.mxu0 0.0
    %2997 = vmatprep.subr.mxu0 0.0
    %2998 = vmatpush1.msra.mxu0 0.0
    %2999 = vmatprep.subr.mxu0 0.0
    %3000 = vmatpush1.msra.mxu0 0.0
    %3001 = vmatprep.subr.mxu0 0.0
    %3002 = vmatpush1.msra.mxu0 0.0
    %3003 = vmatprep.subr.mxu0 0.0
    %3004 = vmatpush1.msra.mxu0 0.0
    %3005 = vmatprep.subr.mxu0 0.0
    %3006 = vmatpush1.msra.mxu0 0.0
    %3007 = vmatprep.subr.mxu0 0.0
    %3008 = vmatpush1.msra.mxu0 0.0
    %3009 = vmatprep.subr.mxu0 0.0
    %3010 = vmatpush1.msra.mxu0 0.0
    %3011 = vmatprep.subr.mxu0 0.0
    %3012 = vmatpush1.msra.mxu0 0.0
    %3013 = vmatprep.subr.mxu0 0.0
    %3014 = vmatpush1.msra.mxu0 0.0
    %3015 = vmatprep.subr.mxu0 0.0
    %3016 = vmatpush1.msra.mxu0 0.0
    %3017 = vmatprep.subr.mxu0 0.0
    %3018 = vmatpush1.msra.mxu0 0.0
    %3019 = vmatprep.subr.mxu0 0.0
    %3020 = vmatpush1.msra.mxu0 0.0
    %3021 = vmatprep.subr.mxu0 0.0
    %3022 = vmatpush1.msra.mxu0 0.0
    %3023 = vmatprep.subr.mxu0 0.0
    %3024 = vmatpush1.msra.mxu0 0.0
    %3025 = vmatprep.subr.mxu0 0.0
    %3026 = vmatpush1.msra.mxu0 0.0
    %3027 = vmatprep.subr.mxu0 0.0
    %3028 = vmatpush1.msra.mxu0 0.0
    %3029 = vmatprep.subr.mxu0 0.0
    %3030 = vmatpush1.msra.mxu0 0.0
    %3031 = vmatprep.subr.mxu0 0.0
    %3032 = vmatpush1.msra.mxu0 0.0
    %3033 = vmatprep.subr.mxu0 0.0
    %3034 = vmatpush1.msra.mxu0 0.0
    %3035 = vmatprep.subr.mxu0 0.0
    %3036 = vmatpush1.msra.mxu0 0.0
    %3037 = vmatprep.subr.mxu0 0.0
    %3038 = vmatpush1.msra.mxu0 0.0
    %3039 = vmatprep.subr.mxu0 0.0
    %3040 = vmatpush1.msra.mxu0 0.0
    %3041 = vmatprep.subr.mxu0 0.0
    %3042 = vmatpush1.msra.mxu0 0.0
    %3043 = vmatprep.mubr.f32.mxu0 0.0
    %v3044 = vand.u32 %v2970, 4294901760
    %v3045 = vsub.f32 %v2970, %v3044
    %v3046 = vand.u32 %v3045, 4294901760
    %v3047 = vsub.f32 %v3045, %v3046
    %v3048 = vand.u32 %v3047, 4294901760
    %3049 = vmatmul.mubr.f32.gmra.mrb[0].mxu0 %v3048
    %v3050 = vpop.f32.mrb[0].mxu0
    %v3051 = vadd.f32 %v2960, %v3050
    %v3052 = vpop.f32.mrb[0].mxu0
    %3053 = vmatprep.mubr.f32.mxu0 0.0
    %v3054 = vand.u32 %v2973, 4294901760
    %v3055 = vsub.f32 %v2973, %v3054
    %v3056 = vand.u32 %v3055, 4294901760
    %v3057 = vsub.f32 %v3055, %v3056
    %v3058 = vand.u32 %v3057, 4294901760
    %3059 = vmatmul.mubr.f32.gmra.mrb[0].mxu0 %v3058
    %v3060 = vpop.f32.mrb[0].mxu0
    %v3061 = vadd.f32 %v2966, %v3060
    %v3062 = vpop.f32.mrb[0].mxu0
    %3063 = vdwg.mxu0
    %3064 = vmatprep.subr.mxu0 0.0
    %v3065 = vand.u32 %v29, 4294901760
    %v3066 = vsub.f32 %v29, %v3065
    %v3067 = vand.u32 %v3066, 4294901760
    %v3068 = vsub.f32 %v3066, %v3067
    %v3069 = vand.u32 %v3068, 4294901760
    %3070 = vmatpush1.msra.mxu0 %v3069
    %3071 = vmatprep.subr.mxu0 0.0
    %v3072 = vand.u32 %v30, 4294901760
    %v3073 = vsub.f32 %v30, %v3072
    %v3074 = vand.u32 %v3073, 4294901760
    %v3075 = vsub.f32 %v3073, %v3074
    %v3076 = vand.u32 %v3075, 4294901760
    %3077 = vmatpush1.msra.mxu0 %v3076
    %3078 = vmatprep.subr.mxu0 0.0
    %v3079 = vand.u32 %v31, 4294901760
    %v3080 = vsub.f32 %v31, %v3079
    %v3081 = vand.u32 %v3080, 4294901760
    %v3082 = vsub.f32 %v3080, %v3081
    %v3083 = vand.u32 %v3082, 4294901760
    %3084 = vmatpush1.msra.mxu0 %v3083
    %3085 = vmatprep.subr.mxu0 0.0
    %v3086 = vand.u32 %v32, 4294901760
    %v3087 = vsub.f32 %v32, %v3086
    %v3088 = vand.u32 %v3087, 4294901760
    %v3089 = vsub.f32 %v3087, %v3088
    %v3090 = vand.u32 %v3089, 4294901760
    %3091 = vmatpush1.msra.mxu0 %v3090
    %3092 = vmatprep.subr.mxu0 0.0
    %3093 = vmatpush1.msra.mxu0 0.0
    %3094 = vmatprep.subr.mxu0 0.0
    %3095 = vmatpush1.msra.mxu0 0.0
    %3096 = vmatprep.subr.mxu0 0.0
    %3097 = vmatpush1.msra.mxu0 0.0
    %3098 = vmatprep.subr.mxu0 0.0
    %3099 = vmatpush1.msra.mxu0 0.0
    %3100 = vmatprep.subr.mxu0 0.0
    %3101 = vmatpush1.msra.mxu0 0.0
    %3102 = vmatprep.subr.mxu0 0.0
    %3103 = vmatpush1.msra.mxu0 0.0
    %3104 = vmatprep.subr.mxu0 0.0
    %3105 = vmatpush1.msra.mxu0 0.0
    %3106 = vmatprep.subr.mxu0 0.0
    %3107 = vmatpush1.msra.mxu0 0.0
    %3108 = vmatprep.subr.mxu0 0.0
    %3109 = vmatpush1.msra.mxu0 0.0
    %3110 = vmatprep.subr.mxu0 0.0
    %3111 = vmatpush1.msra.mxu0 0.0
    %3112 = vmatprep.subr.mxu0 0.0
    %3113 = vmatpush1.msra.mxu0 0.0
    %3114 = vmatprep.subr.mxu0 0.0
    %3115 = vmatpush1.msra.mxu0 0.0
    %3116 = vmatprep.subr.mxu0 0.0
    %3117 = vmatpush1.msra.mxu0 0.0
    %3118 = vmatprep.subr.mxu0 0.0
    %3119 = vmatpush1.msra.mxu0 0.0
    %3120 = vmatprep.subr.mxu0 0.0
    %3121 = vmatpush1.msra.mxu0 0.0
    %3122 = vmatprep.subr.mxu0 0.0
    %3123 = vmatpush1.msra.mxu0 0.0
    %3124 = vmatprep.subr.mxu0 0.0
    %3125 = vmatpush1.msra.mxu0 0.0
    %3126 = vmatprep.subr.mxu0 0.0
    %3127 = vmatpush1.msra.mxu0 0.0
    %3128 = vmatprep.subr.mxu0 0.0
    %3129 = vmatpush1.msra.mxu0 0.0
    %3130 = vmatprep.subr.mxu0 0.0
    %3131 = vmatpush1.msra.mxu0 0.0
    %3132 = vmatprep.subr.mxu0 0.0
    %3133 = vmatpush1.msra.mxu0 0.0
    %3134 = vmatprep.subr.mxu0 0.0
    %3135 = vmatpush1.msra.mxu0 0.0
    %3136 = vmatprep.subr.mxu0 0.0
    %3137 = vmatpush1.msra.mxu0 0.0
    %3138 = vmatprep.subr.mxu0 0.0
    %3139 = vmatpush1.msra.mxu0 0.0
    %3140 = vmatprep.subr.mxu0 0.0
    %3141 = vmatpush1.msra.mxu0 0.0
    %3142 = vmatprep.subr.mxu0 0.0
    %3143 = vmatpush1.msra.mxu0 0.0
    %3144 = vmatprep.subr.mxu0 0.0
    %3145 = vmatpush1.msra.mxu0 0.0
    %3146 = vmatprep.subr.mxu0 0.0
    %3147 = vmatpush1.msra.mxu0 0.0
    %3148 = vmatprep.mubr.f32.mxu0 0.0
    %v3149 = vand.u32 %v2970, 4294901760
    %3150 = vmatmul.mubr.f32.gmra.mrb[0].mxu0 %v3149
    %v3151 = vpop.f32.mrb[0].mxu0
    %v3152 = vadd.f32 %v3051, %v3151
    %v3153 = vpop.f32.mrb[0].mxu0
    %3154 = vmatprep.mubr.f32.mxu0 0.0
    %v3155 = vand.u32 %v2973, 4294901760
    %3156 = vmatmul.mubr.f32.gmra.mrb[0].mxu0 %v3155
    %v3157 = vpop.f32.mrb[0].mxu0
    %v3158 = vadd.f32 %v3061, %v3157
    %v3159 = vpop.f32.mrb[0].mxu0
    %3160 = vdwg.mxu0
    %3161 = vmatprep.subr.mxu0 0.0
    %v3162 = vand.u32 %v29, 4294901760
    %v3163 = vsub.f32 %v29, %v3162
    %3164 = vmatpush1.msra.mxu0 %v3163
    %3165 = vmatprep.subr.mxu0 0.0
    %v3166 = vand.u32 %v30, 4294901760
    %v3167 = vsub.f32 %v30, %v3166
    %3168 = vmatpush1.msra.mxu0 %v3167
    %3169 = vmatprep.subr.mxu0 0.0
    %v3170 = vand.u32 %v31, 4294901760
    %v3171 = vsub.f32 %v31, %v3170
    %3172 = vmatpush1.msra.mxu0 %v3171
    %3173 = vmatprep.subr.mxu0 0.0
    %v3174 = vand.u32 %v32, 4294901760
    %v3175 = vsub.f32 %v32, %v3174
    %3176 = vmatpush1.msra.mxu0 %v3175
    %3177 = vmatprep.subr.mxu0 0.0
    %3178 = vmatpush1.msra.mxu0 0.0
    %3179 = vmatprep.subr.mxu0 0.0
    %3180 = vmatpush1.msra.mxu0 0.0
    %3181 = vmatprep.subr.mxu0 0.0
    %3182 = vmatpush1.msra.mxu0 0.0
    %3183 = vmatprep.subr.mxu0 0.0
    %3184 = vmatpush1.msra.mxu0 0.0
    %3185 = vmatprep.subr.mxu0 0.0
    %3186 = vmatpush1.msra.mxu0 0.0
    %3187 = vmatprep.subr.mxu0 0.0
    %3188 = vmatpush1.msra.mxu0 0.0
    %3189 = vmatprep.subr.mxu0 0.0
    %3190 = vmatpush1.msra.mxu0 0.0
    %3191 = vmatprep.subr.mxu0 0.0
    %3192 = vmatpush1.msra.mxu0 0.0
    %3193 = vmatprep.subr.mxu0 0.0
    %3194 = vmatpush1.msra.mxu0 0.0
    %3195 = vmatprep.subr.mxu0 0.0
    %3196 = vmatpush1.msra.mxu0 0.0
    %3197 = vmatprep.subr.mxu0 0.0
    %3198 = vmatpush1.msra.mxu0 0.0
    %3199 = vmatprep.subr.mxu0 0.0
    %3200 = vmatpush1.msra.mxu0 0.0
    %3201 = vmatprep.subr.mxu0 0.0
    %3202 = vmatpush1.msra.mxu0 0.0
    %3203 = vmatprep.subr.mxu0 0.0
    %3204 = vmatpush1.msra.mxu0 0.0
    %3205 = vmatprep.subr.mxu0 0.0
    %3206 = vmatpush1.msra.mxu0 0.0
    %3207 = vmatprep.subr.mxu0 0.0
    %3208 = vmatpush1.msra.mxu0 0.0
    %3209 = vmatprep.subr.mxu0 0.0
    %3210 = vmatpush1.msra.mxu0 0.0
    %3211 = vmatprep.subr.mxu0 0.0
    %3212 = vmatpush1.msra.mxu0 0.0
    %3213 = vmatprep.subr.mxu0 0.0
    %3214 = vmatpush1.msra.mxu0 0.0
    %3215 = vmatprep.subr.mxu0 0.0
    %3216 = vmatpush1.msra.mxu0 0.0
    %3217 = vmatprep.subr.mxu0 0.0
    %3218 = vmatpush1.msra.mxu0 0.0
    %3219 = vmatprep.subr.mxu0 0.0
    %3220 = vmatpush1.msra.mxu0 0.0
    %3221 = vmatprep.subr.mxu0 0.0
    %3222 = vmatpush1.msra.mxu0 0.0
    %3223 = vmatprep.subr.mxu0 0.0
    %3224 = vmatpush1.msra.mxu0 0.0
    %3225 = vmatprep.subr.mxu0 0.0
    %3226 = vmatpush1.msra.mxu0 0.0
    %3227 = vmatprep.subr.mxu0 0.0
    %3228 = vmatpush1.msra.mxu0 0.0
    %3229 = vmatprep.subr.mxu0 0.0
    %3230 = vmatpush1.msra.mxu0 0.0
    %3231 = vmatprep.subr.mxu0 0.0
    %3232 = vmatpush1.msra.mxu0 0.0
    %3233 = vmatprep.mubr.f32.mxu0 0.0
    %v3234 = vand.u32 %v2970, 4294901760
    %v3235 = vsub.f32 %v2970, %v3234
    %3236 = vmatmul.mubr.f32.gmra.mrb[0].mxu0 %v3235
    %v3237 = vpop.f32.mrb[0].mxu0
    %v3238 = vadd.f32 %v3152, %v3237
    %v3239 = vpop.f32.mrb[0].mxu0
    %3240 = vmatprep.mubr.f32.mxu0 0.0
    %v3241 = vand.u32 %v2973, 4294901760
    %v3242 = vsub.f32 %v2973, %v3241
    %3243 = vmatmul.mubr.f32.gmra.mrb[0].mxu0 %v3242
    %v3244 = vpop.f32.mrb[0].mxu0
    %v3245 = vadd.f32 %v3158, %v3244
    %v3246 = vpop.f32.mrb[0].mxu0
    %3247 = vdwg.mxu0
    %3248 = vmatprep.subr.mxu0 0.0
    %v3249 = vand.u32 %v29, 4294901760
    %3250 = vmatpush1.msra.mxu0 %v3249
    %3251 = vmatprep.subr.mxu0 0.0
    %v3252 = vand.u32 %v30, 4294901760
    %3253 = vmatpush1.msra.mxu0 %v3252
    %3254 = vmatprep.subr.mxu0 0.0
    %v3255 = vand.u32 %v31, 4294901760
    %3256 = vmatpush1.msra.mxu0 %v3255
    %3257 = vmatprep.subr.mxu0 0.0
    %v3258 = vand.u32 %v32, 4294901760
    %3259 = vmatpush1.msra.mxu0 %v3258
    %3260 = vmatprep.subr.mxu0 0.0
    %3261 = vmatpush1.msra.mxu0 0.0
    %3262 = vmatprep.subr.mxu0 0.0
    %3263 = vmatpush1.msra.mxu0 0.0
    %3264 = vmatprep.subr.mxu0 0.0
    %3265 = vmatpush1.msra.mxu0 0.0
    %3266 = vmatprep.subr.mxu0 0.0
    %3267 = vmatpush1.msra.mxu0 0.0
    %3268 = vmatprep.subr.mxu0 0.0
    %3269 = vmatpush1.msra.mxu0 0.0
    %3270 = vmatprep.subr.mxu0 0.0
    %3271 = vmatpush1.msra.mxu0 0.0
    %3272 = vmatprep.subr.mxu0 0.0
    %3273 = vmatpush1.msra.mxu0 0.0
    %3274 = vmatprep.subr.mxu0 0.0
    %3275 = vmatpush1.msra.mxu0 0.0
    %3276 = vmatprep.subr.mxu0 0.0
    %3277 = vmatpush1.msra.mxu0 0.0
    %3278 = vmatprep.subr.mxu0 0.0
    %3279 = vmatpush1.msra.mxu0 0.0
    %3280 = vmatprep.subr.mxu0 0.0
    %3281 = vmatpush1.msra.mxu0 0.0
    %3282 = vmatprep.subr.mxu0 0.0
    %3283 = vmatpush1.msra.mxu0 0.0
    %3284 = vmatprep.subr.mxu0 0.0
    %3285 = vmatpush1.msra.mxu0 0.0
    %3286 = vmatprep.subr.mxu0 0.0
    %3287 = vmatpush1.msra.mxu0 0.0
    %3288 = vmatprep.subr.mxu0 0.0
    %3289 = vmatpush1.msra.mxu0 0.0
    %3290 = vmatprep.subr.mxu0 0.0
    %3291 = vmatpush1.msra.mxu0 0.0
    %3292 = vmatprep.subr.mxu0 0.0
    %3293 = vmatpush1.msra.mxu0 0.0
    %3294 = vmatprep.subr.mxu0 0.0
    %3295 = vmatpush1.msra.mxu0 0.0
    %3296 = vmatprep.subr.mxu0 0.0
    %3297 = vmatpush1.msra.mxu0 0.0
    %3298 = vmatprep.subr.mxu0 0.0
    %3299 = vmatpush1.msra.mxu0 0.0
    %3300 = vmatprep.subr.mxu0 0.0
    %3301 = vmatpush1.msra.mxu0 0.0
    %3302 = vmatprep.subr.mxu0 0.0
    %3303 = vmatpush1.msra.mxu0 0.0
    %3304 = vmatprep.subr.mxu0 0.0
    %3305 = vmatpush1.msra.mxu0 0.0
    %3306 = vmatprep.subr.mxu0 0.0
    %3307 = vmatpush1.msra.mxu0 0.0
    %3308 = vmatprep.subr.mxu0 0.0
    %3309 = vmatpush1.msra.mxu0 0.0
    %3310 = vmatprep.subr.mxu0 0.0
    %3311 = vmatpush1.msra.mxu0 0.0
    %3312 = vmatprep.subr.mxu0 0.0
    %3313 = vmatpush1.msra.mxu0 0.0
    %3314 = vmatprep.subr.mxu0 0.0
    %3315 = vmatpush1.msra.mxu0 0.0
    %3316 = vmatprep.mubr.f32.mxu0 0.0
    %v3317 = vand.u32 %v2970, 4294901760
    %v3318 = vsub.f32 %v2970, %v3317
    %v3319 = vand.u32 %v3318, 4294901760
    %3320 = vmatmul.mubr.f32.gmra.mrb[0].mxu0 %v3319
    %v3321 = vpop.f32.mrb[0].mxu0
    %v3322 = vadd.f32 %v3238, %v3321
    %v3323 = vpop.f32.mrb[0].mxu0
    %3324 = vmatprep.mubr.f32.mxu0 0.0
    %v3325 = vand.u32 %v2973, 4294901760
    %v3326 = vsub.f32 %v2973, %v3325
    %v3327 = vand.u32 %v3326, 4294901760
    %3328 = vmatmul.mubr.f32.gmra.mrb[0].mxu0 %v3327
    %v3329 = vpop.f32.mrb[0].mxu0
    %v3330 = vadd.f32 %v3245, %v3329
    %v3331 = vpop.f32.mrb[0].mxu0
    %3332 = vdwg.mxu0
    %3333 = vmatprep.subr.mxu0 0.0
    %v3334 = vand.u32 %v29, 4294901760
    %v3335 = vsub.f32 %v29, %v3334
    %v3336 = vand.u32 %v3335, 4294901760
    %3337 = vmatpush1.msra.mxu0 %v3336
    %3338 = vmatprep.subr.mxu0 0.0
    %v3339 = vand.u32 %v30, 4294901760
    %v3340 = vsub.f32 %v30, %v3339
    %v3341 = vand.u32 %v3340, 4294901760
    %3342 = vmatpush1.msra.mxu0 %v3341
    %3343 = vmatprep.subr.mxu0 0.0
    %v3344 = vand.u32 %v31, 4294901760
    %v3345 = vsub.f32 %v31, %v3344
    %v3346 = vand.u32 %v3345, 4294901760
    %3347 = vmatpush1.msra.mxu0 %v3346
    %3348 = vmatprep.subr.mxu0 0.0
    %v3349 = vand.u32 %v32, 4294901760
    %v3350 = vsub.f32 %v32, %v3349
    %v3351 = vand.u32 %v3350, 4294901760
    %3352 = vmatpush1.msra.mxu0 %v3351
    %3353 = vmatprep.subr.mxu0 0.0
    %3354 = vmatpush1.msra.mxu0 0.0
    %3355 = vmatprep.subr.mxu0 0.0
    %3356 = vmatpush1.msra.mxu0 0.0
    %3357 = vmatprep.subr.mxu0 0.0
    %3358 = vmatpush1.msra.mxu0 0.0
    %3359 = vmatprep.subr.mxu0 0.0
    %3360 = vmatpush1.msra.mxu0 0.0
    %3361 = vmatprep.subr.mxu0 0.0
    %3362 = vmatpush1.msra.mxu0 0.0
    %3363 = vmatprep.subr.mxu0 0.0
    %3364 = vmatpush1.msra.mxu0 0.0
    %3365 = vmatprep.subr.mxu0 0.0
    %3366 = vmatpush1.msra.mxu0 0.0
    %3367 = vmatprep.subr.mxu0 0.0
    %3368 = vmatpush1.msra.mxu0 0.0
    %3369 = vmatprep.subr.mxu0 0.0
    %3370 = vmatpush1.msra.mxu0 0.0
    %3371 = vmatprep.subr.mxu0 0.0
    %3372 = vmatpush1.msra.mxu0 0.0
    %3373 = vmatprep.subr.mxu0 0.0
    %3374 = vmatpush1.msra.mxu0 0.0
    %3375 = vmatprep.subr.mxu0 0.0
    %3376 = vmatpush1.msra.mxu0 0.0
    %3377 = vmatprep.subr.mxu0 0.0
    %3378 = vmatpush1.msra.mxu0 0.0
    %3379 = vmatprep.subr.mxu0 0.0
    %3380 = vmatpush1.msra.mxu0 0.0
    %3381 = vmatprep.subr.mxu0 0.0
    %3382 = vmatpush1.msra.mxu0 0.0
    %3383 = vmatprep.subr.mxu0 0.0
    %3384 = vmatpush1.msra.mxu0 0.0
    %3385 = vmatprep.subr.mxu0 0.0
    %3386 = vmatpush1.msra.mxu0 0.0
    %3387 = vmatprep.subr.mxu0 0.0
    %3388 = vmatpush1.msra.mxu0 0.0
    %3389 = vmatprep.subr.mxu0 0.0
    %3390 = vmatpush1.msra.mxu0 0.0
    %3391 = vmatprep.subr.mxu0 0.0
    %3392 = vmatpush1.msra.mxu0 0.0
    %3393 = vmatprep.subr.mxu0 0.0
    %3394 = vmatpush1.msra.mxu0 0.0
    %3395 = vmatprep.subr.mxu0 0.0
    %3396 = vmatpush1.msra.mxu0 0.0
    %3397 = vmatprep.subr.mxu0 0.0
    %3398 = vmatpush1.msra.mxu0 0.0
    %3399 = vmatprep.subr.mxu0 0.0
    %3400 = vmatpush1.msra.mxu0 0.0
    %3401 = vmatprep.subr.mxu0 0.0
    %3402 = vmatpush1.msra.mxu0 0.0
    %3403 = vmatprep.subr.mxu0 0.0
    %3404 = vmatpush1.msra.mxu0 0.0
    %3405 = vmatprep.subr.mxu0 0.0
    %3406 = vmatpush1.msra.mxu0 0.0
    %3407 = vmatprep.subr.mxu0 0.0
    %3408 = vmatpush1.msra.mxu0 0.0
    %3409 = vmatprep.mubr.f32.mxu0 0.0
    %v3410 = vand.u32 %v2970, 4294901760
    %3411 = vmatmul.mubr.f32.gmra.mrb[0].mxu0 %v3410
    %v3412 = vpop.f32.mrb[0].mxu0
    %v3413 = vadd.f32 %v3322, %v3412
    %v3414 = vpop.f32.mrb[0].mxu0
    %3415 = vmatprep.mubr.f32.mxu0 0.0
    %v3416 = vand.u32 %v2973, 4294901760
    %3417 = vmatmul.mubr.f32.gmra.mrb[0].mxu0 %v3416
    %v3418 = vpop.f32.mrb[0].mxu0
    %v3419 = vadd.f32 %v3330, %v3418
    %v3420 = vpop.f32.mrb[0].mxu0
    %3421 = vdwg.mxu0
    %3422 = vmatprep.subr.mxu0 0.0
    %v3423 = vand.u32 %v29, 4294901760
    %3424 = vmatpush1.msra.mxu0 %v3423
    %3425 = vmatprep.subr.mxu0 0.0
    %v3426 = vand.u32 %v30, 4294901760
    %3427 = vmatpush1.msra.mxu0 %v3426
    %3428 = vmatprep.subr.mxu0 0.0
    %v3429 = vand.u32 %v31, 4294901760
    %3430 = vmatpush1.msra.mxu0 %v3429
    %3431 = vmatprep.subr.mxu0 0.0
    %v3432 = vand.u32 %v32, 4294901760
    %3433 = vmatpush1.msra.mxu0 %v3432
    %3434 = vmatprep.subr.mxu0 0.0
    %3435 = vmatpush1.msra.mxu0 0.0
    %3436 = vmatprep.subr.mxu0 0.0
    %3437 = vmatpush1.msra.mxu0 0.0
    %3438 = vmatprep.subr.mxu0 0.0
    %3439 = vmatpush1.msra.mxu0 0.0
    %3440 = vmatprep.subr.mxu0 0.0
    %3441 = vmatpush1.msra.mxu0 0.0
    %3442 = vmatprep.subr.mxu0 0.0
    %3443 = vmatpush1.msra.mxu0 0.0
    %3444 = vmatprep.subr.mxu0 0.0
    %3445 = vmatpush1.msra.mxu0 0.0
    %3446 = vmatprep.subr.mxu0 0.0
    %3447 = vmatpush1.msra.mxu0 0.0
    %3448 = vmatprep.subr.mxu0 0.0
    %3449 = vmatpush1.msra.mxu0 0.0
    %3450 = vmatprep.subr.mxu0 0.0
    %3451 = vmatpush1.msra.mxu0 0.0
    %3452 = vmatprep.subr.mxu0 0.0
    %3453 = vmatpush1.msra.mxu0 0.0
    %3454 = vmatprep.subr.mxu0 0.0
    %3455 = vmatpush1.msra.mxu0 0.0
    %3456 = vmatprep.subr.mxu0 0.0
    %3457 = vmatpush1.msra.mxu0 0.0
    %3458 = vmatprep.subr.mxu0 0.0
    %3459 = vmatpush1.msra.mxu0 0.0
    %3460 = vmatprep.subr.mxu0 0.0
    %3461 = vmatpush1.msra.mxu0 0.0
    %3462 = vmatprep.subr.mxu0 0.0
    %3463 = vmatpush1.msra.mxu0 0.0
    %3464 = vmatprep.subr.mxu0 0.0
    %3465 = vmatpush1.msra.mxu0 0.0
    %3466 = vmatprep.subr.mxu0 0.0
    %3467 = vmatpush1.msra.mxu0 0.0
    %3468 = vmatprep.subr.mxu0 0.0
    %3469 = vmatpush1.msra.mxu0 0.0
    %3470 = vmatprep.subr.mxu0 0.0
    %3471 = vmatpush1.msra.mxu0 0.0
    %3472 = vmatprep.subr.mxu0 0.0
    %3473 = vmatpush1.msra.mxu0 0.0
    %3474 = vmatprep.subr.mxu0 0.0
    %3475 = vmatpush1.msra.mxu0 0.0
    %3476 = vmatprep.subr.mxu0 0.0
    %3477 = vmatpush1.msra.mxu0 0.0
    %3478 = vmatprep.subr.mxu0 0.0
    %3479 = vmatpush1.msra.mxu0 0.0
    %3480 = vmatprep.subr.mxu0 0.0
    %3481 = vmatpush1.msra.mxu0 0.0
    %3482 = vmatprep.subr.mxu0 0.0
    %3483 = vmatpush1.msra.mxu0 0.0
    %3484 = vmatprep.subr.mxu0 0.0
    %3485 = vmatpush1.msra.mxu0 0.0
    %3486 = vmatprep.subr.mxu0 0.0
    %3487 = vmatpush1.msra.mxu0 0.0
    %3488 = vmatprep.subr.mxu0 0.0
    %3489 = vmatpush1.msra.mxu0 0.0
    %3490 = vmatprep.mubr.f32.mxu0 0.0
    %v3491 = vand.u32 %v2970, 4294901760
    %3492 = vmatmul.mubr.f32.gmra.mrb[0].mxu0 %v3491
    %v3493 = vpop.f32.mrb[0].mxu0
    %v3494 = vadd.f32 %v3413, %v3493
    %v3495 = vpop.f32.mrb[0].mxu0
    %3496 = vmatprep.mubr.f32.mxu0 0.0
    %v3497 = vand.u32 %v2973, 4294901760
    %3498 = vmatmul.mubr.f32.gmra.mrb[0].mxu0 %v3497
    %v3499 = vpop.f32.mrb[0].mxu0
    %v3500 = vadd.f32 %v3419, %v3499
    %v3501 = vpop.f32.mrb[0].mxu0
    %3502 = vdwg.mxu0
    %v3503 = vlaneseq
    %v3504 = vshrl.u32 %v3503, 7
    %v3505 = vsub.s32 1, %v3504
    %v3506 = vrot.slane %v37, %v3505
    %v3507 = vadd.f32 %v3494, %v3506
    %v3508 = vadd.f32 %v3500, %v3506
    %v3509 = vtanh.pop %v3507
    %v3510 = vtanh.pop %v3508
    %3511 = vst.msk [vmem:[#allocation2] sm:$0xff] %vm42, %v3509
    %3512 = vst.msk [vmem:[#allocation2 + $0x8] sm:$0xff] %vm42, %v3510
    // Predicated region
    $region22: #{_attn_forward_impl.1} parent=1 // pred_check
      _
    $region23: #{_attn_forward_impl.1} parent=1 // pred_check_branch
      %3514 = sbr.rel (0) target = $region25
    $region24: #{_attn_forward_impl.1} parent=1 // pred_region
      %s3516 = ssub.s32 256, 256
      %3517 = vsyncadd [#allocation3], %s3516
      %s3518 = sshll.u32 [#allocation2], 4
      %s3519 = int_to_ptr.vmem [resolvable:$true] %s3518
      %3524 = dma.vmem_to_hbm [thread:$0]  %s3519, 256, %s5, [#allocation3], 128, 128, 8
    $region25: #{_attn_forward_impl.1} parent=1 // pred_fallthru
      _
    // Predicated region
    $region26: #{_attn_forward_impl.1} parent=1 // pred_check
      _
    $region27: #{_attn_forward_impl.1} parent=1 // pred_check_branch
      %3526 = sbr.rel (0) target = $region29
    $region28: #{_attn_forward_impl.1} parent=1 // pred_region
      %3527 = dma.done [#allocation3], 256
    $region29: #{_attn_forward_impl.1} parent=1 // pred_fallthru
      _
    %3528 = vsyncpa [#allocation3], 1

</llo_original>
